<compile_context>
chip_gen: v5e
topology: v5e:2x2
jax: 0.10.0
libtpu: 0.0.40
codegen_flags: <defaults>
</compile_context>

<pallas_src>
import numpy as np
import jax
import jax.numpy as jnp
from jax.experimental import pallas as pl
from jax.experimental.pallas import tpu as pltpu


# ---------------------------------------------------------------------------
# Fused forward kernel: one grid step per batch element
# ---------------------------------------------------------------------------
def rope_model_kernel(idx_ref, emb_ref, scale_ref, wqkv_ref, wo_ref, bo_ref,
                      cos_ref, sin_ref, w1_ref, b1_ref, wg_ref, bg_ref,
                      wl_ref, bl_ref, beta_ref, wlast_ref, blast_ref, o_ref):
    S = idx_ref.shape[1]
    Vp, D = emb_ref.shape
    HD = wo_ref.shape[0]
    H = HD // D

    # ---- embedding (exact one-hot MXU gather, f32) + RMSNorm #1 -----------------
    idx = idx_ref[0]                                                     # (S, 1) int32
    one_hot = (idx == jax.lax.broadcasted_iota(jnp.int32, (S, Vp), 1)).astype(jnp.float32)
    x = jnp.dot(one_hot, emb_ref[...], preferred_element_type=jnp.float32)   # (S, D)
    # ff_rms = ||x||_F / sqrt(S*D)  (eps unused in the torch forward)
    x = scale_ref[...] * x * jax.lax.rsqrt(jnp.mean(x * x))

    # ---- attention: all heads in one stacked QKV matmul -------------------------
    xb = x.astype(jnp.bfloat16)
    qkv = jnp.dot(xb, wqkv_ref[...], preferred_element_type=jnp.float32)     # (S, 3*HD)
    q = qkv[:, :HD]
    k = qkv[:, HD:2 * HD]
    v = qkv[:, 2 * HD:]

    cos = cos_ref[...]                                   # (S, HD)
    sin = sin_ref[...]                                   # (S, HD), carries the +/- pair signs
    lane = jax.lax.broadcasted_iota(jnp.int32, (S, HD), 1)
    even = (lane & 1) == 0

    def pair_swap(t):
        # t[..., 2i] <-> t[..., 2i+1]: XLU rolls + VPU select, no MXU work.
        return jnp.where(even, pltpu.roll(t, HD - 1, axis=1), pltpu.roll(t, 1, axis=1))

    q_rot = q * cos + pair_swap(q) * sin
    k_rot = k * cos + pair_swap(k) * sin

    # causal mask, hoisted out of the per-head loop
    row = jax.lax.broadcasted_iota(jnp.int32, (S, S), 0)
    col = jax.lax.broadcasted_iota(jnp.int32, (S, S), 1)
    causal = col <= row
    inv_sqrt_d = D ** -0.5

    heads = []
    for h in range(H):                                   # static unroll; 128-lane-aligned slices
        sl = slice(h * D, (h + 1) * D)
        qh, kh, vh = q_rot[:, sl], k_rot[:, sl], v[:, sl]
        sc = jax.lax.dot_general(qh, kh, (((1,), (1,)), ((), ())),
                                 preferred_element_type=jnp.float32) * inv_sqrt_d
        sc = jnp.where(causal, sc, -1e30)
        sc = sc - jnp.max(sc, axis=-1, keepdims=True)
        p = jnp.exp(sc)
        p = p / jnp.sum(p, axis=-1, keepdims=True)       # exact softmax denominator
        heads.append(jnp.dot(p, vh, preferred_element_type=jnp.float32))
    head_cat = jnp.concatenate(heads, axis=1)            # (S, HD)

    attn = jnp.dot(head_cat.astype(jnp.bfloat16), wo_ref[...],
                   preferred_element_type=jnp.float32) + bo_ref[...]
    x = x + attn                                          # residual (dropout = identity, eval)

    # ---- RMSNorm #2 -------------------------------------------------------------
    x = scale_ref[...] * x * jax.lax.rsqrt(jnp.mean(x * x))

    # ---- Sequential(Linear, SwiGLU) + residual -----------------------------------
    xb = x.astype(jnp.bfloat16)
    h1 = jnp.dot(xb, w1_ref[...], preferred_element_type=jnp.float32) + b1_ref[...]
    h1b = h1.astype(jnp.bfloat16)
    g = jnp.dot(h1b, wg_ref[...], preferred_element_type=jnp.float32) + bg_ref[...]
    lin = jnp.dot(h1b, wl_ref[...], preferred_element_type=jnp.float32) + bl_ref[...]
    y = x + g * jax.nn.sigmoid(beta_ref[...] * g) * lin

    # ---- final vocab projection (lane-dense, V padded to 128) --------------------
    logits = jnp.dot(y.astype(jnp.bfloat16), wlast_ref[...],
                     preferred_element_type=jnp.float32) + blast_ref[...]
    o_ref[...] = logits[None].astype(o_ref.dtype)


# ---------------------------------------------------------------------------
# Wrapper
# ---------------------------------------------------------------------------
def rope_model_forward(idx, params, vocab):
    B, S = idx.shape
    idx3 = idx.reshape(B, S, 1).astype(jnp.int32)
    Vp, D = params["emb"].shape
    HD = params["wo_bf16"].shape[0]
    H = HD // D
    Vo = params["wlast_bf16"].shape[1]                   # lane-padded vocab (128)

    flops = B * (2 * S * Vp * D + 2 * S * D * 3 * HD + H * 4 * S * S * D
                 + 2 * S * HD * D + 6 * S * D * D + 2 * S * D * Vo + 30 * S * HD)
    transcendentals = B * (H * S * S + S * D + 2)
    bytes_accessed = (4 * (B * S + Vp * D + S * D + 2 * S * HD + 7 * D + Vo + 1 + B * S * Vo)
                      + 2 * (3 * D * HD + HD * D + 3 * D * D + D * Vo))
    cost = pl.CostEstimate(flops=flops, transcendentals=transcendentals,
                           bytes_accessed=bytes_accessed)

    logits_padded = pl.pallas_call(
        rope_model_kernel,
        out_shape=jax.ShapeDtypeStruct((B, S, Vo), jnp.float32),
        grid=(B,),
        in_specs=[
            pl.BlockSpec((1, S, 1), lambda b: (b, 0, 0)),        # idx
            pl.BlockSpec((Vp, D), lambda b: (0, 0)),             # emb (resident)
            pl.BlockSpec((S, D), lambda b: (0, 0)),              # scale window of (CW, D)
            pl.BlockSpec((D, 3 * HD), lambda b: (0, 0)),         # wqkv (bf16, resident)
            pl.BlockSpec((HD, D), lambda b: (0, 0)),             # wo   (bf16, resident)
            pl.BlockSpec((1, D), lambda b: (0, 0)),              # bo
            pl.BlockSpec((S, HD), lambda b: (0, 0)),             # cos (tiled per head)
            pl.BlockSpec((S, HD), lambda b: (0, 0)),             # sin (signed, tiled)
            pl.BlockSpec((D, D), lambda b: (0, 0)),              # w1 (bf16)
            pl.BlockSpec((1, D), lambda b: (0, 0)),              # b1
            pl.BlockSpec((D, D), lambda b: (0, 0)),              # wg (bf16)
            pl.BlockSpec((1, D), lambda b: (0, 0)),              # bg
            pl.BlockSpec((D, D), lambda b: (0, 0)),              # wl (bf16)
            pl.BlockSpec((1, D), lambda b: (0, 0)),              # bl
            pl.BlockSpec((1, 1), lambda b: (0, 0)),              # beta
            pl.BlockSpec((D, Vo), lambda b: (0, 0)),             # wlast (bf16, V padded)
            pl.BlockSpec((1, Vo), lambda b: (0, 0)),             # blast (V padded)
        ],
        out_specs=pl.BlockSpec((1, S, Vo), lambda b: (b, 0, 0)),
        compiler_params=pltpu.CompilerParams(dimension_semantics=("parallel",)),
        cost_estimate=cost,
    )(idx3, params["emb"], params["scale"], params["wqkv_bf16"], params["wo_bf16"],
      params["bo"], params["cos"], params["sin"], params["w1_bf16"], params["b1"],
      params["wg_bf16"], params["bg"], params["wl_bf16"], params["bl"], params["beta"],
      params["wlast_bf16"], params["blast_pad"])

    return logits_padded[:, :, :vocab]


# ---------------------------------------------------------------------------
# Parameters (f32 masters for the reference + bf16 stacked copies for the kernel)
# ---------------------------------------------------------------------------
def init_params(key, *, vocab, vocab_pad, vocab_out_pad, d_model, context_window,
                seq_len, n_heads):
    D, H, S, CW = d_model, n_heads, seq_len, context_window
    HD = H * D
    ks = jax.random.split(key, 14)

    emb = jnp.zeros((vocab_pad, D), jnp.float32).at[:vocab].set(
        jax.random.normal(ks[0], (vocab, D), jnp.float32))
    scale = jnp.ones((CW, D), jnp.float32)               # torch.ones((context_window, d_model))

    def w(k, fan_in, shape):
        return jax.random.normal(k, shape, jnp.float32) * (fan_in ** -0.5)

    wq = w(ks[1], D, (H, D, D))
    wk = w(ks[2], D, (H, D, D))
    wv = w(ks[3], D, (H, D, D))
    # stacked (D, 3*HD): [ q heads | k heads | v heads ], head h at columns [h*D, (h+1)*D)
    wq_s = jnp.transpose(wq, (1, 0, 2)).reshape(D, HD)
    wk_s = jnp.transpose(wk, (1, 0, 2)).reshape(D, HD)
    wv_s = jnp.transpose(wv, (1, 0, 2)).reshape(D, HD)
    wqkv = jnp.concatenate([wq_s, wk_s, wv_s], axis=1)   # (D, 3*HD)

    wo = w(ks[4], HD, (HD, D))
    bo = w(ks[5], HD, (1, D))
    w1 = w(ks[6], D, (D, D)); b1 = w(ks[7], D, (1, D))
    wg = w(ks[8], D, (D, D)); bg = w(ks[9], D, (1, D))
    wl = w(ks[10], D, (D, D)); bl = w(ks[11], D, (1, D))
    beta = jnp.ones((1, 1), jnp.float32)
    wlast = w(ks[12], D, (D, vocab)); blast = w(ks[13], D, (1, vocab))

    # lane-dense padded vocab projection for the kernel output
    wlast_pad = jnp.zeros((D, vocab_out_pad), jnp.float32).at[:, :vocab].set(wlast)
    blast_pad = jnp.zeros((1, vocab_out_pad), jnp.float32).at[:, :vocab].set(blast)

    params = dict(
        emb=emb, scale=scale,
        wqkv=wqkv, wo=wo, bo=bo,
        w1=w1, b1=b1, wg=wg, bg=bg, wl=wl, bl=bl, beta=beta,
        wlast=wlast, blast=blast, blast_pad=blast_pad,
        wqkv_bf16=wqkv.astype(jnp.bfloat16), wo_bf16=wo.astype(jnp.bfloat16),
        w1_bf16=w1.astype(jnp.bfloat16), wg_bf16=wg.astype(jnp.bfloat16),
        wl_bf16=wl.astype(jnp.bfloat16), wlast_bf16=wlast_pad.astype(jnp.bfloat16),
    )

    # RoPE tables — exactly the theta of get_rotary_matrix (note the (i-1) quirk).
    half = D // 2
    i = np.arange(half, dtype=np.float64)
    theta = 10000.0 ** (-2.0 * (i - 1) / D)
    ang = np.arange(S, dtype=np.float64)[:, None] * theta[None, :]       # (S, half)
    cos_base = np.repeat(np.cos(ang), 2, axis=1).astype(np.float32)      # (S, D)
    sin_base = np.repeat(np.sin(ang), 2, axis=1).astype(np.float32)
    sign = np.tile(np.array([1.0, -1.0], np.float32), half)              # (+sin, -sin) per pair
    params["cos"] = jnp.asarray(np.tile(cos_base, (1, H)))               # (S, HD)
    params["sin"] = jnp.asarray(np.tile(sin_base * sign[None, :], (1, H)))

    # Full (S, D, D) rotation matrices — used only by the pure-JAX reference.
    R = np.zeros((S, D, D), np.float32)
    c, s = np.cos(ang), np.sin(ang)
    for p_ in range(S):
        for ii in range(half):
            R[p_, 2 * ii, 2 * ii] = c[p_, ii]
            R[p_, 2 * ii, 2 * ii + 1] = -s[p_, ii]
            R[p_, 2 * ii + 1, 2 * ii] = s[p_, ii]
            R[p_, 2 * ii + 1, 2 * ii + 1] = c[p_, ii]
    params["R"] = jnp.asarray(R)
    return params


# ---------------------------------------------------------------------------
# Pure-JAX reference (mirrors the torch math, f32, full R tensor)
# ---------------------------------------------------------------------------
def rope_model_ref(idx, params, seq_len):
    hp = jax.lax.Precision.HIGHEST
    S = seq_len
    scale = params["scale"]
    x = jnp.take(params["emb"], idx, axis=0)                             # (B, S, D)

    def rms(t):
        ff = jnp.sqrt(jnp.sum(t * t, axis=(1, 2))) * (t.shape[1] * t.shape[2]) ** (-0.5)
        return scale[:S][None] * (t / ff[:, None, None])

    x = rms(x)
    R = params["R"]
    D = x.shape[-1]
    HD = params["wo"].shape[0]
    H = HD // D
    wqkv, wo = params["wqkv"], params["wo"]
    mask = jnp.tril(jnp.ones((S, S), dtype=bool))
    attn = jnp.zeros_like(x)
    for h in range(H):
        wq_h = wqkv[:, h * D:(h + 1) * D]
        wk_h = wqkv[:, HD + h * D:HD + (h + 1) * D]
        wv_h = wqkv[:, 2 * HD + h * D:2 * HD + (h + 1) * D]
        q = jnp.einsum("bsd,de->bse", x, wq_h, precision=hp)
        k = jnp.einsum("bsd,de->bse", x, wk_h, precision=hp)
        v = jnp.einsum("bsd,de->bse", x, wv_h, precision=hp)
        qr = jnp.einsum("bsd,sde->bse", q, R, precision=hp)
        kr = jnp.einsum("bsd,sde->bse", k, R, precision=hp)
        s = jnp.einsum("bqd,bkd->bqk", qr, kr, precision=hp) / (D ** 0.5)
        s = jnp.where(mask[None], s, -jnp.inf)
        a = jax.nn.softmax(s, axis=-1)
        head = jnp.einsum("bqk,bkd->bqd", a, v, precision=hp)
        attn = attn + jnp.einsum("bsd,de->bse", head, wo[h * D:(h + 1) * D], precision=hp)
    x = x + attn + params["bo"][None]
    x = rms(x)
    h1 = jnp.einsum("bsd,de->bse", x, params["w1"], precision=hp) + params["b1"]
    g = jnp.einsum("bsd,de->bse", h1, params["wg"], precision=hp) + params["bg"]
    sw = g * jax.nn.sigmoid(params["beta"] * g)
    lin = jnp.einsum("bsd,de->bse", h1, params["wl"], precision=hp) + params["bl"]
    x = x + sw * lin
    logits = jnp.einsum("bsd,dv->bsv", x, params["wlast"], precision=hp) + params["blast"]
    return logits


if __name__ == "__main__":
    # Small shapes consistent with the module (config: context_window=16, d_model=128,
    # vocab=65, n_heads=8); batch=2, seq=8.
    B, S = 2, 8
    CW, D, V, H = 16, 128, 65, 8
    VP = 128        # embedding rows padded lane-friendly; token ids are always < V
    VP_OUT = 128    # logits / wlast padded to a lane-dense 128, sliced back to V

    key = jax.random.PRNGKey(0)
    k_idx, k_par = jax.random.split(key)
    idx = jax.random.randint(k_idx, (B, S), 0, V, dtype=jnp.int32)
    params = init_params(k_par, vocab=V, vocab_pad=VP, vocab_out_pad=VP_OUT,
                         d_model=D, context_window=CW, seq_len=S, n_heads=H)

    logits = rope_model_forward(idx, params, vocab=V)
    logits = jax.block_until_ready(logits)

    ref = rope_model_ref(idx, params, S)
    assert logits.shape == (B, S, V)
    assert bool(jnp.allclose(logits, ref, atol=5e-2, rtol=5e-2))
    print("KERNEL_OK")
</pallas_src>

<mosaic_0001>
module attributes {stable_mosaic.version = 11 : i64} {
  func.func @rope_model_kernel(%arg0: i32, %arg1: memref<1x8x1xi32, #tpu.memory_space<vmem>>, %arg2: memref<128x128xf32, #tpu.memory_space<vmem>>, %arg3: memref<8x128xf32, #tpu.memory_space<vmem>>, %arg4: memref<128x3072xbf16, #tpu.memory_space<vmem>>, %arg5: memref<1024x128xbf16, #tpu.memory_space<vmem>>, %arg6: memref<1x128xf32, #tpu.memory_space<vmem>>, %arg7: memref<8x1024xf32, #tpu.memory_space<vmem>>, %arg8: memref<8x1024xf32, #tpu.memory_space<vmem>>, %arg9: memref<128x128xbf16, #tpu.memory_space<vmem>>, %arg10: memref<1x128xf32, #tpu.memory_space<vmem>>, %arg11: memref<128x128xbf16, #tpu.memory_space<vmem>>, %arg12: memref<1x128xf32, #tpu.memory_space<vmem>>, %arg13: memref<128x128xbf16, #tpu.memory_space<vmem>>, %arg14: memref<1x128xf32, #tpu.memory_space<vmem>>, %arg15: memref<1x1xf32, #tpu.memory_space<vmem>>, %arg16: memref<128x128xbf16, #tpu.memory_space<vmem>>, %arg17: memref<1x128xf32, #tpu.memory_space<vmem>>, %arg18: memref<1x8x128xf32, #tpu.memory_space<vmem>>) attributes {dimension_semantics = [#tpu.dimension_semantics<parallel>], iteration_bounds = array<i64: 2>, scalar_prefetch = 0 : i64, scratch_operands = 0 : i64, tpu.core_type = #tpu.core_type<tc>, window_params = [{transform_indices = @transform_0, window_bounds = array<i64: 1, 8, 1>}, {pipeline_mode = #tpu.pipeline_mode<synchronous>, transform_indices = @transform_1, window_bounds = array<i64: 128, 128>}, {transform_indices = @transform_2, window_bounds = array<i64: 8, 128>}, {pipeline_mode = #tpu.pipeline_mode<synchronous>, transform_indices = @transform_3, window_bounds = array<i64: 128, 3072>}, {pipeline_mode = #tpu.pipeline_mode<synchronous>, transform_indices = @transform_4, window_bounds = array<i64: 1024, 128>}, {pipeline_mode = #tpu.pipeline_mode<synchronous>, transform_indices = @transform_5, window_bounds = array<i64: 1, 128>}, {pipeline_mode = #tpu.pipeline_mode<synchronous>, transform_indices = @transform_6, window_bounds = array<i64: 8, 1024>}, {pipeline_mode = #tpu.pipeline_mode<synchronous>, transform_indices = @transform_7, window_bounds = array<i64: 8, 1024>}, {pipeline_mode = #tpu.pipeline_mode<synchronous>, transform_indices = @transform_8, window_bounds = array<i64: 128, 128>}, {pipeline_mode = #tpu.pipeline_mode<synchronous>, transform_indices = @transform_9, window_bounds = array<i64: 1, 128>}, {pipeline_mode = #tpu.pipeline_mode<synchronous>, transform_indices = @transform_10, window_bounds = array<i64: 128, 128>}, {pipeline_mode = #tpu.pipeline_mode<synchronous>, transform_indices = @transform_11, window_bounds = array<i64: 1, 128>}, {pipeline_mode = #tpu.pipeline_mode<synchronous>, transform_indices = @transform_12, window_bounds = array<i64: 128, 128>}, {pipeline_mode = #tpu.pipeline_mode<synchronous>, transform_indices = @transform_13, window_bounds = array<i64: 1, 128>}, {pipeline_mode = #tpu.pipeline_mode<synchronous>, transform_indices = @transform_14, window_bounds = array<i64: 1, 1>}, {pipeline_mode = #tpu.pipeline_mode<synchronous>, transform_indices = @transform_15, window_bounds = array<i64: 128, 128>}, {pipeline_mode = #tpu.pipeline_mode<synchronous>, transform_indices = @transform_16, window_bounds = array<i64: 1, 128>}, {transform_indices = @transform_17, window_bounds = array<i64: 1, 8, 128>}]} {
    %c0 = arith.constant 0 : index
    %c0_0 = arith.constant 0 : index
    %c0_1 = arith.constant 0 : index
    %0 = vector.load %arg1[%c0, %c0_0, %c0_1] : memref<1x8x1xi32, #tpu.memory_space<vmem>>, vector<1x8x1xi32>
    %1 = vector.shape_cast %0 : vector<1x8x1xi32> to vector<8x1xi32>
    %2 = tpu.iota {dimensions = array<i32: 1>} : vector<8x128xi32>
    %3 = vector.broadcast %1 : vector<8x1xi32> to vector<8x128xi32>
    %4 = arith.cmpi eq, %3, %2 : vector<8x128xi32>
    %5 = arith.extui %4 : vector<8x128xi1> to vector<8x128xi32>
    %6 = arith.sitofp %5 : vector<8x128xi32> to vector<8x128xf32>
    %c0_2 = arith.constant 0 : index
    %c0_3 = arith.constant 0 : index
    %7 = vector.load %arg2[%c0_2, %c0_3] : memref<128x128xf32, #tpu.memory_space<vmem>>, vector<128x128xf32>
    %cst = arith.constant dense<0.000000e+00> : vector<8x128xf32>
    %8 = tpu.matmul %6, %7, %cst {dimension_numbers = #tpu.dot_dimension_numbers<[1], [0], [0], [1], [0, 0, 1, 1], [], []>} : vector<8x128xf32>, vector<128x128xf32>, vector<8x128xf32> -> vector<8x128xf32>
    %c0_4 = arith.constant 0 : index
    %c0_5 = arith.constant 0 : index
    %9 = vector.load %arg3[%c0_4, %c0_5] : memref<8x128xf32, #tpu.memory_space<vmem>>, vector<8x128xf32>
    %10 = arith.mulf %9, %8 : vector<8x128xf32>
    %11 = arith.mulf %8, %8 : vector<8x128xf32>
    %12 = vector.shape_cast %11 : vector<8x128xf32> to vector<1x8x128xf32>
    %cst_6 = arith.constant dense<0.000000e+00> : vector<1xf32>
    %13 = vector.multi_reduction <add>, %12, %cst_6 [1, 2] : vector<1x8x128xf32> to vector<1xf32>
    %14 = vector.shape_cast %13 : vector<1xf32> to vector<1x1x1xf32>
    %15 = vector.extract %14[0, 0, 0] : f32 from vector<1x1x1xf32>
    %cst_7 = arith.constant 1.024000e+03 : f32
    %16 = arith.divf %15, %cst_7 : f32
    %17 = math.rsqrt %16 : f32
    %18 = vector.broadcast %17 : f32 to vector<8x128xf32>
    %19 = arith.mulf %10, %18 : vector<8x128xf32>
    %20 = arith.truncf %19 : vector<8x128xf32> to vector<8x128xbf16>
    %c0_8 = arith.constant 0 : index
    %c0_9 = arith.constant 0 : index
    %21 = vector.load %arg4[%c0_8, %c0_9] : memref<128x3072xbf16, #tpu.memory_space<vmem>>, vector<128x3072xbf16>
    %cst_10 = arith.constant dense<0.000000e+00> : vector<8x3072xf32>
    %22 = tpu.matmul %20, %21, %cst_10 {dimension_numbers = #tpu.dot_dimension_numbers<[1], [0], [0], [1], [0, 0, 1, 1], [], []>} : vector<8x128xbf16>, vector<128x3072xbf16>, vector<8x3072xf32> -> vector<8x3072xf32>
    %23 = vector.extract_strided_slice %22 {offsets = [0, 0], sizes = [8, 1024], strides = [1, 1]} : vector<8x3072xf32> to vector<8x1024xf32>
    %24 = vector.extract_strided_slice %22 {offsets = [0, 1024], sizes = [8, 1024], strides = [1, 1]} : vector<8x3072xf32> to vector<8x1024xf32>
    %25 = vector.extract_strided_slice %22 {offsets = [0, 2048], sizes = [8, 1024], strides = [1, 1]} : vector<8x3072xf32> to vector<8x1024xf32>
    %c0_11 = arith.constant 0 : index
    %c0_12 = arith.constant 0 : index
    %26 = vector.load %arg7[%c0_11, %c0_12] : memref<8x1024xf32, #tpu.memory_space<vmem>>, vector<8x1024xf32>
    %c0_13 = arith.constant 0 : index
    %c0_14 = arith.constant 0 : index
    %27 = vector.load %arg8[%c0_13, %c0_14] : memref<8x1024xf32, #tpu.memory_space<vmem>>, vector<8x1024xf32>
    %28 = tpu.iota {dimensions = array<i32: 1>} : vector<8x1024xi32>
    %c1_i32 = arith.constant 1 : i32
    %29 = vector.broadcast %c1_i32 : i32 to vector<8x1024xi32>
    %30 = arith.andi %28, %29 : vector<8x1024xi32>
    %c0_i32 = arith.constant 0 : i32
    %31 = vector.broadcast %c0_i32 : i32 to vector<8x1024xi32>
    %32 = arith.cmpi eq, %30, %31 : vector<8x1024xi32>
    %33 = arith.mulf %23, %26 : vector<8x1024xf32>
    %c1023_i32 = arith.constant 1023 : i32
    %34 = tpu.dynamic_rotate %23 by %c1023_i32 dim 1 : vector<8x1024xf32>, i32 -> vector<8x1024xf32>
    %c1_i32_15 = arith.constant 1 : i32
    %35 = tpu.dynamic_rotate %23 by %c1_i32_15 dim 1 : vector<8x1024xf32>, i32 -> vector<8x1024xf32>
    %36 = arith.select %32, %34, %35 : vector<8x1024xi1>, vector<8x1024xf32>
    %37 = arith.mulf %36, %27 : vector<8x1024xf32>
    %38 = arith.addf %33, %37 : vector<8x1024xf32>
    %39 = arith.mulf %24, %26 : vector<8x1024xf32>
    %c1023_i32_16 = arith.constant 1023 : i32
    %40 = tpu.dynamic_rotate %24 by %c1023_i32_16 dim 1 : vector<8x1024xf32>, i32 -> vector<8x1024xf32>
    %c1_i32_17 = arith.constant 1 : i32
    %41 = tpu.dynamic_rotate %24 by %c1_i32_17 dim 1 : vector<8x1024xf32>, i32 -> vector<8x1024xf32>
    %42 = arith.select %32, %40, %41 : vector<8x1024xi1>, vector<8x1024xf32>
    %43 = arith.mulf %42, %27 : vector<8x1024xf32>
    %44 = arith.addf %39, %43 : vector<8x1024xf32>
    %45 = tpu.iota {dimensions = array<i32: 0>} : vector<8x8xi32>
    %46 = tpu.iota {dimensions = array<i32: 1>} : vector<8x8xi32>
    %47 = arith.cmpi sle, %46, %45 : vector<8x8xi32>
    %48 = vector.extract_strided_slice %38 {offsets = [0, 0], sizes = [8, 128], strides = [1, 1]} : vector<8x1024xf32> to vector<8x128xf32>
    %49 = vector.extract_strided_slice %44 {offsets = [0, 0], sizes = [8, 128], strides = [1, 1]} : vector<8x1024xf32> to vector<8x128xf32>
    %50 = vector.extract_strided_slice %25 {offsets = [0, 0], sizes = [8, 128], strides = [1, 1]} : vector<8x1024xf32> to vector<8x128xf32>
    %cst_18 = arith.constant dense<0.000000e+00> : vector<8x8xf32>
    %51 = tpu.matmul %48, %49, %cst_18 {dimension_numbers = #tpu.dot_dimension_numbers<[1], [1], [0], [0], [0, 0, 1, 0], [], []>} : vector<8x128xf32>, vector<8x128xf32>, vector<8x8xf32> -> vector<8x8xf32>
    %cst_19 = arith.constant 0.0883883461 : f32
    %52 = vector.broadcast %cst_19 : f32 to vector<8x8xf32>
    %53 = arith.mulf %51, %52 : vector<8x8xf32>
    %cst_20 = arith.constant -1.000000e+30 : f32
    %54 = vector.broadcast %cst_20 : f32 to vector<8x8xf32>
    %55 = arith.select %47, %53, %54 : vector<8x8xi1>, vector<8x8xf32>
    %cst_21 = arith.constant dense<0xFF800000> : vector<8xf32>
    %56 = vector.multi_reduction <maximumf>, %55, %cst_21 [1] : vector<8x8xf32> to vector<8xf32>
    %57 = vector.shape_cast %56 : vector<8xf32> to vector<8x1xf32>
    %58 = vector.broadcast %57 : vector<8x1xf32> to vector<8x8xf32>
    %59 = arith.subf %55, %58 : vector<8x8xf32>
    %60 = math.exp %59 : vector<8x8xf32>
    %cst_22 = arith.constant dense<0.000000e+00> : vector<8xf32>
    %61 = vector.multi_reduction <add>, %60, %cst_22 [1] : vector<8x8xf32> to vector<8xf32>
    %62 = vector.shape_cast %61 : vector<8xf32> to vector<8x1xf32>
    %63 = vector.broadcast %62 : vector<8x1xf32> to vector<8x8xf32>
    %64 = arith.divf %60, %63 : vector<8x8xf32>
    %cst_23 = arith.constant dense<0.000000e+00> : vector<8x128xf32>
    %65 = tpu.matmul %64, %50, %cst_23 {dimension_numbers = #tpu.dot_dimension_numbers<[1], [0], [0], [1], [0, 0, 1, 1], [], []>} : vector<8x8xf32>, vector<8x128xf32>, vector<8x128xf32> -> vector<8x128xf32>
    %66 = vector.extract_strided_slice %38 {offsets = [0, 128], sizes = [8, 128], strides = [1, 1]} : vector<8x1024xf32> to vector<8x128xf32>
    %67 = vector.extract_strided_slice %44 {offsets = [0, 128], sizes = [8, 128], strides = [1, 1]} : vector<8x1024xf32> to vector<8x128xf32>
    %68 = vector.extract_strided_slice %25 {offsets = [0, 128], sizes = [8, 128], strides = [1, 1]} : vector<8x1024xf32> to vector<8x128xf32>
    %cst_24 = arith.constant dense<0.000000e+00> : vector<8x8xf32>
    %69 = tpu.matmul %66, %67, %cst_24 {dimension_numbers = #tpu.dot_dimension_numbers<[1], [1], [0], [0], [0, 0, 1, 0], [], []>} : vector<8x128xf32>, vector<8x128xf32>, vector<8x8xf32> -> vector<8x8xf32>
    %cst_25 = arith.constant 0.0883883461 : f32
    %70 = vector.broadcast %cst_25 : f32 to vector<8x8xf32>
    %71 = arith.mulf %69, %70 : vector<8x8xf32>
    %cst_26 = arith.constant -1.000000e+30 : f32
    %72 = vector.broadcast %cst_26 : f32 to vector<8x8xf32>
    %73 = arith.select %47, %71, %72 : vector<8x8xi1>, vector<8x8xf32>
    %cst_27 = arith.constant dense<0xFF800000> : vector<8xf32>
    %74 = vector.multi_reduction <maximumf>, %73, %cst_27 [1] : vector<8x8xf32> to vector<8xf32>
    %75 = vector.shape_cast %74 : vector<8xf32> to vector<8x1xf32>
    %76 = vector.broadcast %75 : vector<8x1xf32> to vector<8x8xf32>
    %77 = arith.subf %73, %76 : vector<8x8xf32>
    %78 = math.exp %77 : vector<8x8xf32>
    %cst_28 = arith.constant dense<0.000000e+00> : vector<8xf32>
    %79 = vector.multi_reduction <add>, %78, %cst_28 [1] : vector<8x8xf32> to vector<8xf32>
    %80 = vector.shape_cast %79 : vector<8xf32> to vector<8x1xf32>
    %81 = vector.broadcast %80 : vector<8x1xf32> to vector<8x8xf32>
    %82 = arith.divf %78, %81 : vector<8x8xf32>
    %cst_29 = arith.constant dense<0.000000e+00> : vector<8x128xf32>
    %83 = tpu.matmul %82, %68, %cst_29 {dimension_numbers = #tpu.dot_dimension_numbers<[1], [0], [0], [1], [0, 0, 1, 1], [], []>} : vector<8x8xf32>, vector<8x128xf32>, vector<8x128xf32> -> vector<8x128xf32>
    %84 = vector.extract_strided_slice %38 {offsets = [0, 256], sizes = [8, 128], strides = [1, 1]} : vector<8x1024xf32> to vector<8x128xf32>
    %85 = vector.extract_strided_slice %44 {offsets = [0, 256], sizes = [8, 128], strides = [1, 1]} : vector<8x1024xf32> to vector<8x128xf32>
    %86 = vector.extract_strided_slice %25 {offsets = [0, 256], sizes = [8, 128], strides = [1, 1]} : vector<8x1024xf32> to vector<8x128xf32>
    %cst_30 = arith.constant dense<0.000000e+00> : vector<8x8xf32>
    %87 = tpu.matmul %84, %85, %cst_30 {dimension_numbers = #tpu.dot_dimension_numbers<[1], [1], [0], [0], [0, 0, 1, 0], [], []>} : vector<8x128xf32>, vector<8x128xf32>, vector<8x8xf32> -> vector<8x8xf32>
    %cst_31 = arith.constant 0.0883883461 : f32
    %88 = vector.broadcast %cst_31 : f32 to vector<8x8xf32>
    %89 = arith.mulf %87, %88 : vector<8x8xf32>
    %cst_32 = arith.constant -1.000000e+30 : f32
    %90 = vector.broadcast %cst_32 : f32 to vector<8x8xf32>
    %91 = arith.select %47, %89, %90 : vector<8x8xi1>, vector<8x8xf32>
    %cst_33 = arith.constant dense<0xFF800000> : vector<8xf32>
    %92 = vector.multi_reduction <maximumf>, %91, %cst_33 [1] : vector<8x8xf32> to vector<8xf32>
    %93 = vector.shape_cast %92 : vector<8xf32> to vector<8x1xf32>
    %94 = vector.broadcast %93 : vector<8x1xf32> to vector<8x8xf32>
    %95 = arith.subf %91, %94 : vector<8x8xf32>
    %96 = math.exp %95 : vector<8x8xf32>
    %cst_34 = arith.constant dense<0.000000e+00> : vector<8xf32>
    %97 = vector.multi_reduction <add>, %96, %cst_34 [1] : vector<8x8xf32> to vector<8xf32>
    %98 = vector.shape_cast %97 : vector<8xf32> to vector<8x1xf32>
    %99 = vector.broadcast %98 : vector<8x1xf32> to vector<8x8xf32>
    %100 = arith.divf %96, %99 : vector<8x8xf32>
    %cst_35 = arith.constant dense<0.000000e+00> : vector<8x128xf32>
    %101 = tpu.matmul %100, %86, %cst_35 {dimension_numbers = #tpu.dot_dimension_numbers<[1], [0], [0], [1], [0, 0, 1, 1], [], []>} : vector<8x8xf32>, vector<8x128xf32>, vector<8x128xf32> -> vector<8x128xf32>
    %102 = vector.extract_strided_slice %38 {offsets = [0, 384], sizes = [8, 128], strides = [1, 1]} : vector<8x1024xf32> to vector<8x128xf32>
    %103 = vector.extract_strided_slice %44 {offsets = [0, 384], sizes = [8, 128], strides = [1, 1]} : vector<8x1024xf32> to vector<8x128xf32>
    %104 = vector.extract_strided_slice %25 {offsets = [0, 384], sizes = [8, 128], strides = [1, 1]} : vector<8x1024xf32> to vector<8x128xf32>
    %cst_36 = arith.constant dense<0.000000e+00> : vector<8x8xf32>
    %105 = tpu.matmul %102, %103, %cst_36 {dimension_numbers = #tpu.dot_dimension_numbers<[1], [1], [0], [0], [0, 0, 1, 0], [], []>} : vector<8x128xf32>, vector<8x128xf32>, vector<8x8xf32> -> vector<8x8xf32>
    %cst_37 = arith.constant 0.0883883461 : f32
    %106 = vector.broadcast %cst_37 : f32 to vector<8x8xf32>
    %107 = arith.mulf %105, %106 : vector<8x8xf32>
    %cst_38 = arith.constant -1.000000e+30 : f32
    %108 = vector.broadcast %cst_38 : f32 to vector<8x8xf32>
    %109 = arith.select %47, %107, %108 : vector<8x8xi1>, vector<8x8xf32>
    %cst_39 = arith.constant dense<0xFF800000> : vector<8xf32>
    %110 = vector.multi_reduction <maximumf>, %109, %cst_39 [1] : vector<8x8xf32> to vector<8xf32>
    %111 = vector.shape_cast %110 : vector<8xf32> to vector<8x1xf32>
    %112 = vector.broadcast %111 : vector<8x1xf32> to vector<8x8xf32>
    %113 = arith.subf %109, %112 : vector<8x8xf32>
    %114 = math.exp %113 : vector<8x8xf32>
    %cst_40 = arith.constant dense<0.000000e+00> : vector<8xf32>
    %115 = vector.multi_reduction <add>, %114, %cst_40 [1] : vector<8x8xf32> to vector<8xf32>
    %116 = vector.shape_cast %115 : vector<8xf32> to vector<8x1xf32>
    %117 = vector.broadcast %116 : vector<8x1xf32> to vector<8x8xf32>
    %118 = arith.divf %114, %117 : vector<8x8xf32>
    %cst_41 = arith.constant dense<0.000000e+00> : vector<8x128xf32>
    %119 = tpu.matmul %118, %104, %cst_41 {dimension_numbers = #tpu.dot_dimension_numbers<[1], [0], [0], [1], [0, 0, 1, 1], [], []>} : vector<8x8xf32>, vector<8x128xf32>, vector<8x128xf32> -> vector<8x128xf32>
    %120 = vector.extract_strided_slice %38 {offsets = [0, 512], sizes = [8, 128], strides = [1, 1]} : vector<8x1024xf32> to vector<8x128xf32>
    %121 = vector.extract_strided_slice %44 {offsets = [0, 512], sizes = [8, 128], strides = [1, 1]} : vector<8x1024xf32> to vector<8x128xf32>
    %122 = vector.extract_strided_slice %25 {offsets = [0, 512], sizes = [8, 128], strides = [1, 1]} : vector<8x1024xf32> to vector<8x128xf32>
    %cst_42 = arith.constant dense<0.000000e+00> : vector<8x8xf32>
    %123 = tpu.matmul %120, %121, %cst_42 {dimension_numbers = #tpu.dot_dimension_numbers<[1], [1], [0], [0], [0, 0, 1, 0], [], []>} : vector<8x128xf32>, vector<8x128xf32>, vector<8x8xf32> -> vector<8x8xf32>
    %cst_43 = arith.constant 0.0883883461 : f32
    %124 = vector.broadcast %cst_43 : f32 to vector<8x8xf32>
    %125 = arith.mulf %123, %124 : vector<8x8xf32>
    %cst_44 = arith.constant -1.000000e+30 : f32
    %126 = vector.broadcast %cst_44 : f32 to vector<8x8xf32>
    %127 = arith.select %47, %125, %126 : vector<8x8xi1>, vector<8x8xf32>
    %cst_45 = arith.constant dense<0xFF800000> : vector<8xf32>
    %128 = vector.multi_reduction <maximumf>, %127, %cst_45 [1] : vector<8x8xf32> to vector<8xf32>
    %129 = vector.shape_cast %128 : vector<8xf32> to vector<8x1xf32>
    %130 = vector.broadcast %129 : vector<8x1xf32> to vector<8x8xf32>
    %131 = arith.subf %127, %130 : vector<8x8xf32>
    %132 = math.exp %131 : vector<8x8xf32>
    %cst_46 = arith.constant dense<0.000000e+00> : vector<8xf32>
    %133 = vector.multi_reduction <add>, %132, %cst_46 [1] : vector<8x8xf32> to vector<8xf32>
    %134 = vector.shape_cast %133 : vector<8xf32> to vector<8x1xf32>
    %135 = vector.broadcast %134 : vector<8x1xf32> to vector<8x8xf32>
    %136 = arith.divf %132, %135 : vector<8x8xf32>
    %cst_47 = arith.constant dense<0.000000e+00> : vector<8x128xf32>
    %137 = tpu.matmul %136, %122, %cst_47 {dimension_numbers = #tpu.dot_dimension_numbers<[1], [0], [0], [1], [0, 0, 1, 1], [], []>} : vector<8x8xf32>, vector<8x128xf32>, vector<8x128xf32> -> vector<8x128xf32>
    %138 = vector.extract_strided_slice %38 {offsets = [0, 640], sizes = [8, 128], strides = [1, 1]} : vector<8x1024xf32> to vector<8x128xf32>
    %139 = vector.extract_strided_slice %44 {offsets = [0, 640], sizes = [8, 128], strides = [1, 1]} : vector<8x1024xf32> to vector<8x128xf32>
    %140 = vector.extract_strided_slice %25 {offsets = [0, 640], sizes = [8, 128], strides = [1, 1]} : vector<8x1024xf32> to vector<8x128xf32>
    %cst_48 = arith.constant dense<0.000000e+00> : vector<8x8xf32>
    %141 = tpu.matmul %138, %139, %cst_48 {dimension_numbers = #tpu.dot_dimension_numbers<[1], [1], [0], [0], [0, 0, 1, 0], [], []>} : vector<8x128xf32>, vector<8x128xf32>, vector<8x8xf32> -> vector<8x8xf32>
    %cst_49 = arith.constant 0.0883883461 : f32
    %142 = vector.broadcast %cst_49 : f32 to vector<8x8xf32>
    %143 = arith.mulf %141, %142 : vector<8x8xf32>
    %cst_50 = arith.constant -1.000000e+30 : f32
    %144 = vector.broadcast %cst_50 : f32 to vector<8x8xf32>
    %145 = arith.select %47, %143, %144 : vector<8x8xi1>, vector<8x8xf32>
    %cst_51 = arith.constant dense<0xFF800000> : vector<8xf32>
    %146 = vector.multi_reduction <maximumf>, %145, %cst_51 [1] : vector<8x8xf32> to vector<8xf32>
    %147 = vector.shape_cast %146 : vector<8xf32> to vector<8x1xf32>
    %148 = vector.broadcast %147 : vector<8x1xf32> to vector<8x8xf32>
    %149 = arith.subf %145, %148 : vector<8x8xf32>
    %150 = math.exp %149 : vector<8x8xf32>
    %cst_52 = arith.constant dense<0.000000e+00> : vector<8xf32>
    %151 = vector.multi_reduction <add>, %150, %cst_52 [1] : vector<8x8xf32> to vector<8xf32>
    %152 = vector.shape_cast %151 : vector<8xf32> to vector<8x1xf32>
    %153 = vector.broadcast %152 : vector<8x1xf32> to vector<8x8xf32>
    %154 = arith.divf %150, %153 : vector<8x8xf32>
    %cst_53 = arith.constant dense<0.000000e+00> : vector<8x128xf32>
    %155 = tpu.matmul %154, %140, %cst_53 {dimension_numbers = #tpu.dot_dimension_numbers<[1], [0], [0], [1], [0, 0, 1, 1], [], []>} : vector<8x8xf32>, vector<8x128xf32>, vector<8x128xf32> -> vector<8x128xf32>
    %156 = vector.extract_strided_slice %38 {offsets = [0, 768], sizes = [8, 128], strides = [1, 1]} : vector<8x1024xf32> to vector<8x128xf32>
    %157 = vector.extract_strided_slice %44 {offsets = [0, 768], sizes = [8, 128], strides = [1, 1]} : vector<8x1024xf32> to vector<8x128xf32>
    %158 = vector.extract_strided_slice %25 {offsets = [0, 768], sizes = [8, 128], strides = [1, 1]} : vector<8x1024xf32> to vector<8x128xf32>
    %cst_54 = arith.constant dense<0.000000e+00> : vector<8x8xf32>
    %159 = tpu.matmul %156, %157, %cst_54 {dimension_numbers = #tpu.dot_dimension_numbers<[1], [1], [0], [0], [0, 0, 1, 0], [], []>} : vector<8x128xf32>, vector<8x128xf32>, vector<8x8xf32> -> vector<8x8xf32>
    %cst_55 = arith.constant 0.0883883461 : f32
    %160 = vector.broadcast %cst_55 : f32 to vector<8x8xf32>
    %161 = arith.mulf %159, %160 : vector<8x8xf32>
    %cst_56 = arith.constant -1.000000e+30 : f32
    %162 = vector.broadcast %cst_56 : f32 to vector<8x8xf32>
    %163 = arith.select %47, %161, %162 : vector<8x8xi1>, vector<8x8xf32>
    %cst_57 = arith.constant dense<0xFF800000> : vector<8xf32>
    %164 = vector.multi_reduction <maximumf>, %163, %cst_57 [1] : vector<8x8xf32> to vector<8xf32>
    %165 = vector.shape_cast %164 : vector<8xf32> to vector<8x1xf32>
    %166 = vector.broadcast %165 : vector<8x1xf32> to vector<8x8xf32>
    %167 = arith.subf %163, %166 : vector<8x8xf32>
    %168 = math.exp %167 : vector<8x8xf32>
    %cst_58 = arith.constant dense<0.000000e+00> : vector<8xf32>
    %169 = vector.multi_reduction <add>, %168, %cst_58 [1] : vector<8x8xf32> to vector<8xf32>
    %170 = vector.shape_cast %169 : vector<8xf32> to vector<8x1xf32>
    %171 = vector.broadcast %170 : vector<8x1xf32> to vector<8x8xf32>
    %172 = arith.divf %168, %171 : vector<8x8xf32>
    %cst_59 = arith.constant dense<0.000000e+00> : vector<8x128xf32>
    %173 = tpu.matmul %172, %158, %cst_59 {dimension_numbers = #tpu.dot_dimension_numbers<[1], [0], [0], [1], [0, 0, 1, 1], [], []>} : vector<8x8xf32>, vector<8x128xf32>, vector<8x128xf32> -> vector<8x128xf32>
    %174 = vector.extract_strided_slice %38 {offsets = [0, 896], sizes = [8, 128], strides = [1, 1]} : vector<8x1024xf32> to vector<8x128xf32>
    %175 = vector.extract_strided_slice %44 {offsets = [0, 896], sizes = [8, 128], strides = [1, 1]} : vector<8x1024xf32> to vector<8x128xf32>
    %176 = vector.extract_strided_slice %25 {offsets = [0, 896], sizes = [8, 128], strides = [1, 1]} : vector<8x1024xf32> to vector<8x128xf32>
    %cst_60 = arith.constant dense<0.000000e+00> : vector<8x8xf32>
    %177 = tpu.matmul %174, %175, %cst_60 {dimension_numbers = #tpu.dot_dimension_numbers<[1], [1], [0], [0], [0, 0, 1, 0], [], []>} : vector<8x128xf32>, vector<8x128xf32>, vector<8x8xf32> -> vector<8x8xf32>
    %cst_61 = arith.constant 0.0883883461 : f32
    %178 = vector.broadcast %cst_61 : f32 to vector<8x8xf32>
    %179 = arith.mulf %177, %178 : vector<8x8xf32>
    %cst_62 = arith.constant -1.000000e+30 : f32
    %180 = vector.broadcast %cst_62 : f32 to vector<8x8xf32>
    %181 = arith.select %47, %179, %180 : vector<8x8xi1>, vector<8x8xf32>
    %cst_63 = arith.constant dense<0xFF800000> : vector<8xf32>
    %182 = vector.multi_reduction <maximumf>, %181, %cst_63 [1] : vector<8x8xf32> to vector<8xf32>
    %183 = vector.shape_cast %182 : vector<8xf32> to vector<8x1xf32>
    %184 = vector.broadcast %183 : vector<8x1xf32> to vector<8x8xf32>
    %185 = arith.subf %181, %184 : vector<8x8xf32>
    %186 = math.exp %185 : vector<8x8xf32>
    %cst_64 = arith.constant dense<0.000000e+00> : vector<8xf32>
    %187 = vector.multi_reduction <add>, %186, %cst_64 [1] : vector<8x8xf32> to vector<8xf32>
    %188 = vector.shape_cast %187 : vector<8xf32> to vector<8x1xf32>
    %189 = vector.broadcast %188 : vector<8x1xf32> to vector<8x8xf32>
    %190 = arith.divf %186, %189 : vector<8x8xf32>
    %cst_65 = arith.constant dense<0.000000e+00> : vector<8x128xf32>
    %191 = tpu.matmul %190, %176, %cst_65 {dimension_numbers = #tpu.dot_dimension_numbers<[1], [0], [0], [1], [0, 0, 1, 1], [], []>} : vector<8x8xf32>, vector<8x128xf32>, vector<8x128xf32> -> vector<8x128xf32>
    %192 = tpu.concatenate %65, %83, %101, %119, %137, %155, %173, %191 in 1 : vector<8x128xf32>, vector<8x128xf32>, vector<8x128xf32>, vector<8x128xf32>, vector<8x128xf32>, vector<8x128xf32>, vector<8x128xf32>, vector<8x128xf32> -> vector<8x1024xf32>
    %193 = arith.truncf %192 : vector<8x1024xf32> to vector<8x1024xbf16>
    %c0_66 = arith.constant 0 : index
    %c0_67 = arith.constant 0 : index
    %194 = vector.load %arg5[%c0_66, %c0_67] : memref<1024x128xbf16, #tpu.memory_space<vmem>>, vector<1024x128xbf16>
    %cst_68 = arith.constant dense<0.000000e+00> : vector<8x128xf32>
    %195 = tpu.matmul %193, %194, %cst_68 {dimension_numbers = #tpu.dot_dimension_numbers<[1], [0], [0], [1], [0, 0, 1, 1], [], []>} : vector<8x1024xbf16>, vector<1024x128xbf16>, vector<8x128xf32> -> vector<8x128xf32>
    %c0_69 = arith.constant 0 : index
    %c0_70 = arith.constant 0 : index
    %196 = vector.load %arg6[%c0_69, %c0_70] : memref<1x128xf32, #tpu.memory_space<vmem>>, vector<1x128xf32>
    %197 = vector.broadcast %196 : vector<1x128xf32> to vector<8x128xf32>
    %198 = arith.addf %195, %197 : vector<8x128xf32>
    %199 = arith.addf %19, %198 : vector<8x128xf32>
    %c0_71 = arith.constant 0 : index
    %c0_72 = arith.constant 0 : index
    %200 = vector.load %arg3[%c0_71, %c0_72] : memref<8x128xf32, #tpu.memory_space<vmem>>, vector<8x128xf32>
    %201 = arith.mulf %200, %199 : vector<8x128xf32>
    %202 = arith.mulf %199, %199 : vector<8x128xf32>
    %203 = vector.shape_cast %202 : vector<8x128xf32> to vector<1x8x128xf32>
    %cst_73 = arith.constant dense<0.000000e+00> : vector<1xf32>
    %204 = vector.multi_reduction <add>, %203, %cst_73 [1, 2] : vector<1x8x128xf32> to vector<1xf32>
    %205 = vector.shape_cast %204 : vector<1xf32> to vector<1x1x1xf32>
    %206 = vector.extract %205[0, 0, 0] : f32 from vector<1x1x1xf32>
    %cst_74 = arith.constant 1.024000e+03 : f32
    %207 = arith.divf %206, %cst_74 : f32
    %208 = math.rsqrt %207 : f32
    %209 = vector.broadcast %208 : f32 to vector<8x128xf32>
    %210 = arith.mulf %201, %209 : vector<8x128xf32>
    %211 = arith.truncf %210 : vector<8x128xf32> to vector<8x128xbf16>
    %c0_75 = arith.constant 0 : index
    %c0_76 = arith.constant 0 : index
    %212 = vector.load %arg9[%c0_75, %c0_76] : memref<128x128xbf16, #tpu.memory_space<vmem>>, vector<128x128xbf16>
    %cst_77 = arith.constant dense<0.000000e+00> : vector<8x128xf32>
    %213 = tpu.matmul %211, %212, %cst_77 {dimension_numbers = #tpu.dot_dimension_numbers<[1], [0], [0], [1], [0, 0, 1, 1], [], []>} : vector<8x128xbf16>, vector<128x128xbf16>, vector<8x128xf32> -> vector<8x128xf32>
    %c0_78 = arith.constant 0 : index
    %c0_79 = arith.constant 0 : index
    %214 = vector.load %arg10[%c0_78, %c0_79] : memref<1x128xf32, #tpu.memory_space<vmem>>, vector<1x128xf32>
    %215 = vector.broadcast %214 : vector<1x128xf32> to vector<8x128xf32>
    %216 = arith.addf %213, %215 : vector<8x128xf32>
    %217 = arith.truncf %216 : vector<8x128xf32> to vector<8x128xbf16>
    %c0_80 = arith.constant 0 : index
    %c0_81 = arith.constant 0 : index
    %218 = vector.load %arg11[%c0_80, %c0_81] : memref<128x128xbf16, #tpu.memory_space<vmem>>, vector<128x128xbf16>
    %cst_82 = arith.constant dense<0.000000e+00> : vector<8x128xf32>
    %219 = tpu.matmul %217, %218, %cst_82 {dimension_numbers = #tpu.dot_dimension_numbers<[1], [0], [0], [1], [0, 0, 1, 1], [], []>} : vector<8x128xbf16>, vector<128x128xbf16>, vector<8x128xf32> -> vector<8x128xf32>
    %c0_83 = arith.constant 0 : index
    %c0_84 = arith.constant 0 : index
    %220 = vector.load %arg12[%c0_83, %c0_84] : memref<1x128xf32, #tpu.memory_space<vmem>>, vector<1x128xf32>
    %221 = vector.broadcast %220 : vector<1x128xf32> to vector<8x128xf32>
    %222 = arith.addf %219, %221 : vector<8x128xf32>
    %c0_85 = arith.constant 0 : index
    %c0_86 = arith.constant 0 : index
    %223 = vector.load %arg13[%c0_85, %c0_86] : memref<128x128xbf16, #tpu.memory_space<vmem>>, vector<128x128xbf16>
    %cst_87 = arith.constant dense<0.000000e+00> : vector<8x128xf32>
    %224 = tpu.matmul %217, %223, %cst_87 {dimension_numbers = #tpu.dot_dimension_numbers<[1], [0], [0], [1], [0, 0, 1, 1], [], []>} : vector<8x128xbf16>, vector<128x128xbf16>, vector<8x128xf32> -> vector<8x128xf32>
    %c0_88 = arith.constant 0 : index
    %c0_89 = arith.constant 0 : index
    %225 = vector.load %arg14[%c0_88, %c0_89] : memref<1x128xf32, #tpu.memory_space<vmem>>, vector<1x128xf32>
    %226 = vector.broadcast %225 : vector<1x128xf32> to vector<8x128xf32>
    %227 = arith.addf %224, %226 : vector<8x128xf32>
    %c0_90 = arith.constant 0 : index
    %c0_91 = arith.constant 0 : index
    %228 = vector.load %arg15[%c0_90, %c0_91] : memref<1x1xf32, #tpu.memory_space<vmem>>, vector<1x1xf32>
    %229 = vector.broadcast %228 : vector<1x1xf32> to vector<8x128xf32>
    %230 = arith.mulf %229, %222 : vector<8x128xf32>
    %231 = arith.negf %230 : vector<8x128xf32>
    %232 = math.exp %231 : vector<8x128xf32>
    %cst_92 = arith.constant 1.000000e+00 : f32
    %233 = vector.broadcast %cst_92 : f32 to vector<8x128xf32>
    %234 = arith.addf %233, %232 : vector<8x128xf32>
    %235 = arith.divf %233, %234 : vector<8x128xf32>
    %236 = arith.mulf %222, %235 : vector<8x128xf32>
    %237 = arith.mulf %236, %227 : vector<8x128xf32>
    %238 = arith.addf %210, %237 : vector<8x128xf32>
    %239 = arith.truncf %238 : vector<8x128xf32> to vector<8x128xbf16>
    %c0_93 = arith.constant 0 : index
    %c0_94 = arith.constant 0 : index
    %240 = vector.load %arg16[%c0_93, %c0_94] : memref<128x128xbf16, #tpu.memory_space<vmem>>, vector<128x128xbf16>
    %cst_95 = arith.constant dense<0.000000e+00> : vector<8x128xf32>
    %241 = tpu.matmul %239, %240, %cst_95 {dimension_numbers = #tpu.dot_dimension_numbers<[1], [0], [0], [1], [0, 0, 1, 1], [], []>} : vector<8x128xbf16>, vector<128x128xbf16>, vector<8x128xf32> -> vector<8x128xf32>
    %c0_96 = arith.constant 0 : index
    %c0_97 = arith.constant 0 : index
    %242 = vector.load %arg17[%c0_96, %c0_97] : memref<1x128xf32, #tpu.memory_space<vmem>>, vector<1x128xf32>
    %243 = vector.broadcast %242 : vector<1x128xf32> to vector<8x128xf32>
    %244 = arith.addf %241, %243 : vector<8x128xf32>
    %245 = vector.shape_cast %244 : vector<8x128xf32> to vector<1x8x128xf32>
    %c0_98 = arith.constant 0 : index
    %c0_99 = arith.constant 0 : index
    %c0_100 = arith.constant 0 : index
    %246 = vector.load %arg18[%c0_98, %c0_99, %c0_100] : memref<1x8x128xf32, #tpu.memory_space<vmem>>, vector<1x8x128xf32>
    tpu.vector_store %arg18[%c0_98, %c0_99, %c0_100], %245 {strides = array<i32>} : memref<1x8x128xf32, #tpu.memory_space<vmem>>, vector<1x8x128xf32>,
    return
  }
  func.func @transform_0(%arg0: i32) -> (i32, i32, i32) {
    %c0_i32 = arith.constant 0 : i32
    %c0_i32_0 = arith.constant 0 : i32
    %c0_i32_1 = arith.constant 0 : i32
    return %arg0, %c0_i32, %c0_i32_0 : i32, i32, i32
  }
  func.func @transform_1(%arg0: i32) -> (i32, i32) {
    %c0_i32 = arith.constant 0 : i32
    %c0_i32_0 = arith.constant 0 : i32
    %c0_i32_1 = arith.constant 0 : i32
    return %c0_i32, %c0_i32_0 : i32, i32
  }
  func.func @transform_2(%arg0: i32) -> (i32, i32) {
    %c0_i32 = arith.constant 0 : i32
    %c0_i32_0 = arith.constant 0 : i32
    %c0_i32_1 = arith.constant 0 : i32
    return %c0_i32, %c0_i32_0 : i32, i32
  }
  func.func @transform_3(%arg0: i32) -> (i32, i32) {
    %c0_i32 = arith.constant 0 : i32
    %c0_i32_0 = arith.constant 0 : i32
    %c0_i32_1 = arith.constant 0 : i32
    return %c0_i32, %c0_i32_0 : i32, i32
  }
  func.func @transform_4(%arg0: i32) -> (i32, i32) {
    %c0_i32 = arith.constant 0 : i32
    %c0_i32_0 = arith.constant 0 : i32
    %c0_i32_1 = arith.constant 0 : i32
    return %c0_i32, %c0_i32_0 : i32, i32
  }
  func.func @transform_5(%arg0: i32) -> (i32, i32) {
    %c0_i32 = arith.constant 0 : i32
    %c0_i32_0 = arith.constant 0 : i32
    %c0_i32_1 = arith.constant 0 : i32
    return %c0_i32, %c0_i32_0 : i32, i32
  }
  func.func @transform_6(%arg0: i32) -> (i32, i32) {
    %c0_i32 = arith.constant 0 : i32
    %c0_i32_0 = arith.constant 0 : i32
    %c0_i32_1 = arith.constant 0 : i32
    return %c0_i32, %c0_i32_0 : i32, i32
  }
  func.func @transform_7(%arg0: i32) -> (i32, i32) {
    %c0_i32 = arith.constant 0 : i32
    %c0_i32_0 = arith.constant 0 : i32
    %c0_i32_1 = arith.constant 0 : i32
    return %c0_i32, %c0_i32_0 : i32, i32
  }
  func.func @transform_8(%arg0: i32) -> (i32, i32) {
    %c0_i32 = arith.constant 0 : i32
    %c0_i32_0 = arith.constant 0 : i32
    %c0_i32_1 = arith.constant 0 : i32
    return %c0_i32, %c0_i32_0 : i32, i32
  }
  func.func @transform_9(%arg0: i32) -> (i32, i32) {
    %c0_i32 = arith.constant 0 : i32
    %c0_i32_0 = arith.constant 0 : i32
    %c0_i32_1 = arith.constant 0 : i32
    return %c0_i32, %c0_i32_0 : i32, i32
  }
  func.func @transform_10(%arg0: i32) -> (i32, i32) {
    %c0_i32 = arith.constant 0 : i32
    %c0_i32_0 = arith.constant 0 : i32
    %c0_i32_1 = arith.constant 0 : i32
    return %c0_i32, %c0_i32_0 : i32, i32
  }
  func.func @transform_11(%arg0: i32) -> (i32, i32) {
    %c0_i32 = arith.constant 0 : i32
    %c0_i32_0 = arith.constant 0 : i32
    %c0_i32_1 = arith.constant 0 : i32
    return %c0_i32, %c0_i32_0 : i32, i32
  }
  func.func @transform_12(%arg0: i32) -> (i32, i32) {
    %c0_i32 = arith.constant 0 : i32
    %c0_i32_0 = arith.constant 0 : i32
    %c0_i32_1 = arith.constant 0 : i32
    return %c0_i32, %c0_i32_0 : i32, i32
  }
  func.func @transform_13(%arg0: i32) -> (i32, i32) {
    %c0_i32 = arith.constant 0 : i32
    %c0_i32_0 = arith.constant 0 : i32
    %c0_i32_1 = arith.constant 0 : i32
    return %c0_i32, %c0_i32_0 : i32, i32
  }
  func.func @transform_14(%arg0: i32) -> (i32, i32) {
    %c0_i32 = arith.constant 0 : i32
    %c0_i32_0 = arith.constant 0 : i32
    %c0_i32_1 = arith.constant 0 : i32
    return %c0_i32, %c0_i32_0 : i32, i32
  }
  func.func @transform_15(%arg0: i32) -> (i32, i32) {
    %c0_i32 = arith.constant 0 : i32
    %c0_i32_0 = arith.constant 0 : i32
    %c0_i32_1 = arith.constant 0 : i32
    return %c0_i32, %c0_i32_0 : i32, i32
  }
  func.func @transform_16(%arg0: i32) -> (i32, i32) {
    %c0_i32 = arith.constant 0 : i32
    %c0_i32_0 = arith.constant 0 : i32
    %c0_i32_1 = arith.constant 0 : i32
    return %c0_i32, %c0_i32_0 : i32, i32
  }
  func.func @transform_17(%arg0: i32) -> (i32, i32, i32) {
    %c0_i32 = arith.constant 0 : i32
    %c0_i32_0 = arith.constant 0 : i32
    %c0_i32_1 = arith.constant 0 : i32
    return %arg0, %c0_i32, %c0_i32_0 : i32, i32, i32
  }
}

</mosaic_0001>

<llo_original>
// kernel: tpu_custom_call.1
$region0: #{tpu_custom_call.1}
  #allocation0 [shape = 'u32[]', space=smem, size = 0x4, offset = 0x4, fixed_abs, tag = 'smem constant byte address 0x4 - core index']
  #allocation1 [shape = 'u32[72,128]{1,0:T(1,128)}', space=vmem, size = 0x9000, scoped, tag = 'internal scratch']
  #allocation2 [shape = 'f32[1,1]{1,0:T(1,128)S(1)}', space=vmem, size = 0x200, scoped, tag = 'scoped memory for tpu_custom_call.1']
  %s0 = inlined_call_operand.vmem [shape: s32[2,8,1], index: 0, kind: input, shape index: {}]
  %s1 = inlined_call_operand.hbm [shape: f32[128,128], index: 1, kind: input, shape index: {}]
  %s2 = inlined_call_operand.vmem [shape: f32[16,128], index: 2, kind: input, shape index: {}]
  %s3 = inlined_call_operand.hbm [shape: bf16[128,3072], index: 3, kind: input, shape index: {}]
  %s4 = inlined_call_operand.hbm [shape: bf16[1024,128], index: 4, kind: input, shape index: {}]
  %s5 = inlined_call_operand.vmem [shape: f32[1,128], index: 5, kind: input, shape index: {}]
  %s6 = inlined_call_operand.hbm [shape: f32[8,1024], index: 6, kind: input, shape index: {}]
  %s7 = inlined_call_operand.hbm [shape: f32[8,1024], index: 7, kind: input, shape index: {}]
  %s8 = inlined_call_operand.hbm [shape: bf16[128,128], index: 8, kind: input, shape index: {}]
  %s9 = inlined_call_operand.vmem [shape: f32[1,128], index: 9, kind: input, shape index: {}]
  %s10 = inlined_call_operand.hbm [shape: bf16[128,128], index: 10, kind: input, shape index: {}]
  %s11 = inlined_call_operand.vmem [shape: f32[1,128], index: 11, kind: input, shape index: {}]
  %s12 = inlined_call_operand.hbm [shape: bf16[128,128], index: 12, kind: input, shape index: {}]
  %s13 = inlined_call_operand.vmem [shape: f32[1,128], index: 13, kind: input, shape index: {}]
  %s14 = inlined_call_operand.<no memory space> [shape: f32[1,1], index: 14, kind: input, shape index: {}]
  %s15 = inlined_call_operand.hbm [shape: bf16[128,128], index: 15, kind: input, shape index: {}]
  %s16 = inlined_call_operand.vmem [shape: f32[1,128], index: 16, kind: input, shape index: {}]
  %s17 = inlined_call_operand.hbm [shape: f32[2,8,128], index: 17, kind: output, shape index: {}]
  %s18 = sld [smem:[#allocation0]]
  $region137: #{tpu_custom_call.1} parent=0
    _
  %s20 = ssub.s32 1, %s18
  %s21 = scalar_select 0, %s20, %s18
  %v22 = vstv %s14
  %23 = vst [vmem:[#allocation2] sm:$0x1] %v22
  $region1: #{tpu_custom_call.1} parent=0
    #allocation3 [shape = 'u8[65536]{0}', space=vmem, size = 0x10000, scoped, tag = 'input window, operand 1, single buffered']
    #allocation4 [shape = 's32[2]{0}', space=sflag, size = 0x8, scoped, tag = 'scoped memory for tpu_custom_call.1']
    #allocation5 [shape = 's32[2]{0}', space=sflag, size = 0x8, scoped, tag = 'scoped memory for tpu_custom_call.1']
    #allocation6 [shape = 'u8[786432]{0}', space=vmem, size = 0xc0000, scoped, tag = 'input window, operand 3, single buffered']
    #allocation7 [shape = 's32[1]{0}', space=sflag, size = 0x4, scoped, tag = 'scoped memory for tpu_custom_call.1']
    #allocation8 [shape = 'u8[262144]{0}', space=vmem, size = 0x40000, scoped, tag = 'input window, operand 4, single buffered']
    #allocation9 [shape = 'u8[32768]{0}', space=vmem, size = 0x8000, scoped, tag = 'input window, operand 6, single buffered']
    #allocation10 [shape = 's32[1]{0}', space=sflag, size = 0x4, scoped, tag = 'scoped memory for tpu_custom_call.1']
    #allocation11 [shape = 'u8[32768]{0}', space=vmem, size = 0x8000, scoped, tag = 'input window, operand 7, single buffered']
    #allocation12 [shape = 'u8[32768]{0}', space=vmem, size = 0x8000, scoped, tag = 'input window, operand 8, single buffered']
    #allocation13 [shape = 's32[1]{0}', space=sflag, size = 0x4, scoped, tag = 'scoped memory for tpu_custom_call.1']
    #allocation14 [shape = 'u8[32768]{0}', space=vmem, size = 0x8000, scoped, tag = 'input window, operand 10, single buffered']
    #allocation15 [shape = 'u8[32768]{0}', space=vmem, size = 0x8000, scoped, tag = 'input window, operand 12, single buffered']
    #allocation16 [shape = 's32[1]{0}', space=sflag, size = 0x4, scoped, tag = 'scoped memory for tpu_custom_call.1']
    #allocation17 [shape = 'u8[32768]{0}', space=vmem, size = 0x8000, scoped, tag = 'input window, operand 15, single buffered']
    #allocation18 [shape = 'u8[8192]{0}', space=vmem, size = 0x2000, scoped, tag = 'output window, operand 0']
    %24 = vsyncpa [#allocation4], 0
    %25 = vsyncpa [#allocation7], 0
    %26 = vsyncpa [#allocation10], 0
    %27 = vsyncpa [#allocation13], 0
    %28 = vsyncpa [#allocation16], 0
    %29 = vsyncpa [#allocation5], 0
    %s30 = scalar_lea.sflag [#allocation5], 1
    %31 = vsyncpa %s30, 0
    loop: start=0, step=1, limit=4
    $region2: #{tpu_custom_call.1} parent=1 // loop_pre_header
      _
    $region3: #{tpu_custom_call.1} parent=1 // loop_header
      %s33 = sphi 0, %s37
      %p34 = scmp.ge.s32.totalorder %s33, 4
      %s43 = sphi 0, %s45
      %s46 = sphi 0, %s43
      %s47 = sphi 0, %s46
      %s63 = sphi 0, %s47
      %s67 = sphi 0, %s67
      %s69 = sphi 0, %s67
      %s70 = sphi 0, %s69
      %s84 = sphi 0, %s70
      %s88 = sphi 0, %s88
      %s90 = sphi 0, %s88
      %s91 = sphi 0, %s90
      %s105 = sphi 0, %s91
      %s109 = sphi 0, %s109
      %s111 = sphi 0, %s109
      %s112 = sphi 0, %s111
      %s126 = sphi 0, %s112
      %s130 = sphi 0, %s130
      %s132 = sphi 0, %s130
      %s133 = sphi 0, %s132
      %s147 = sphi 0, %s133
      %s151 = sphi 0, %s151
      %s153 = sphi 0, %s151
      %s154 = sphi 0, %s153
      %s168 = sphi 0, %s154
      %s172 = sphi 0, %s172
      %s174 = sphi 0, %s172
      %s175 = sphi 0, %s174
      %s189 = sphi 0, %s175
      %s193 = sphi 0, %s193
      %s195 = sphi 0, %s193
      %s196 = sphi 0, %s195
      %s210 = sphi 0, %s196
      %s214 = sphi 0, %s214
      %s216 = sphi 0, %s214
      %s217 = sphi 0, %s216
      %s231 = sphi 0, %s217
      %s235 = sphi 0, %s235
      %s237 = sphi 0, %s235
      %s238 = sphi 0, %s237
      %s252 = sphi 0, %s238
      %s256 = sphi 0, %s256
      %s258 = sphi 0, %s256
      %s259 = sphi 0, %s258
      %s273 = sphi 0, %s259
      %s277 = sphi 0, %s277
      %s279 = sphi 0, %s277
      %s280 = sphi 0, %s279
      %s294 = sphi 0, %s280
      %s298 = sphi 0, %s298
      %s300 = sphi 0, %s298
      %s301 = sphi 0, %s300
      %s315 = sphi 0, %s301
      %s319 = sphi 0, %s319
      %s321 = sphi 0, %s319
      %s322 = sphi 0, %s321
      %s336 = sphi 0, %s322
      %s340 = sphi 0, %s340
      %s342 = sphi 0, %s340
      %s343 = sphi 0, %s342
      %s357 = sphi 0, %s343
      %s361 = sphi 0, %s361
      %s363 = sphi 0, %s361
      %s364 = sphi 0, %s363
      %s378 = sphi 0, %s364
      %s382 = sphi 0, %s382
      %s384 = sphi 0, %s382
      %s385 = sphi 0, %s384
      %s399 = sphi 0, %s385
      %s405 = sphi 0, %s407
      %s408 = sphi 0, %s405
      %s409 = sphi 0, %s408
      %s425 = sphi 0, %s409
    $region4: #{tpu_custom_call.1} parent=1 // loop_header_branch
      %36 = sbr.rel (%p34) target = $region8
    $region5: #{tpu_custom_call.1} parent=1 // loop_body
      %s38 = ssub.s32 %s33, 1
      %s39 = ssub.s32 %s33, 2
      %s40 = sadd.s32 %s33, 1
      %s41 = ssub.s32 %s33, %s40
      %p42 = scmp.eq.s32.totalorder %s41, 0
      %s44 = sadd.s32 %s43, 1
      %s45 = scalar_select %p42, %s43, %s44
      %p48 = pneg %p42
      %p49 = scmp.eq.s32.totalorder %s33, 1
      %p50 = por %p48, %p49
      %p51 = scmp.ne.s32.totalorder %s43, %s46
      %p52 = scmp.eq.s32.totalorder %s33, 0
      %p53 = por %p51, %p52
      %p54 = scmp.ne.s32.totalorder %s43, %s46
      %p55 = scmp.eq.s32.totalorder %s38, 1
      %p56 = por %p54, %p55
      %p57 = scmp.ne.s32.totalorder %s46, %s47
      %p58 = scmp.eq.s32.totalorder %s38, 0
      %p59 = por %p57, %p58
      %p60 = scmp.ne.s32.totalorder %s46, %s47
      %p61 = scmp.eq.s32.totalorder %s39, 1
      %p62 = por %p60, %p61
      %p64 = scmp.ne.s32.totalorder %s47, %s63
      %p65 = scmp.eq.s32.totalorder %s39, 0
      %p66 = por %p64, %p65
      %s68 = sadd.s32 %s67, 1
      %p71 = scmp.eq.s32.totalorder %s33, 1
      %p72 = scmp.ne.s32.totalorder %s67, %s69
      %p73 = scmp.eq.s32.totalorder %s33, 0
      %p74 = por %p72, %p73
      %p75 = scmp.ne.s32.totalorder %s67, %s69
      %p76 = scmp.eq.s32.totalorder %s38, 1
      %p77 = por %p75, %p76
      %p78 = scmp.ne.s32.totalorder %s69, %s70
      %p79 = scmp.eq.s32.totalorder %s38, 0
      %p80 = por %p78, %p79
      %p81 = scmp.ne.s32.totalorder %s69, %s70
      %p82 = scmp.eq.s32.totalorder %s39, 1
      %p83 = por %p81, %p82
      %p85 = scmp.ne.s32.totalorder %s70, %s84
      %p86 = scmp.eq.s32.totalorder %s39, 0
      %p87 = por %p85, %p86
      %s89 = sadd.s32 %s88, 1
      %p92 = scmp.eq.s32.totalorder %s33, 1
      %p93 = scmp.ne.s32.totalorder %s88, %s90
      %p94 = scmp.eq.s32.totalorder %s33, 0
      %p95 = por %p93, %p94
      %p96 = scmp.ne.s32.totalorder %s88, %s90
      %p97 = scmp.eq.s32.totalorder %s38, 1
      %p98 = por %p96, %p97
      %p99 = scmp.ne.s32.totalorder %s90, %s91
      %p100 = scmp.eq.s32.totalorder %s38, 0
      %p101 = por %p99, %p100
      %p102 = scmp.ne.s32.totalorder %s90, %s91
      %p103 = scmp.eq.s32.totalorder %s39, 1
      %p104 = por %p102, %p103
      %p106 = scmp.ne.s32.totalorder %s91, %s105
      %p107 = scmp.eq.s32.totalorder %s39, 0
      %p108 = por %p106, %p107
      %s110 = sadd.s32 %s109, 1
      %p113 = scmp.eq.s32.totalorder %s33, 1
      %p114 = scmp.ne.s32.totalorder %s109, %s111
      %p115 = scmp.eq.s32.totalorder %s33, 0
      %p116 = por %p114, %p115
      %p117 = scmp.ne.s32.totalorder %s109, %s111
      %p118 = scmp.eq.s32.totalorder %s38, 1
      %p119 = por %p117, %p118
      %p120 = scmp.ne.s32.totalorder %s111, %s112
      %p121 = scmp.eq.s32.totalorder %s38, 0
      %p122 = por %p120, %p121
      %p123 = scmp.ne.s32.totalorder %s111, %s112
      %p124 = scmp.eq.s32.totalorder %s39, 1
      %p125 = por %p123, %p124
      %p127 = scmp.ne.s32.totalorder %s112, %s126
      %p128 = scmp.eq.s32.totalorder %s39, 0
      %p129 = por %p127, %p128
      %s131 = sadd.s32 %s130, 1
      %p134 = scmp.eq.s32.totalorder %s33, 1
      %p135 = scmp.ne.s32.totalorder %s130, %s132
      %p136 = scmp.eq.s32.totalorder %s33, 0
      %p137 = por %p135, %p136
      %p138 = scmp.ne.s32.totalorder %s130, %s132
      %p139 = scmp.eq.s32.totalorder %s38, 1
      %p140 = por %p138, %p139
      %p141 = scmp.ne.s32.totalorder %s132, %s133
      %p142 = scmp.eq.s32.totalorder %s38, 0
      %p143 = por %p141, %p142
      %p144 = scmp.ne.s32.totalorder %s132, %s133
      %p145 = scmp.eq.s32.totalorder %s39, 1
      %p146 = por %p144, %p145
      %p148 = scmp.ne.s32.totalorder %s133, %s147
      %p149 = scmp.eq.s32.totalorder %s39, 0
      %p150 = por %p148, %p149
      %s152 = sadd.s32 %s151, 1
      %p155 = scmp.eq.s32.totalorder %s33, 1
      %p156 = scmp.ne.s32.totalorder %s151, %s153
      %p157 = scmp.eq.s32.totalorder %s33, 0
      %p158 = por %p156, %p157
      %p159 = scmp.ne.s32.totalorder %s151, %s153
      %p160 = scmp.eq.s32.totalorder %s38, 1
      %p161 = por %p159, %p160
      %p162 = scmp.ne.s32.totalorder %s153, %s154
      %p163 = scmp.eq.s32.totalorder %s38, 0
      %p164 = por %p162, %p163
      %p165 = scmp.ne.s32.totalorder %s153, %s154
      %p166 = scmp.eq.s32.totalorder %s39, 1
      %p167 = por %p165, %p166
      %p169 = scmp.ne.s32.totalorder %s154, %s168
      %p170 = scmp.eq.s32.totalorder %s39, 0
      %p171 = por %p169, %p170
      %s173 = sadd.s32 %s172, 1
      %p176 = scmp.eq.s32.totalorder %s33, 1
      %p177 = scmp.ne.s32.totalorder %s172, %s174
      %p178 = scmp.eq.s32.totalorder %s33, 0
      %p179 = por %p177, %p178
      %p180 = scmp.ne.s32.totalorder %s172, %s174
      %p181 = scmp.eq.s32.totalorder %s38, 1
      %p182 = por %p180, %p181
      %p183 = scmp.ne.s32.totalorder %s174, %s175
      %p184 = scmp.eq.s32.totalorder %s38, 0
      %p185 = por %p183, %p184
      %p186 = scmp.ne.s32.totalorder %s174, %s175
      %p187 = scmp.eq.s32.totalorder %s39, 1
      %p188 = por %p186, %p187
      %p190 = scmp.ne.s32.totalorder %s175, %s189
      %p191 = scmp.eq.s32.totalorder %s39, 0
      %p192 = por %p190, %p191
      %s194 = sadd.s32 %s193, 1
      %p197 = scmp.eq.s32.totalorder %s33, 1
      %p198 = scmp.ne.s32.totalorder %s193, %s195
      %p199 = scmp.eq.s32.totalorder %s33, 0
      %p200 = por %p198, %p199
      %p201 = scmp.ne.s32.totalorder %s193, %s195
      %p202 = scmp.eq.s32.totalorder %s38, 1
      %p203 = por %p201, %p202
      %p204 = scmp.ne.s32.totalorder %s195, %s196
      %p205 = scmp.eq.s32.totalorder %s38, 0
      %p206 = por %p204, %p205
      %p207 = scmp.ne.s32.totalorder %s195, %s196
      %p208 = scmp.eq.s32.totalorder %s39, 1
      %p209 = por %p207, %p208
      %p211 = scmp.ne.s32.totalorder %s196, %s210
      %p212 = scmp.eq.s32.totalorder %s39, 0
      %p213 = por %p211, %p212
      %s215 = sadd.s32 %s214, 1
      %p218 = scmp.eq.s32.totalorder %s33, 1
      %p219 = scmp.ne.s32.totalorder %s214, %s216
      %p220 = scmp.eq.s32.totalorder %s33, 0
      %p221 = por %p219, %p220
      %p222 = scmp.ne.s32.totalorder %s214, %s216
      %p223 = scmp.eq.s32.totalorder %s38, 1
      %p224 = por %p222, %p223
      %p225 = scmp.ne.s32.totalorder %s216, %s217
      %p226 = scmp.eq.s32.totalorder %s38, 0
      %p227 = por %p225, %p226
      %p228 = scmp.ne.s32.totalorder %s216, %s217
      %p229 = scmp.eq.s32.totalorder %s39, 1
      %p230 = por %p228, %p229
      %p232 = scmp.ne.s32.totalorder %s217, %s231
      %p233 = scmp.eq.s32.totalorder %s39, 0
      %p234 = por %p232, %p233
      %s236 = sadd.s32 %s235, 1
      %p239 = scmp.eq.s32.totalorder %s33, 1
      %p240 = scmp.ne.s32.totalorder %s235, %s237
      %p241 = scmp.eq.s32.totalorder %s33, 0
      %p242 = por %p240, %p241
      %p243 = scmp.ne.s32.totalorder %s235, %s237
      %p244 = scmp.eq.s32.totalorder %s38, 1
      %p245 = por %p243, %p244
      %p246 = scmp.ne.s32.totalorder %s237, %s238
      %p247 = scmp.eq.s32.totalorder %s38, 0
      %p248 = por %p246, %p247
      %p249 = scmp.ne.s32.totalorder %s237, %s238
      %p250 = scmp.eq.s32.totalorder %s39, 1
      %p251 = por %p249, %p250
      %p253 = scmp.ne.s32.totalorder %s238, %s252
      %p254 = scmp.eq.s32.totalorder %s39, 0
      %p255 = por %p253, %p254
      %s257 = sadd.s32 %s256, 1
      %p260 = scmp.eq.s32.totalorder %s33, 1
      %p261 = scmp.ne.s32.totalorder %s256, %s258
      %p262 = scmp.eq.s32.totalorder %s33, 0
      %p263 = por %p261, %p262
      %p264 = scmp.ne.s32.totalorder %s256, %s258
      %p265 = scmp.eq.s32.totalorder %s38, 1
      %p266 = por %p264, %p265
      %p267 = scmp.ne.s32.totalorder %s258, %s259
      %p268 = scmp.eq.s32.totalorder %s38, 0
      %p269 = por %p267, %p268
      %p270 = scmp.ne.s32.totalorder %s258, %s259
      %p271 = scmp.eq.s32.totalorder %s39, 1
      %p272 = por %p270, %p271
      %p274 = scmp.ne.s32.totalorder %s259, %s273
      %p275 = scmp.eq.s32.totalorder %s39, 0
      %p276 = por %p274, %p275
      %s278 = sadd.s32 %s277, 1
      %p281 = scmp.eq.s32.totalorder %s33, 1
      %p282 = scmp.ne.s32.totalorder %s277, %s279
      %p283 = scmp.eq.s32.totalorder %s33, 0
      %p284 = por %p282, %p283
      %p285 = scmp.ne.s32.totalorder %s277, %s279
      %p286 = scmp.eq.s32.totalorder %s38, 1
      %p287 = por %p285, %p286
      %p288 = scmp.ne.s32.totalorder %s279, %s280
      %p289 = scmp.eq.s32.totalorder %s38, 0
      %p290 = por %p288, %p289
      %p291 = scmp.ne.s32.totalorder %s279, %s280
      %p292 = scmp.eq.s32.totalorder %s39, 1
      %p293 = por %p291, %p292
      %p295 = scmp.ne.s32.totalorder %s280, %s294
      %p296 = scmp.eq.s32.totalorder %s39, 0
      %p297 = por %p295, %p296
      %s299 = sadd.s32 %s298, 1
      %p302 = scmp.eq.s32.totalorder %s33, 1
      %p303 = scmp.ne.s32.totalorder %s298, %s300
      %p304 = scmp.eq.s32.totalorder %s33, 0
      %p305 = por %p303, %p304
      %p306 = scmp.ne.s32.totalorder %s298, %s300
      %p307 = scmp.eq.s32.totalorder %s38, 1
      %p308 = por %p306, %p307
      %p309 = scmp.ne.s32.totalorder %s300, %s301
      %p310 = scmp.eq.s32.totalorder %s38, 0
      %p311 = por %p309, %p310
      %p312 = scmp.ne.s32.totalorder %s300, %s301
      %p313 = scmp.eq.s32.totalorder %s39, 1
      %p314 = por %p312, %p313
      %p316 = scmp.ne.s32.totalorder %s301, %s315
      %p317 = scmp.eq.s32.totalorder %s39, 0
      %p318 = por %p316, %p317
      %s320 = sadd.s32 %s319, 1
      %p323 = scmp.eq.s32.totalorder %s33, 1
      %p324 = scmp.ne.s32.totalorder %s319, %s321
      %p325 = scmp.eq.s32.totalorder %s33, 0
      %p326 = por %p324, %p325
      %p327 = scmp.ne.s32.totalorder %s319, %s321
      %p328 = scmp.eq.s32.totalorder %s38, 1
      %p329 = por %p327, %p328
      %p330 = scmp.ne.s32.totalorder %s321, %s322
      %p331 = scmp.eq.s32.totalorder %s38, 0
      %p332 = por %p330, %p331
      %p333 = scmp.ne.s32.totalorder %s321, %s322
      %p334 = scmp.eq.s32.totalorder %s39, 1
      %p335 = por %p333, %p334
      %p337 = scmp.ne.s32.totalorder %s322, %s336
      %p338 = scmp.eq.s32.totalorder %s39, 0
      %p339 = por %p337, %p338
      %s341 = sadd.s32 %s340, 1
      %p344 = scmp.eq.s32.totalorder %s33, 1
      %p345 = scmp.ne.s32.totalorder %s340, %s342
      %p346 = scmp.eq.s32.totalorder %s33, 0
      %p347 = por %p345, %p346
      %p348 = scmp.ne.s32.totalorder %s340, %s342
      %p349 = scmp.eq.s32.totalorder %s38, 1
      %p350 = por %p348, %p349
      %p351 = scmp.ne.s32.totalorder %s342, %s343
      %p352 = scmp.eq.s32.totalorder %s38, 0
      %p353 = por %p351, %p352
      %p354 = scmp.ne.s32.totalorder %s342, %s343
      %p355 = scmp.eq.s32.totalorder %s39, 1
      %p356 = por %p354, %p355
      %p358 = scmp.ne.s32.totalorder %s343, %s357
      %p359 = scmp.eq.s32.totalorder %s39, 0
      %p360 = por %p358, %p359
      %s362 = sadd.s32 %s361, 1
      %p365 = scmp.eq.s32.totalorder %s33, 1
      %p366 = scmp.ne.s32.totalorder %s361, %s363
      %p367 = scmp.eq.s32.totalorder %s33, 0
      %p368 = por %p366, %p367
      %p369 = scmp.ne.s32.totalorder %s361, %s363
      %p370 = scmp.eq.s32.totalorder %s38, 1
      %p371 = por %p369, %p370
      %p372 = scmp.ne.s32.totalorder %s363, %s364
      %p373 = scmp.eq.s32.totalorder %s38, 0
      %p374 = por %p372, %p373
      %p375 = scmp.ne.s32.totalorder %s363, %s364
      %p376 = scmp.eq.s32.totalorder %s39, 1
      %p377 = por %p375, %p376
      %p379 = scmp.ne.s32.totalorder %s364, %s378
      %p380 = scmp.eq.s32.totalorder %s39, 0
      %p381 = por %p379, %p380
      %s383 = sadd.s32 %s382, 1
      %p386 = scmp.eq.s32.totalorder %s33, 1
      %p387 = scmp.ne.s32.totalorder %s382, %s384
      %p388 = scmp.eq.s32.totalorder %s33, 0
      %p389 = por %p387, %p388
      %p390 = scmp.ne.s32.totalorder %s382, %s384
      %p391 = scmp.eq.s32.totalorder %s38, 1
      %p392 = por %p390, %p391
      %p393 = scmp.ne.s32.totalorder %s384, %s385
      %p394 = scmp.eq.s32.totalorder %s38, 0
      %p395 = por %p393, %p394
      %p396 = scmp.ne.s32.totalorder %s384, %s385
      %p397 = scmp.eq.s32.totalorder %s39, 1
      %p398 = por %p396, %p397
      %p400 = scmp.ne.s32.totalorder %s385, %s399
      %p401 = scmp.eq.s32.totalorder %s39, 0
      %p402 = por %p400, %p401
      %s403 = ssub.s32 %s33, %s40
      %p404 = scmp.eq.s32.totalorder %s403, 0
      %s406 = sadd.s32 %s405, 1
      %s407 = scalar_select %p404, %s405, %s406
      %p410 = pneg %p404
      %p411 = scmp.eq.s32.totalorder %s33, 1
      %p412 = por %p410, %p411
      %p413 = scmp.ne.s32.totalorder %s405, %s408
      %p414 = scmp.eq.s32.totalorder %s33, 0
      %p415 = por %p413, %p414
      %p416 = scmp.ne.s32.totalorder %s405, %s408
      %p417 = scmp.eq.s32.totalorder %s38, 1
      %p418 = por %p416, %p417
      %p419 = scmp.ne.s32.totalorder %s408, %s409
      %p420 = scmp.eq.s32.totalorder %s38, 0
      %p421 = por %p419, %p420
      %p422 = scmp.ne.s32.totalorder %s408, %s409
      %p423 = scmp.eq.s32.totalorder %s39, 1
      %p424 = por %p422, %p423
      %p426 = scmp.ne.s32.totalorder %s409, %s425
      %p427 = scmp.eq.s32.totalorder %s39, 0
      %p428 = por %p426, %p427
      %p429 = scmp.le.s32.totalorder 1, %s33
      %p430 = scmp.lt.s32.totalorder %s33, 3
      %p431 = pnand %p429, %p430
      %p432 = pneg %p431
      // Predicated region
      $region9: #{tpu_custom_call.1} parent=5 // pred_check
        _
      $region10: #{tpu_custom_call.1} parent=5 // pred_check_branch
        %434 = sbr.rel (%p431) target = $region12
      $region11: #{tpu_custom_call.1} parent=5 // pred_region
        %s435 = ssub.s32 %s33, 1
        // Predicated region
        $region13: #{tpu_custom_call.1} parent=11 // pred_check
          %p436 = pneg %p80
        $region14: #{tpu_custom_call.1} parent=11 // pred_check_branch
          %438 = sbr.rel (%p436) target = $region16
        $region15: #{tpu_custom_call.1} parent=11 // pred_region
          %440 = vsyncadd [#allocation4], 0
          %s441 = sshll.u32 %s1, 4
          %s442 = int_to_ptr.hbm [resolvable:$true] %s441
          %s443 = sshll.u32 [#allocation3], 4
          %s444 = int_to_ptr.vmem [resolvable:$true] %s443
          %449 = dma.hbm_to_vmem [thread:$0]  %s442, 2048, %s444, [#allocation4], 128, 128, 8
        $region16: #{tpu_custom_call.1} parent=11 // pred_fallthru
          _
        // Predicated region
        $region17: #{tpu_custom_call.1} parent=11 // pred_check
          %p450 = pneg %p101
        $region18: #{tpu_custom_call.1} parent=11 // pred_check_branch
          %452 = sbr.rel (%p450) target = $region20
        $region19: #{tpu_custom_call.1} parent=11 // pred_region
          _
        $region20: #{tpu_custom_call.1} parent=11 // pred_fallthru
          _
        // Predicated region
        $region21: #{tpu_custom_call.1} parent=11 // pred_check
          %p453 = pneg %p122
        $region22: #{tpu_custom_call.1} parent=11 // pred_check_branch
          %455 = sbr.rel (%p453) target = $region24
        $region23: #{tpu_custom_call.1} parent=11 // pred_region
          %457 = vsyncadd [#allocation7], 0
          %s458 = sshll.u32 %s3, 4
          %s459 = int_to_ptr.hbm [resolvable:$true] %s458
          %s460 = sshll.u32 [#allocation6], 4
          %s461 = int_to_ptr.vmem [resolvable:$true] %s460
          %466 = dma.hbm_to_vmem [thread:$0]  %s459, 24576, %s461, [#allocation7], 1536, 1536, 96
        $region24: #{tpu_custom_call.1} parent=11 // pred_fallthru
          _
        // Predicated region
        $region25: #{tpu_custom_call.1} parent=11 // pred_check
          %p467 = pneg %p143
        $region26: #{tpu_custom_call.1} parent=11 // pred_check_branch
          %469 = sbr.rel (%p467) target = $region28
        $region27: #{tpu_custom_call.1} parent=11 // pred_region
          %471 = vsyncadd [#allocation7], 0
          %s472 = sshll.u32 %s4, 4
          %s473 = int_to_ptr.hbm [resolvable:$true] %s472
          %s474 = sshll.u32 [#allocation8], 4
          %s475 = int_to_ptr.vmem [resolvable:$true] %s474
          %480 = dma.hbm_to_vmem [thread:$0]  %s473, 8192, %s475, [#allocation7], 64, 64, 4
        $region28: #{tpu_custom_call.1} parent=11 // pred_fallthru
          _
        // Predicated region
        $region29: #{tpu_custom_call.1} parent=11 // pred_check
          %p481 = pneg %p164
        $region30: #{tpu_custom_call.1} parent=11 // pred_check_branch
          %483 = sbr.rel (%p481) target = $region32
        $region31: #{tpu_custom_call.1} parent=11 // pred_region
          _
        $region32: #{tpu_custom_call.1} parent=11 // pred_fallthru
          _
        // Predicated region
        $region33: #{tpu_custom_call.1} parent=11 // pred_check
          %p484 = pneg %p185
        $region34: #{tpu_custom_call.1} parent=11 // pred_check_branch
          %486 = sbr.rel (%p484) target = $region36
        $region35: #{tpu_custom_call.1} parent=11 // pred_region
          %488 = vsyncadd [#allocation10], 0
          %s490 = sshll.u32 %s6, 4
          %s491 = int_to_ptr.hbm [resolvable:$true] %s490
          %s492 = sshll.u32 [#allocation9], 4
          %s493 = int_to_ptr.vmem [resolvable:$true] %s492
          %495 = dma.hbm_to_vmem [thread:$0]  %s491, 1024, %s493, [#allocation10]
        $region36: #{tpu_custom_call.1} parent=11 // pred_fallthru
          _
        // Predicated region
        $region37: #{tpu_custom_call.1} parent=11 // pred_check
          %p496 = pneg %p206
        $region38: #{tpu_custom_call.1} parent=11 // pred_check_branch
          %498 = sbr.rel (%p496) target = $region40
        $region39: #{tpu_custom_call.1} parent=11 // pred_region
          %500 = vsyncadd [#allocation10], 0
          %s502 = sshll.u32 %s7, 4
          %s503 = int_to_ptr.hbm [resolvable:$true] %s502
          %s504 = sshll.u32 [#allocation11], 4
          %s505 = int_to_ptr.vmem [resolvable:$true] %s504
          %507 = dma.hbm_to_vmem [thread:$0]  %s503, 1024, %s505, [#allocation10]
        $region40: #{tpu_custom_call.1} parent=11 // pred_fallthru
          _
        // Predicated region
        $region41: #{tpu_custom_call.1} parent=11 // pred_check
          %p508 = pneg %p227
        $region42: #{tpu_custom_call.1} parent=11 // pred_check_branch
          %510 = sbr.rel (%p508) target = $region44
        $region43: #{tpu_custom_call.1} parent=11 // pred_region
          %512 = vsyncadd [#allocation13], 0
          %s513 = sshll.u32 %s8, 4
          %s514 = int_to_ptr.hbm [resolvable:$true] %s513
          %s515 = sshll.u32 [#allocation12], 4
          %s516 = int_to_ptr.vmem [resolvable:$true] %s515
          %521 = dma.hbm_to_vmem [thread:$0]  %s514, 1024, %s516, [#allocation13], 64, 64, 4
        $region44: #{tpu_custom_call.1} parent=11 // pred_fallthru
          _
        // Predicated region
        $region45: #{tpu_custom_call.1} parent=11 // pred_check
          %p522 = pneg %p248
        $region46: #{tpu_custom_call.1} parent=11 // pred_check_branch
          %524 = sbr.rel (%p522) target = $region48
        $region47: #{tpu_custom_call.1} parent=11 // pred_region
          _
        $region48: #{tpu_custom_call.1} parent=11 // pred_fallthru
          _
        // Predicated region
        $region49: #{tpu_custom_call.1} parent=11 // pred_check
          %p525 = pneg %p269
        $region50: #{tpu_custom_call.1} parent=11 // pred_check_branch
          %527 = sbr.rel (%p525) target = $region52
        $region51: #{tpu_custom_call.1} parent=11 // pred_region
          %529 = vsyncadd [#allocation13], 0
          %s530 = sshll.u32 %s10, 4
          %s531 = int_to_ptr.hbm [resolvable:$true] %s530
          %s532 = sshll.u32 [#allocation14], 4
          %s533 = int_to_ptr.vmem [resolvable:$true] %s532
          %538 = dma.hbm_to_vmem [thread:$0]  %s531, 1024, %s533, [#allocation13], 64, 64, 4
        $region52: #{tpu_custom_call.1} parent=11 // pred_fallthru
          _
        // Predicated region
        $region53: #{tpu_custom_call.1} parent=11 // pred_check
          %p539 = pneg %p290
        $region54: #{tpu_custom_call.1} parent=11 // pred_check_branch
          %541 = sbr.rel (%p539) target = $region56
        $region55: #{tpu_custom_call.1} parent=11 // pred_region
          _
        $region56: #{tpu_custom_call.1} parent=11 // pred_fallthru
          _
        // Predicated region
        $region57: #{tpu_custom_call.1} parent=11 // pred_check
          %p542 = pneg %p311
        $region58: #{tpu_custom_call.1} parent=11 // pred_check_branch
          %544 = sbr.rel (%p542) target = $region60
        $region59: #{tpu_custom_call.1} parent=11 // pred_region
          %546 = vsyncadd [#allocation16], 0
          %s547 = sshll.u32 %s12, 4
          %s548 = int_to_ptr.hbm [resolvable:$true] %s547
          %s549 = sshll.u32 [#allocation15], 4
          %s550 = int_to_ptr.vmem [resolvable:$true] %s549
          %555 = dma.hbm_to_vmem [thread:$0]  %s548, 1024, %s550, [#allocation16], 64, 64, 4
        $region60: #{tpu_custom_call.1} parent=11 // pred_fallthru
          _
        // Predicated region
        $region61: #{tpu_custom_call.1} parent=11 // pred_check
          %p556 = pneg %p332
        $region62: #{tpu_custom_call.1} parent=11 // pred_check_branch
          %558 = sbr.rel (%p556) target = $region64
        $region63: #{tpu_custom_call.1} parent=11 // pred_region
          _
        $region64: #{tpu_custom_call.1} parent=11 // pred_fallthru
          _
        // Predicated region
        $region65: #{tpu_custom_call.1} parent=11 // pred_check
          %p559 = pneg %p353
        $region66: #{tpu_custom_call.1} parent=11 // pred_check_branch
          %561 = sbr.rel (%p559) target = $region68
        $region67: #{tpu_custom_call.1} parent=11 // pred_region
          _
        $region68: #{tpu_custom_call.1} parent=11 // pred_fallthru
          _
        // Predicated region
        $region69: #{tpu_custom_call.1} parent=11 // pred_check
          %p562 = pneg %p374
        $region70: #{tpu_custom_call.1} parent=11 // pred_check_branch
          %564 = sbr.rel (%p562) target = $region72
        $region71: #{tpu_custom_call.1} parent=11 // pred_region
          %566 = vsyncadd [#allocation16], 0
          %s567 = sshll.u32 %s15, 4
          %s568 = int_to_ptr.hbm [resolvable:$true] %s567
          %s569 = sshll.u32 [#allocation17], 4
          %s570 = int_to_ptr.vmem [resolvable:$true] %s569
          %575 = dma.hbm_to_vmem [thread:$0]  %s568, 1024, %s570, [#allocation16], 64, 64, 4
        $region72: #{tpu_custom_call.1} parent=11 // pred_fallthru
          _
        // Predicated region
        $region73: #{tpu_custom_call.1} parent=11 // pred_check
          %p576 = pneg %p395
        $region74: #{tpu_custom_call.1} parent=11 // pred_check_branch
          %578 = sbr.rel (%p576) target = $region76
        $region75: #{tpu_custom_call.1} parent=11 // pred_region
          _
        $region76: #{tpu_custom_call.1} parent=11 // pred_fallthru
          _
      $region12: #{tpu_custom_call.1} parent=5 // pred_fallthru
        _
      %p579 = scmp.lt.s32.totalorder %s33, 2
      // Predicated region
      $region77: #{tpu_custom_call.1} parent=5 // pred_check
        %p580 = pneg %p579
      $region78: #{tpu_custom_call.1} parent=5 // pred_check_branch
        %582 = sbr.rel (%p580) target = $region80
      $region79: #{tpu_custom_call.1} parent=5 // pred_region
        // Predicated region
        $region81: #{tpu_custom_call.1} parent=79 // pred_check
          %p583 = pneg %p53
        $region82: #{tpu_custom_call.1} parent=79 // pred_check_branch
          %585 = sbr.rel (%p583) target = $region84
        $region83: #{tpu_custom_call.1} parent=79 // pred_region
          %p586 = scmp.lt.s32.totalorder %s33, 1
          %s587 = scalar_select %p586, %s33, 1
          %s588 = smul.addr %s587, 8
          %s589 = scalar_lea.vmem %s0, %s588
        $region84: #{tpu_custom_call.1} parent=79 // pred_fallthru
          _
      $region80: #{tpu_custom_call.1} parent=5 // pred_fallthru
        _
      %p590 = scmp.le.s32.totalorder 1, %s33
      %p591 = scmp.lt.s32.totalorder %s33, 3
      %p592 = pnand %p590, %p591
      %p593 = pneg %p592
      // Predicated region
      $region85: #{tpu_custom_call.1} parent=5 // pred_check
        _
      $region86: #{tpu_custom_call.1} parent=5 // pred_check_branch
        %595 = sbr.rel (%p592) target = $region88
      $region87: #{tpu_custom_call.1} parent=5 // pred_region
        %s596 = ssub.s32 %s33, 1
        // Predicated region
        $region89: #{tpu_custom_call.1} parent=87 // pred_check
          %p597 = pneg %p80
        $region90: #{tpu_custom_call.1} parent=87 // pred_check_branch
          %599 = sbr.rel (%p597) target = $region92
        $region91: #{tpu_custom_call.1} parent=87 // pred_region
          %601 = dma.done [#allocation4], 2048
        $region92: #{tpu_custom_call.1} parent=87 // pred_fallthru
          _
        // Predicated region
        $region93: #{tpu_custom_call.1} parent=87 // pred_check
          %p602 = pneg %p122
        $region94: #{tpu_custom_call.1} parent=87 // pred_check_branch
          %604 = sbr.rel (%p602) target = $region96
        $region95: #{tpu_custom_call.1} parent=87 // pred_region
          %606 = dma.done [#allocation7], 24576
        $region96: #{tpu_custom_call.1} parent=87 // pred_fallthru
          _
        // Predicated region
        $region97: #{tpu_custom_call.1} parent=87 // pred_check
          %p607 = pneg %p143
        $region98: #{tpu_custom_call.1} parent=87 // pred_check_branch
          %609 = sbr.rel (%p607) target = $region100
        $region99: #{tpu_custom_call.1} parent=87 // pred_region
          %611 = dma.done [#allocation7], 8192
        $region100: #{tpu_custom_call.1} parent=87 // pred_fallthru
          _
        // Predicated region
        $region101: #{tpu_custom_call.1} parent=87 // pred_check
          %p612 = pneg %p185
        $region102: #{tpu_custom_call.1} parent=87 // pred_check_branch
          %614 = sbr.rel (%p612) target = $region104
        $region103: #{tpu_custom_call.1} parent=87 // pred_region
          %616 = dma.done [#allocation10], 1024
        $region104: #{tpu_custom_call.1} parent=87 // pred_fallthru
          _
        // Predicated region
        $region105: #{tpu_custom_call.1} parent=87 // pred_check
          %p617 = pneg %p206
        $region106: #{tpu_custom_call.1} parent=87 // pred_check_branch
          %619 = sbr.rel (%p617) target = $region108
        $region107: #{tpu_custom_call.1} parent=87 // pred_region
          %621 = dma.done [#allocation10], 1024
        $region108: #{tpu_custom_call.1} parent=87 // pred_fallthru
          _
        // Predicated region
        $region109: #{tpu_custom_call.1} parent=87 // pred_check
          %p622 = pneg %p227
        $region110: #{tpu_custom_call.1} parent=87 // pred_check_branch
          %624 = sbr.rel (%p622) target = $region112
        $region111: #{tpu_custom_call.1} parent=87 // pred_region
          %626 = dma.done [#allocation13], 1024
        $region112: #{tpu_custom_call.1} parent=87 // pred_fallthru
          _
        // Predicated region
        $region113: #{tpu_custom_call.1} parent=87 // pred_check
          %p627 = pneg %p269
        $region114: #{tpu_custom_call.1} parent=87 // pred_check_branch
          %629 = sbr.rel (%p627) target = $region116
        $region115: #{tpu_custom_call.1} parent=87 // pred_region
          %631 = dma.done [#allocation13], 1024
        $region116: #{tpu_custom_call.1} parent=87 // pred_fallthru
          _
        // Predicated region
        $region117: #{tpu_custom_call.1} parent=87 // pred_check
          %p632 = pneg %p311
        $region118: #{tpu_custom_call.1} parent=87 // pred_check_branch
          %634 = sbr.rel (%p632) target = $region120
        $region119: #{tpu_custom_call.1} parent=87 // pred_region
          %636 = dma.done [#allocation16], 1024
        $region120: #{tpu_custom_call.1} parent=87 // pred_fallthru
          _
        // Predicated region
        $region121: #{tpu_custom_call.1} parent=87 // pred_check
          %p637 = pneg %p374
        $region122: #{tpu_custom_call.1} parent=87 // pred_check_branch
          %639 = sbr.rel (%p637) target = $region124
        $region123: #{tpu_custom_call.1} parent=87 // pred_region
          %641 = dma.done [#allocation16], 1024
        $region124: #{tpu_custom_call.1} parent=87 // pred_fallthru
          _
        %p642 = scmp.lt.s32.totalorder %s38, 1
        %s643 = scalar_select %p642, %s38, 1
        %s644 = smul.addr %s643, 8
        %s645 = scalar_lea.vmem %s0, %s644
        %p646 = pneg %p59
        %p647 = pneg %p56
        %p648 = pneg %p80
        %p649 = pneg %p77
        %p650 = pneg %p101
        %p651 = pneg %p98
        %p652 = pneg %p122
        %p653 = pneg %p119
        %p654 = pneg %p143
        %p655 = pneg %p140
        %p656 = pneg %p164
        %p657 = pneg %p161
        %p658 = pneg %p185
        %p659 = pneg %p182
        %p660 = pneg %p206
        %p661 = pneg %p203
        %p662 = pneg %p227
        %p663 = pneg %p224
        %p664 = pneg %p248
        %p665 = pneg %p245
        %p666 = pneg %p269
        %p667 = pneg %p266
        %p668 = pneg %p290
        %p669 = pneg %p287
        %p670 = pneg %p311
        %p671 = pneg %p308
        %p672 = pneg %p332
        %p673 = pneg %p329
        %p674 = pneg %p353
        %p675 = pneg %p350
        %p676 = pneg %p374
        %p677 = pneg %p371
        %p678 = pneg %p395
        %p679 = pneg %p392
        %p680 = pneg %p421
        %p681 = pneg %p418
        %s682 = sand.u32 %s408, 1
        %s683 = scalar_lea.sflag [#allocation5], %s682
        %s684 = sand.u32 %s408, 1
        %s685 = smul.addr %s684, 8
        %s686 = scalar_lea.vmem [#allocation18], %s685
        %p687 = scmp.lt.s32.totalorder %s38, 1
        %s688 = scalar_select %p687, %s38, 1
        %s689 = smul.addr %s688, 8
        %s690 = scalar_lea.vmem %s0, %s689
        %v691 = vld [vmem:[%s690] sm:$0xff]
        %v692 = vlaneseq
        %v693 = vand.u32 %v692, 127
        %694 = vset.pattern.permute.xlu0 0
        %695 = vperm.xlu0 %694, %v691
        %v696 = vpop.permute.xlu0 %695
        %vm697 = vcmp.eq.s32.totalorder %v696, %v693
        %v698 = vsel %vm697, 1, 0
        %v699 = vcvt.s32.f32 %v698
        %v700 = vld [vmem:[#allocation3] sm:$0xff]
        %v701 = vld [vmem:[#allocation3 + $0x8] sm:$0xff]
        %v702 = vld [vmem:[#allocation3 + $0x10] sm:$0xff]
        %v703 = vld [vmem:[#allocation3 + $0x18] sm:$0xff]
        %v704 = vld [vmem:[#allocation3 + $0x20] sm:$0xff]
        %v705 = vld [vmem:[#allocation3 + $0x28] sm:$0xff]
        %v706 = vld [vmem:[#allocation3 + $0x30] sm:$0xff]
        %v707 = vld [vmem:[#allocation3 + $0x38] sm:$0xff]
        %v708 = vld [vmem:[#allocation3 + $0x40] sm:$0xff]
        %v709 = vld [vmem:[#allocation3 + $0x48] sm:$0xff]
        %v710 = vld [vmem:[#allocation3 + $0x50] sm:$0xff]
        %v711 = vld [vmem:[#allocation3 + $0x58] sm:$0xff]
        %v712 = vld [vmem:[#allocation3 + $0x60] sm:$0xff]
        %v713 = vld [vmem:[#allocation3 + $0x68] sm:$0xff]
        %v714 = vld [vmem:[#allocation3 + $0x70] sm:$0xff]
        %v715 = vld [vmem:[#allocation3 + $0x78] sm:$0xff]
        %716 = vmatpush.msra.mxu0 %v715
        %717 = vmatpush.msra.mxu0 %v714
        %718 = vmatpush.msra.mxu0 %v713
        %719 = vmatpush.msra.mxu0 %v712
        %720 = vmatpush.msra.mxu0 %v711
        %721 = vmatpush.msra.mxu0 %v710
        %722 = vmatpush.msra.mxu0 %v709
        %723 = vmatpush.msra.mxu0 %v708
        %724 = vmatpush.msra.mxu0 %v707
        %725 = vmatpush.msra.mxu0 %v706
        %726 = vmatpush.msra.mxu0 %v705
        %727 = vmatpush.msra.mxu0 %v704
        %728 = vmatpush.msra.mxu0 %v703
        %729 = vmatpush.msra.mxu0 %v702
        %730 = vmatpush.msra.mxu0 %v701
        %731 = vmatpush.msra.mxu0 %v700
        %732 = vmatmul.f32.gmra.mxu0 %v699
        %v733 = vpop.f32.mrf.mxu0
        %v734 = vadd.f32 0.0, %v733
        %735 = vdwg.mxu0
        %v736 = vld [vmem:[%s2] sm:$0xff]
        %v737 = vmul.f32 %v736, %v734
        %v738 = vmul.f32 %v734, %v734
        %739 = vadd.xlane.f32.xlu0 %v738
        %v740 = vpop.xlane.xlu0 %739
        %v741 = vrot.slane %v740, 4
        %v742 = vadd.f32 %v740, %v741
        %v743 = vrot.slane %v742, 2
        %v744 = vadd.f32 %v742, %v743
        %v745 = vrot.slane %v744, 1
        %v746 = vadd.f32 %v744, %v745
        %s747 = vtos %v746
        %v748 = vrcp.pop 1024.0
        %v749 = vmul.f32 1024.0, %v748
        %v750 = vsub.f32 1.0, %v749
        %v751 = vmul.f32 %v748, %v750
        %v752 = vadd.f32 %v748, %v751
        %vm753 = vweird.f32 %v748
        %v754 = vsel %vm753, %v748, %v752
        %s755 = vtos %v754
        %s756 = smul.f32 %s747, %s755
        %v757 = vstv %s756
        %v758 = vrsqrt.pop %v757
        %v759 = vmul.f32 %v758, %v757
        %v760 = vmul.f32 %v759, %v758
        %v761 = vmul.f32 0.5, %v760
        %v762 = vsub.f32 1.5, %v761
        %v763 = vmul.f32 %v758, %v762
        %vm764 = vweird.f32 %v757
        %vm765 = vweird.f32 %v758
        %vm766 = vmor %vm764, %vm765
        %v767 = vsel %vm766, %v758, %v763
        %s768 = vtos %v767
        %v769 = vstv %s768
        %v770 = vmul.f32 %v737, %v769
        %v771 = vpack.c.bf16 %v770, %v770
        %v772 = vld [vmem:[#allocation6] sm:$0xff]
        %v773 = vld [vmem:[#allocation6 + $0x8] sm:$0xff]
        %v774 = vld [vmem:[#allocation6 + $0x10] sm:$0xff]
        %v775 = vld [vmem:[#allocation6 + $0x18] sm:$0xff]
        %v776 = vld [vmem:[#allocation6 + $0x20] sm:$0xff]
        %v777 = vld [vmem:[#allocation6 + $0x28] sm:$0xff]
        %v778 = vld [vmem:[#allocation6 + $0x30] sm:$0xff]
        %v779 = vld [vmem:[#allocation6 + $0x38] sm:$0xff]
        %v780 = vld [vmem:[#allocation6 + $0x40] sm:$0xff]
        %v781 = vld [vmem:[#allocation6 + $0x48] sm:$0xff]
        %v782 = vld [vmem:[#allocation6 + $0x50] sm:$0xff]
        %v783 = vld [vmem:[#allocation6 + $0x58] sm:$0xff]
        %v784 = vld [vmem:[#allocation6 + $0x60] sm:$0xff]
        %v785 = vld [vmem:[#allocation6 + $0x68] sm:$0xff]
        %v786 = vld [vmem:[#allocation6 + $0x70] sm:$0xff]
        %v787 = vld [vmem:[#allocation6 + $0x78] sm:$0xff]
        %v788 = vld [vmem:[#allocation6 + $0x80] sm:$0xff]
        %v789 = vld [vmem:[#allocation6 + $0x88] sm:$0xff]
        %v790 = vld [vmem:[#allocation6 + $0x90] sm:$0xff]
        %v791 = vld [vmem:[#allocation6 + $0x98] sm:$0xff]
        %v792 = vld [vmem:[#allocation6 + $0xa0] sm:$0xff]
        %v793 = vld [vmem:[#allocation6 + $0xa8] sm:$0xff]
        %v794 = vld [vmem:[#allocation6 + $0xb0] sm:$0xff]
        %v795 = vld [vmem:[#allocation6 + $0xb8] sm:$0xff]
        %v796 = vld [vmem:[#allocation6 + $0xc0] sm:$0xff]
        %v797 = vld [vmem:[#allocation6 + $0xc8] sm:$0xff]
        %v798 = vld [vmem:[#allocation6 + $0xd0] sm:$0xff]
        %v799 = vld [vmem:[#allocation6 + $0xd8] sm:$0xff]
        %v800 = vld [vmem:[#allocation6 + $0xe0] sm:$0xff]
        %v801 = vld [vmem:[#allocation6 + $0xe8] sm:$0xff]
        %v802 = vld [vmem:[#allocation6 + $0xf0] sm:$0xff]
        %v803 = vld [vmem:[#allocation6 + $0xf8] sm:$0xff]
        %v804 = vld [vmem:[#allocation6 + $0x100] sm:$0xff]
        %v805 = vld [vmem:[#allocation6 + $0x108] sm:$0xff]
        %v806 = vld [vmem:[#allocation6 + $0x110] sm:$0xff]
        %v807 = vld [vmem:[#allocation6 + $0x118] sm:$0xff]
        %v808 = vld [vmem:[#allocation6 + $0x120] sm:$0xff]
        %v809 = vld [vmem:[#allocation6 + $0x128] sm:$0xff]
        %v810 = vld [vmem:[#allocation6 + $0x130] sm:$0xff]
        %v811 = vld [vmem:[#allocation6 + $0x138] sm:$0xff]
        %v812 = vld [vmem:[#allocation6 + $0x140] sm:$0xff]
        %v813 = vld [vmem:[#allocation6 + $0x148] sm:$0xff]
        %v814 = vld [vmem:[#allocation6 + $0x150] sm:$0xff]
        %v815 = vld [vmem:[#allocation6 + $0x158] sm:$0xff]
        %v816 = vld [vmem:[#allocation6 + $0x160] sm:$0xff]
        %v817 = vld [vmem:[#allocation6 + $0x168] sm:$0xff]
        %v818 = vld [vmem:[#allocation6 + $0x170] sm:$0xff]
        %v819 = vld [vmem:[#allocation6 + $0x178] sm:$0xff]
        %v820 = vld [vmem:[#allocation6 + $0x180] sm:$0xff]
        %v821 = vld [vmem:[#allocation6 + $0x188] sm:$0xff]
        %v822 = vld [vmem:[#allocation6 + $0x190] sm:$0xff]
        %v823 = vld [vmem:[#allocation6 + $0x198] sm:$0xff]
        %v824 = vld [vmem:[#allocation6 + $0x1a0] sm:$0xff]
        %v825 = vld [vmem:[#allocation6 + $0x1a8] sm:$0xff]
        %v826 = vld [vmem:[#allocation6 + $0x1b0] sm:$0xff]
        %v827 = vld [vmem:[#allocation6 + $0x1b8] sm:$0xff]
        %v828 = vld [vmem:[#allocation6 + $0x1c0] sm:$0xff]
        %v829 = vld [vmem:[#allocation6 + $0x1c8] sm:$0xff]
        %v830 = vld [vmem:[#allocation6 + $0x1d0] sm:$0xff]
        %v831 = vld [vmem:[#allocation6 + $0x1d8] sm:$0xff]
        %v832 = vld [vmem:[#allocation6 + $0x1e0] sm:$0xff]
        %v833 = vld [vmem:[#allocation6 + $0x1e8] sm:$0xff]
        %v834 = vld [vmem:[#allocation6 + $0x1f0] sm:$0xff]
        %v835 = vld [vmem:[#allocation6 + $0x1f8] sm:$0xff]
        %v836 = vld [vmem:[#allocation6 + $0x200] sm:$0xff]
        %v837 = vld [vmem:[#allocation6 + $0x208] sm:$0xff]
        %v838 = vld [vmem:[#allocation6 + $0x210] sm:$0xff]
        %v839 = vld [vmem:[#allocation6 + $0x218] sm:$0xff]
        %v840 = vld [vmem:[#allocation6 + $0x220] sm:$0xff]
        %v841 = vld [vmem:[#allocation6 + $0x228] sm:$0xff]
        %v842 = vld [vmem:[#allocation6 + $0x230] sm:$0xff]
        %v843 = vld [vmem:[#allocation6 + $0x238] sm:$0xff]
        %v844 = vld [vmem:[#allocation6 + $0x240] sm:$0xff]
        %v845 = vld [vmem:[#allocation6 + $0x248] sm:$0xff]
        %v846 = vld [vmem:[#allocation6 + $0x250] sm:$0xff]
        %v847 = vld [vmem:[#allocation6 + $0x258] sm:$0xff]
        %v848 = vld [vmem:[#allocation6 + $0x260] sm:$0xff]
        %v849 = vld [vmem:[#allocation6 + $0x268] sm:$0xff]
        %v850 = vld [vmem:[#allocation6 + $0x270] sm:$0xff]
        %v851 = vld [vmem:[#allocation6 + $0x278] sm:$0xff]
        %v852 = vld [vmem:[#allocation6 + $0x280] sm:$0xff]
        %v853 = vld [vmem:[#allocation6 + $0x288] sm:$0xff]
        %v854 = vld [vmem:[#allocation6 + $0x290] sm:$0xff]
        %v855 = vld [vmem:[#allocation6 + $0x298] sm:$0xff]
        %v856 = vld [vmem:[#allocation6 + $0x2a0] sm:$0xff]
        %v857 = vld [vmem:[#allocation6 + $0x2a8] sm:$0xff]
        %v858 = vld [vmem:[#allocation6 + $0x2b0] sm:$0xff]
        %v859 = vld [vmem:[#allocation6 + $0x2b8] sm:$0xff]
        %v860 = vld [vmem:[#allocation6 + $0x2c0] sm:$0xff]
        %v861 = vld [vmem:[#allocation6 + $0x2c8] sm:$0xff]
        %v862 = vld [vmem:[#allocation6 + $0x2d0] sm:$0xff]
        %v863 = vld [vmem:[#allocation6 + $0x2d8] sm:$0xff]
        %v864 = vld [vmem:[#allocation6 + $0x2e0] sm:$0xff]
        %v865 = vld [vmem:[#allocation6 + $0x2e8] sm:$0xff]
        %v866 = vld [vmem:[#allocation6 + $0x2f0] sm:$0xff]
        %v867 = vld [vmem:[#allocation6 + $0x2f8] sm:$0xff]
        %v868 = vld [vmem:[#allocation6 + $0x300] sm:$0xff]
        %v869 = vld [vmem:[#allocation6 + $0x308] sm:$0xff]
        %v870 = vld [vmem:[#allocation6 + $0x310] sm:$0xff]
        %v871 = vld [vmem:[#allocation6 + $0x318] sm:$0xff]
        %v872 = vld [vmem:[#allocation6 + $0x320] sm:$0xff]
        %v873 = vld [vmem:[#allocation6 + $0x328] sm:$0xff]
        %v874 = vld [vmem:[#allocation6 + $0x330] sm:$0xff]
        %v875 = vld [vmem:[#allocation6 + $0x338] sm:$0xff]
        %v876 = vld [vmem:[#allocation6 + $0x340] sm:$0xff]
        %v877 = vld [vmem:[#allocation6 + $0x348] sm:$0xff]
        %v878 = vld [vmem:[#allocation6 + $0x350] sm:$0xff]
        %v879 = vld [vmem:[#allocation6 + $0x358] sm:$0xff]
        %v880 = vld [vmem:[#allocation6 + $0x360] sm:$0xff]
        %v881 = vld [vmem:[#allocation6 + $0x368] sm:$0xff]
        %v882 = vld [vmem:[#allocation6 + $0x370] sm:$0xff]
        %v883 = vld [vmem:[#allocation6 + $0x378] sm:$0xff]
        %v884 = vld [vmem:[#allocation6 + $0x380] sm:$0xff]
        %v885 = vld [vmem:[#allocation6 + $0x388] sm:$0xff]
        %v886 = vld [vmem:[#allocation6 + $0x390] sm:$0xff]
        %v887 = vld [vmem:[#allocation6 + $0x398] sm:$0xff]
        %v888 = vld [vmem:[#allocation6 + $0x3a0] sm:$0xff]
        %v889 = vld [vmem:[#allocation6 + $0x3a8] sm:$0xff]
        %v890 = vld [vmem:[#allocation6 + $0x3b0] sm:$0xff]
        %v891 = vld [vmem:[#allocation6 + $0x3b8] sm:$0xff]
        %v892 = vld [vmem:[#allocation6 + $0x3c0] sm:$0xff]
        %v893 = vld [vmem:[#allocation6 + $0x3c8] sm:$0xff]
        %v894 = vld [vmem:[#allocation6 + $0x3d0] sm:$0xff]
        %v895 = vld [vmem:[#allocation6 + $0x3d8] sm:$0xff]
        %v896 = vld [vmem:[#allocation6 + $0x3e0] sm:$0xff]
        %v897 = vld [vmem:[#allocation6 + $0x3e8] sm:$0xff]
        %v898 = vld [vmem:[#allocation6 + $0x3f0] sm:$0xff]
        %v899 = vld [vmem:[#allocation6 + $0x3f8] sm:$0xff]
        %v900 = vld [vmem:[#allocation6 + $0x400] sm:$0xff]
        %v901 = vld [vmem:[#allocation6 + $0x408] sm:$0xff]
        %v902 = vld [vmem:[#allocation6 + $0x410] sm:$0xff]
        %v903 = vld [vmem:[#allocation6 + $0x418] sm:$0xff]
        %v904 = vld [vmem:[#allocation6 + $0x420] sm:$0xff]
        %v905 = vld [vmem:[#allocation6 + $0x428] sm:$0xff]
        %v906 = vld [vmem:[#allocation6 + $0x430] sm:$0xff]
        %v907 = vld [vmem:[#allocation6 + $0x438] sm:$0xff]
        %v908 = vld [vmem:[#allocation6 + $0x440] sm:$0xff]
        %v909 = vld [vmem:[#allocation6 + $0x448] sm:$0xff]
        %v910 = vld [vmem:[#allocation6 + $0x450] sm:$0xff]
        %v911 = vld [vmem:[#allocation6 + $0x458] sm:$0xff]
        %v912 = vld [vmem:[#allocation6 + $0x460] sm:$0xff]
        %v913 = vld [vmem:[#allocation6 + $0x468] sm:$0xff]
        %v914 = vld [vmem:[#allocation6 + $0x470] sm:$0xff]
        %v915 = vld [vmem:[#allocation6 + $0x478] sm:$0xff]
        %v916 = vld [vmem:[#allocation6 + $0x480] sm:$0xff]
        %v917 = vld [vmem:[#allocation6 + $0x488] sm:$0xff]
        %v918 = vld [vmem:[#allocation6 + $0x490] sm:$0xff]
        %v919 = vld [vmem:[#allocation6 + $0x498] sm:$0xff]
        %v920 = vld [vmem:[#allocation6 + $0x4a0] sm:$0xff]
        %v921 = vld [vmem:[#allocation6 + $0x4a8] sm:$0xff]
        %v922 = vld [vmem:[#allocation6 + $0x4b0] sm:$0xff]
        %v923 = vld [vmem:[#allocation6 + $0x4b8] sm:$0xff]
        %v924 = vld [vmem:[#allocation6 + $0x4c0] sm:$0xff]
        %v925 = vld [vmem:[#allocation6 + $0x4c8] sm:$0xff]
        %v926 = vld [vmem:[#allocation6 + $0x4d0] sm:$0xff]
        %v927 = vld [vmem:[#allocation6 + $0x4d8] sm:$0xff]
        %v928 = vld [vmem:[#allocation6 + $0x4e0] sm:$0xff]
        %v929 = vld [vmem:[#allocation6 + $0x4e8] sm:$0xff]
        %v930 = vld [vmem:[#allocation6 + $0x4f0] sm:$0xff]
        %v931 = vld [vmem:[#allocation6 + $0x4f8] sm:$0xff]
        %v932 = vld [vmem:[#allocation6 + $0x500] sm:$0xff]
        %v933 = vld [vmem:[#allocation6 + $0x508] sm:$0xff]
        %v934 = vld [vmem:[#allocation6 + $0x510] sm:$0xff]
        %v935 = vld [vmem:[#allocation6 + $0x518] sm:$0xff]
        %v936 = vld [vmem:[#allocation6 + $0x520] sm:$0xff]
        %v937 = vld [vmem:[#allocation6 + $0x528] sm:$0xff]
        %v938 = vld [vmem:[#allocation6 + $0x530] sm:$0xff]
        %v939 = vld [vmem:[#allocation6 + $0x538] sm:$0xff]
        %v940 = vld [vmem:[#allocation6 + $0x540] sm:$0xff]
        %v941 = vld [vmem:[#allocation6 + $0x548] sm:$0xff]
        %v942 = vld [vmem:[#allocation6 + $0x550] sm:$0xff]
        %v943 = vld [vmem:[#allocation6 + $0x558] sm:$0xff]
        %v944 = vld [vmem:[#allocation6 + $0x560] sm:$0xff]
        %v945 = vld [vmem:[#allocation6 + $0x568] sm:$0xff]
        %v946 = vld [vmem:[#allocation6 + $0x570] sm:$0xff]
        %v947 = vld [vmem:[#allocation6 + $0x578] sm:$0xff]
        %v948 = vld [vmem:[#allocation6 + $0x580] sm:$0xff]
        %v949 = vld [vmem:[#allocation6 + $0x588] sm:$0xff]
        %v950 = vld [vmem:[#allocation6 + $0x590] sm:$0xff]
        %v951 = vld [vmem:[#allocation6 + $0x598] sm:$0xff]
        %v952 = vld [vmem:[#allocation6 + $0x5a0] sm:$0xff]
        %v953 = vld [vmem:[#allocation6 + $0x5a8] sm:$0xff]
        %v954 = vld [vmem:[#allocation6 + $0x5b0] sm:$0xff]
        %v955 = vld [vmem:[#allocation6 + $0x5b8] sm:$0xff]
        %v956 = vld [vmem:[#allocation6 + $0x5c0] sm:$0xff]
        %v957 = vld [vmem:[#allocation6 + $0x5c8] sm:$0xff]
        %v958 = vld [vmem:[#allocation6 + $0x5d0] sm:$0xff]
        %v959 = vld [vmem:[#allocation6 + $0x5d8] sm:$0xff]
        %v960 = vld [vmem:[#allocation6 + $0x5e0] sm:$0xff]
        %v961 = vld [vmem:[#allocation6 + $0x5e8] sm:$0xff]
        %v962 = vld [vmem:[#allocation6 + $0x5f0] sm:$0xff]
        %v963 = vld [vmem:[#allocation6 + $0x5f8] sm:$0xff]
        %v1156 = vunpack.c.l.b16 %v772
        %v1157 = vunpack.c.h.b16 %v772
        %v1158 = vunpack.c.l.b16 %v773
        %v1159 = vunpack.c.h.b16 %v773
        %v1160 = vunpack.c.l.b16 %v774
        %v1161 = vunpack.c.h.b16 %v774
        %v1162 = vunpack.c.l.b16 %v775
        %v1163 = vunpack.c.h.b16 %v775
        %v1164 = vunpack.c.l.b16 %v776
        %v1165 = vunpack.c.h.b16 %v776
        %v1166 = vunpack.c.l.b16 %v777
        %v1167 = vunpack.c.h.b16 %v777
        %v1168 = vunpack.c.l.b16 %v778
        %v1169 = vunpack.c.h.b16 %v778
        %v1170 = vunpack.c.l.b16 %v779
        %v1171 = vunpack.c.h.b16 %v779
        %v1172 = vunpack.c.l.b16 %v780
        %v1173 = vunpack.c.h.b16 %v780
        %v1174 = vunpack.c.l.b16 %v781
        %v1175 = vunpack.c.h.b16 %v781
        %v1176 = vunpack.c.l.b16 %v782
        %v1177 = vunpack.c.h.b16 %v782
        %v1178 = vunpack.c.l.b16 %v783
        %v1179 = vunpack.c.h.b16 %v783
        %v1180 = vunpack.c.l.b16 %v784
        %v1181 = vunpack.c.h.b16 %v784
        %v1182 = vunpack.c.l.b16 %v785
        %v1183 = vunpack.c.h.b16 %v785
        %v1184 = vunpack.c.l.b16 %v786
        %v1185 = vunpack.c.h.b16 %v786
        %v1186 = vunpack.c.l.b16 %v787
        %v1187 = vunpack.c.h.b16 %v787
        %v1188 = vunpack.c.l.b16 %v788
        %v1189 = vunpack.c.h.b16 %v788
        %v1190 = vunpack.c.l.b16 %v789
        %v1191 = vunpack.c.h.b16 %v789
        %v1192 = vunpack.c.l.b16 %v790
        %v1193 = vunpack.c.h.b16 %v790
        %v1194 = vunpack.c.l.b16 %v791
        %v1195 = vunpack.c.h.b16 %v791
        %v1196 = vunpack.c.l.b16 %v792
        %v1197 = vunpack.c.h.b16 %v792
        %v1198 = vunpack.c.l.b16 %v793
        %v1199 = vunpack.c.h.b16 %v793
        %v1200 = vunpack.c.l.b16 %v794
        %v1201 = vunpack.c.h.b16 %v794
        %v1202 = vunpack.c.l.b16 %v795
        %v1203 = vunpack.c.h.b16 %v795
        %v1204 = vunpack.c.l.b16 %v796
        %v1205 = vunpack.c.h.b16 %v796
        %v1206 = vunpack.c.l.b16 %v797
        %v1207 = vunpack.c.h.b16 %v797
        %v1208 = vunpack.c.l.b16 %v798
        %v1209 = vunpack.c.h.b16 %v798
        %v1210 = vunpack.c.l.b16 %v799
        %v1211 = vunpack.c.h.b16 %v799
        %v1212 = vunpack.c.l.b16 %v800
        %v1213 = vunpack.c.h.b16 %v800
        %v1214 = vunpack.c.l.b16 %v801
        %v1215 = vunpack.c.h.b16 %v801
        %v1216 = vunpack.c.l.b16 %v802
        %v1217 = vunpack.c.h.b16 %v802
        %v1218 = vunpack.c.l.b16 %v803
        %v1219 = vunpack.c.h.b16 %v803
        %v1220 = vunpack.c.l.b16 %v804
        %v1221 = vunpack.c.h.b16 %v804
        %v1222 = vunpack.c.l.b16 %v805
        %v1223 = vunpack.c.h.b16 %v805
        %v1224 = vunpack.c.l.b16 %v806
        %v1225 = vunpack.c.h.b16 %v806
        %v1226 = vunpack.c.l.b16 %v807
        %v1227 = vunpack.c.h.b16 %v807
        %v1228 = vunpack.c.l.b16 %v808
        %v1229 = vunpack.c.h.b16 %v808
        %v1230 = vunpack.c.l.b16 %v809
        %v1231 = vunpack.c.h.b16 %v809
        %v1232 = vunpack.c.l.b16 %v810
        %v1233 = vunpack.c.h.b16 %v810
        %v1234 = vunpack.c.l.b16 %v811
        %v1235 = vunpack.c.h.b16 %v811
        %v1236 = vunpack.c.l.b16 %v812
        %v1237 = vunpack.c.h.b16 %v812
        %v1238 = vunpack.c.l.b16 %v813
        %v1239 = vunpack.c.h.b16 %v813
        %v1240 = vunpack.c.l.b16 %v814
        %v1241 = vunpack.c.h.b16 %v814
        %v1242 = vunpack.c.l.b16 %v815
        %v1243 = vunpack.c.h.b16 %v815
        %v1244 = vunpack.c.l.b16 %v816
        %v1245 = vunpack.c.h.b16 %v816
        %v1246 = vunpack.c.l.b16 %v817
        %v1247 = vunpack.c.h.b16 %v817
        %v1248 = vunpack.c.l.b16 %v818
        %v1249 = vunpack.c.h.b16 %v818
        %v1250 = vunpack.c.l.b16 %v819
        %v1251 = vunpack.c.h.b16 %v819
        %v1252 = vunpack.c.l.b16 %v820
        %v1253 = vunpack.c.h.b16 %v820
        %v1254 = vunpack.c.l.b16 %v821
        %v1255 = vunpack.c.h.b16 %v821
        %v1256 = vunpack.c.l.b16 %v822
        %v1257 = vunpack.c.h.b16 %v822
        %v1258 = vunpack.c.l.b16 %v823
        %v1259 = vunpack.c.h.b16 %v823
        %v1260 = vunpack.c.l.b16 %v824
        %v1261 = vunpack.c.h.b16 %v824
        %v1262 = vunpack.c.l.b16 %v825
        %v1263 = vunpack.c.h.b16 %v825
        %v1264 = vunpack.c.l.b16 %v826
        %v1265 = vunpack.c.h.b16 %v826
        %v1266 = vunpack.c.l.b16 %v827
        %v1267 = vunpack.c.h.b16 %v827
        %v1268 = vunpack.c.l.b16 %v828
        %v1269 = vunpack.c.h.b16 %v828
        %v1270 = vunpack.c.l.b16 %v829
        %v1271 = vunpack.c.h.b16 %v829
        %v1272 = vunpack.c.l.b16 %v830
        %v1273 = vunpack.c.h.b16 %v830
        %v1274 = vunpack.c.l.b16 %v831
        %v1275 = vunpack.c.h.b16 %v831
        %v1276 = vunpack.c.l.b16 %v832
        %v1277 = vunpack.c.h.b16 %v832
        %v1278 = vunpack.c.l.b16 %v833
        %v1279 = vunpack.c.h.b16 %v833
        %v1280 = vunpack.c.l.b16 %v834
        %v1281 = vunpack.c.h.b16 %v834
        %v1282 = vunpack.c.l.b16 %v835
        %v1283 = vunpack.c.h.b16 %v835
        %v1284 = vunpack.c.l.b16 %v836
        %v1285 = vunpack.c.h.b16 %v836
        %v1286 = vunpack.c.l.b16 %v837
        %v1287 = vunpack.c.h.b16 %v837
        %v1288 = vunpack.c.l.b16 %v838
        %v1289 = vunpack.c.h.b16 %v838
        %v1290 = vunpack.c.l.b16 %v839
        %v1291 = vunpack.c.h.b16 %v839
        %v1292 = vunpack.c.l.b16 %v840
        %v1293 = vunpack.c.h.b16 %v840
        %v1294 = vunpack.c.l.b16 %v841
        %v1295 = vunpack.c.h.b16 %v841
        %v1296 = vunpack.c.l.b16 %v842
        %v1297 = vunpack.c.h.b16 %v842
        %v1298 = vunpack.c.l.b16 %v843
        %v1299 = vunpack.c.h.b16 %v843
        %v1300 = vunpack.c.l.b16 %v844
        %v1301 = vunpack.c.h.b16 %v844
        %v1302 = vunpack.c.l.b16 %v845
        %v1303 = vunpack.c.h.b16 %v845
        %v1304 = vunpack.c.l.b16 %v846
        %v1305 = vunpack.c.h.b16 %v846
        %v1306 = vunpack.c.l.b16 %v847
        %v1307 = vunpack.c.h.b16 %v847
        %v1308 = vunpack.c.l.b16 %v848
        %v1309 = vunpack.c.h.b16 %v848
        %v1310 = vunpack.c.l.b16 %v849
        %v1311 = vunpack.c.h.b16 %v849
        %v1312 = vunpack.c.l.b16 %v850
        %v1313 = vunpack.c.h.b16 %v850
        %v1314 = vunpack.c.l.b16 %v851
        %v1315 = vunpack.c.h.b16 %v851
        %v1316 = vunpack.c.l.b16 %v852
        %v1317 = vunpack.c.h.b16 %v852
        %v1318 = vunpack.c.l.b16 %v853
        %v1319 = vunpack.c.h.b16 %v853
        %v1320 = vunpack.c.l.b16 %v854
        %v1321 = vunpack.c.h.b16 %v854
        %v1322 = vunpack.c.l.b16 %v855
        %v1323 = vunpack.c.h.b16 %v855
        %v1324 = vunpack.c.l.b16 %v856
        %v1325 = vunpack.c.h.b16 %v856
        %v1326 = vunpack.c.l.b16 %v857
        %v1327 = vunpack.c.h.b16 %v857
        %v1328 = vunpack.c.l.b16 %v858
        %v1329 = vunpack.c.h.b16 %v858
        %v1330 = vunpack.c.l.b16 %v859
        %v1331 = vunpack.c.h.b16 %v859
        %v1332 = vunpack.c.l.b16 %v860
        %v1333 = vunpack.c.h.b16 %v860
        %v1334 = vunpack.c.l.b16 %v861
        %v1335 = vunpack.c.h.b16 %v861
        %v1336 = vunpack.c.l.b16 %v862
        %v1337 = vunpack.c.h.b16 %v862
        %v1338 = vunpack.c.l.b16 %v863
        %v1339 = vunpack.c.h.b16 %v863
        %v1340 = vunpack.c.l.b16 %v864
        %v1341 = vunpack.c.h.b16 %v864
        %v1342 = vunpack.c.l.b16 %v865
        %v1343 = vunpack.c.h.b16 %v865
        %v1344 = vunpack.c.l.b16 %v866
        %v1345 = vunpack.c.h.b16 %v866
        %v1346 = vunpack.c.l.b16 %v867
        %v1347 = vunpack.c.h.b16 %v867
        %v1348 = vunpack.c.l.b16 %v868
        %v1349 = vunpack.c.h.b16 %v868
        %v1350 = vunpack.c.l.b16 %v869
        %v1351 = vunpack.c.h.b16 %v869
        %v1352 = vunpack.c.l.b16 %v870
        %v1353 = vunpack.c.h.b16 %v870
        %v1354 = vunpack.c.l.b16 %v871
        %v1355 = vunpack.c.h.b16 %v871
        %v1356 = vunpack.c.l.b16 %v872
        %v1357 = vunpack.c.h.b16 %v872
        %v1358 = vunpack.c.l.b16 %v873
        %v1359 = vunpack.c.h.b16 %v873
        %v1360 = vunpack.c.l.b16 %v874
        %v1361 = vunpack.c.h.b16 %v874
        %v1362 = vunpack.c.l.b16 %v875
        %v1363 = vunpack.c.h.b16 %v875
        %v1364 = vunpack.c.l.b16 %v876
        %v1365 = vunpack.c.h.b16 %v876
        %v1366 = vunpack.c.l.b16 %v877
        %v1367 = vunpack.c.h.b16 %v877
        %v1368 = vunpack.c.l.b16 %v878
        %v1369 = vunpack.c.h.b16 %v878
        %v1370 = vunpack.c.l.b16 %v879
        %v1371 = vunpack.c.h.b16 %v879
        %v1372 = vunpack.c.l.b16 %v880
        %v1373 = vunpack.c.h.b16 %v880
        %v1374 = vunpack.c.l.b16 %v881
        %v1375 = vunpack.c.h.b16 %v881
        %v1376 = vunpack.c.l.b16 %v882
        %v1377 = vunpack.c.h.b16 %v882
        %v1378 = vunpack.c.l.b16 %v883
        %v1379 = vunpack.c.h.b16 %v883
        %v1380 = vunpack.c.l.b16 %v884
        %v1381 = vunpack.c.h.b16 %v884
        %v1382 = vunpack.c.l.b16 %v885
        %v1383 = vunpack.c.h.b16 %v885
        %v1384 = vunpack.c.l.b16 %v886
        %v1385 = vunpack.c.h.b16 %v886
        %v1386 = vunpack.c.l.b16 %v887
        %v1387 = vunpack.c.h.b16 %v887
        %v1388 = vunpack.c.l.b16 %v888
        %v1389 = vunpack.c.h.b16 %v888
        %v1390 = vunpack.c.l.b16 %v889
        %v1391 = vunpack.c.h.b16 %v889
        %v1392 = vunpack.c.l.b16 %v890
        %v1393 = vunpack.c.h.b16 %v890
        %v1394 = vunpack.c.l.b16 %v891
        %v1395 = vunpack.c.h.b16 %v891
        %v1396 = vunpack.c.l.b16 %v892
        %v1397 = vunpack.c.h.b16 %v892
        %v1398 = vunpack.c.l.b16 %v893
        %v1399 = vunpack.c.h.b16 %v893
        %v1400 = vunpack.c.l.b16 %v894
        %v1401 = vunpack.c.h.b16 %v894
        %v1402 = vunpack.c.l.b16 %v895
        %v1403 = vunpack.c.h.b16 %v895
        %v1404 = vunpack.c.l.b16 %v896
        %v1405 = vunpack.c.h.b16 %v896
        %v1406 = vunpack.c.l.b16 %v897
        %v1407 = vunpack.c.h.b16 %v897
        %v1408 = vunpack.c.l.b16 %v898
        %v1409 = vunpack.c.h.b16 %v898
        %v1410 = vunpack.c.l.b16 %v899
        %v1411 = vunpack.c.h.b16 %v899
        %v1412 = vunpack.c.l.b16 %v900
        %v1413 = vunpack.c.h.b16 %v900
        %v1414 = vunpack.c.l.b16 %v901
        %v1415 = vunpack.c.h.b16 %v901
        %v1416 = vunpack.c.l.b16 %v902
        %v1417 = vunpack.c.h.b16 %v902
        %v1418 = vunpack.c.l.b16 %v903
        %v1419 = vunpack.c.h.b16 %v903
        %v1420 = vunpack.c.l.b16 %v904
        %v1421 = vunpack.c.h.b16 %v904
        %v1422 = vunpack.c.l.b16 %v905
        %v1423 = vunpack.c.h.b16 %v905
        %v1424 = vunpack.c.l.b16 %v906
        %v1425 = vunpack.c.h.b16 %v906
        %v1426 = vunpack.c.l.b16 %v907
        %v1427 = vunpack.c.h.b16 %v907
        %v1428 = vunpack.c.l.b16 %v908
        %v1429 = vunpack.c.h.b16 %v908
        %v1430 = vunpack.c.l.b16 %v909
        %v1431 = vunpack.c.h.b16 %v909
        %v1432 = vunpack.c.l.b16 %v910
        %v1433 = vunpack.c.h.b16 %v910
        %v1434 = vunpack.c.l.b16 %v911
        %v1435 = vunpack.c.h.b16 %v911
        %v1436 = vunpack.c.l.b16 %v912
        %v1437 = vunpack.c.h.b16 %v912
        %v1438 = vunpack.c.l.b16 %v913
        %v1439 = vunpack.c.h.b16 %v913
        %v1440 = vunpack.c.l.b16 %v914
        %v1441 = vunpack.c.h.b16 %v914
        %v1442 = vunpack.c.l.b16 %v915
        %v1443 = vunpack.c.h.b16 %v915
        %v1444 = vunpack.c.l.b16 %v916
        %v1445 = vunpack.c.h.b16 %v916
        %v1446 = vunpack.c.l.b16 %v917
        %v1447 = vunpack.c.h.b16 %v917
        %v1448 = vunpack.c.l.b16 %v918
        %v1449 = vunpack.c.h.b16 %v918
        %v1450 = vunpack.c.l.b16 %v919
        %v1451 = vunpack.c.h.b16 %v919
        %v1452 = vunpack.c.l.b16 %v920
        %v1453 = vunpack.c.h.b16 %v920
        %v1454 = vunpack.c.l.b16 %v921
        %v1455 = vunpack.c.h.b16 %v921
        %v1456 = vunpack.c.l.b16 %v922
        %v1457 = vunpack.c.h.b16 %v922
        %v1458 = vunpack.c.l.b16 %v923
        %v1459 = vunpack.c.h.b16 %v923
        %v1460 = vunpack.c.l.b16 %v924
        %v1461 = vunpack.c.h.b16 %v924
        %v1462 = vunpack.c.l.b16 %v925
        %v1463 = vunpack.c.h.b16 %v925
        %v1464 = vunpack.c.l.b16 %v926
        %v1465 = vunpack.c.h.b16 %v926
        %v1466 = vunpack.c.l.b16 %v927
        %v1467 = vunpack.c.h.b16 %v927
        %v1468 = vunpack.c.l.b16 %v928
        %v1469 = vunpack.c.h.b16 %v928
        %v1470 = vunpack.c.l.b16 %v929
        %v1471 = vunpack.c.h.b16 %v929
        %v1472 = vunpack.c.l.b16 %v930
        %v1473 = vunpack.c.h.b16 %v930
        %v1474 = vunpack.c.l.b16 %v931
        %v1475 = vunpack.c.h.b16 %v931
        %v1476 = vunpack.c.l.b16 %v932
        %v1477 = vunpack.c.h.b16 %v932
        %v1478 = vunpack.c.l.b16 %v933
        %v1479 = vunpack.c.h.b16 %v933
        %v1480 = vunpack.c.l.b16 %v934
        %v1481 = vunpack.c.h.b16 %v934
        %v1482 = vunpack.c.l.b16 %v935
        %v1483 = vunpack.c.h.b16 %v935
        %v1484 = vunpack.c.l.b16 %v936
        %v1485 = vunpack.c.h.b16 %v936
        %v1486 = vunpack.c.l.b16 %v937
        %v1487 = vunpack.c.h.b16 %v937
        %v1488 = vunpack.c.l.b16 %v938
        %v1489 = vunpack.c.h.b16 %v938
        %v1490 = vunpack.c.l.b16 %v939
        %v1491 = vunpack.c.h.b16 %v939
        %v1492 = vunpack.c.l.b16 %v940
        %v1493 = vunpack.c.h.b16 %v940
        %v1494 = vunpack.c.l.b16 %v941
        %v1495 = vunpack.c.h.b16 %v941
        %v1496 = vunpack.c.l.b16 %v942
        %v1497 = vunpack.c.h.b16 %v942
        %v1498 = vunpack.c.l.b16 %v943
        %v1499 = vunpack.c.h.b16 %v943
        %v1500 = vunpack.c.l.b16 %v944
        %v1501 = vunpack.c.h.b16 %v944
        %v1502 = vunpack.c.l.b16 %v945
        %v1503 = vunpack.c.h.b16 %v945
        %v1504 = vunpack.c.l.b16 %v946
        %v1505 = vunpack.c.h.b16 %v946
        %v1506 = vunpack.c.l.b16 %v947
        %v1507 = vunpack.c.h.b16 %v947
        %v1508 = vunpack.c.l.b16 %v948
        %v1509 = vunpack.c.h.b16 %v948
        %v1510 = vunpack.c.l.b16 %v949
        %v1511 = vunpack.c.h.b16 %v949
        %v1512 = vunpack.c.l.b16 %v950
        %v1513 = vunpack.c.h.b16 %v950
        %v1514 = vunpack.c.l.b16 %v951
        %v1515 = vunpack.c.h.b16 %v951
        %v1516 = vunpack.c.l.b16 %v952
        %v1517 = vunpack.c.h.b16 %v952
        %v1518 = vunpack.c.l.b16 %v953
        %v1519 = vunpack.c.h.b16 %v953
        %v1520 = vunpack.c.l.b16 %v954
        %v1521 = vunpack.c.h.b16 %v954
        %v1522 = vunpack.c.l.b16 %v955
        %v1523 = vunpack.c.h.b16 %v955
        %v1524 = vunpack.c.l.b16 %v956
        %v1525 = vunpack.c.h.b16 %v956
        %v1526 = vunpack.c.l.b16 %v957
        %v1527 = vunpack.c.h.b16 %v957
        %v1528 = vunpack.c.l.b16 %v958
        %v1529 = vunpack.c.h.b16 %v958
        %v1530 = vunpack.c.l.b16 %v959
        %v1531 = vunpack.c.h.b16 %v959
        %v1532 = vunpack.c.l.b16 %v960
        %v1533 = vunpack.c.h.b16 %v960
        %v1534 = vunpack.c.l.b16 %v961
        %v1535 = vunpack.c.h.b16 %v961
        %v1536 = vunpack.c.l.b16 %v962
        %v1537 = vunpack.c.h.b16 %v962
        %v1538 = vunpack.c.l.b16 %v963
        %v1539 = vunpack.c.h.b16 %v963
        %v1540 = vpack.c.b16 %v1180, %v1156
        %v1541 = vpack.c.b16 %v1181, %v1157
        %v1542 = vpack.c.b16 %v1182, %v1158
        %v1543 = vpack.c.b16 %v1183, %v1159
        %v1544 = vpack.c.b16 %v1184, %v1160
        %v1545 = vpack.c.b16 %v1185, %v1161
        %v1546 = vpack.c.b16 %v1186, %v1162
        %v1547 = vpack.c.b16 %v1187, %v1163
        %v1548 = vpack.c.b16 %v1188, %v1164
        %v1549 = vpack.c.b16 %v1189, %v1165
        %v1550 = vpack.c.b16 %v1190, %v1166
        %v1551 = vpack.c.b16 %v1191, %v1167
        %v1552 = vpack.c.b16 %v1192, %v1168
        %v1553 = vpack.c.b16 %v1193, %v1169
        %v1554 = vpack.c.b16 %v1194, %v1170
        %v1555 = vpack.c.b16 %v1195, %v1171
        %v1556 = vpack.c.b16 %v1196, %v1172
        %v1557 = vpack.c.b16 %v1197, %v1173
        %v1558 = vpack.c.b16 %v1198, %v1174
        %v1559 = vpack.c.b16 %v1199, %v1175
        %v1560 = vpack.c.b16 %v1200, %v1176
        %v1561 = vpack.c.b16 %v1201, %v1177
        %v1562 = vpack.c.b16 %v1202, %v1178
        %v1563 = vpack.c.b16 %v1203, %v1179
        %v1564 = vpack.c.b16 %v1228, %v1204
        %v1565 = vpack.c.b16 %v1229, %v1205
        %v1566 = vpack.c.b16 %v1230, %v1206
        %v1567 = vpack.c.b16 %v1231, %v1207
        %v1568 = vpack.c.b16 %v1232, %v1208
        %v1569 = vpack.c.b16 %v1233, %v1209
        %v1570 = vpack.c.b16 %v1234, %v1210
        %v1571 = vpack.c.b16 %v1235, %v1211
        %v1572 = vpack.c.b16 %v1236, %v1212
        %v1573 = vpack.c.b16 %v1237, %v1213
        %v1574 = vpack.c.b16 %v1238, %v1214
        %v1575 = vpack.c.b16 %v1239, %v1215
        %v1576 = vpack.c.b16 %v1240, %v1216
        %v1577 = vpack.c.b16 %v1241, %v1217
        %v1578 = vpack.c.b16 %v1242, %v1218
        %v1579 = vpack.c.b16 %v1243, %v1219
        %v1580 = vpack.c.b16 %v1244, %v1220
        %v1581 = vpack.c.b16 %v1245, %v1221
        %v1582 = vpack.c.b16 %v1246, %v1222
        %v1583 = vpack.c.b16 %v1247, %v1223
        %v1584 = vpack.c.b16 %v1248, %v1224
        %v1585 = vpack.c.b16 %v1249, %v1225
        %v1586 = vpack.c.b16 %v1250, %v1226
        %v1587 = vpack.c.b16 %v1251, %v1227
        %v1588 = vpack.c.b16 %v1276, %v1252
        %v1589 = vpack.c.b16 %v1277, %v1253
        %v1590 = vpack.c.b16 %v1278, %v1254
        %v1591 = vpack.c.b16 %v1279, %v1255
        %v1592 = vpack.c.b16 %v1280, %v1256
        %v1593 = vpack.c.b16 %v1281, %v1257
        %v1594 = vpack.c.b16 %v1282, %v1258
        %v1595 = vpack.c.b16 %v1283, %v1259
        %v1596 = vpack.c.b16 %v1284, %v1260
        %v1597 = vpack.c.b16 %v1285, %v1261
        %v1598 = vpack.c.b16 %v1286, %v1262
        %v1599 = vpack.c.b16 %v1287, %v1263
        %v1600 = vpack.c.b16 %v1288, %v1264
        %v1601 = vpack.c.b16 %v1289, %v1265
        %v1602 = vpack.c.b16 %v1290, %v1266
        %v1603 = vpack.c.b16 %v1291, %v1267
        %v1604 = vpack.c.b16 %v1292, %v1268
        %v1605 = vpack.c.b16 %v1293, %v1269
        %v1606 = vpack.c.b16 %v1294, %v1270
        %v1607 = vpack.c.b16 %v1295, %v1271
        %v1608 = vpack.c.b16 %v1296, %v1272
        %v1609 = vpack.c.b16 %v1297, %v1273
        %v1610 = vpack.c.b16 %v1298, %v1274
        %v1611 = vpack.c.b16 %v1299, %v1275
        %v1612 = vpack.c.b16 %v1324, %v1300
        %v1613 = vpack.c.b16 %v1325, %v1301
        %v1614 = vpack.c.b16 %v1326, %v1302
        %v1615 = vpack.c.b16 %v1327, %v1303
        %v1616 = vpack.c.b16 %v1328, %v1304
        %v1617 = vpack.c.b16 %v1329, %v1305
        %v1618 = vpack.c.b16 %v1330, %v1306
        %v1619 = vpack.c.b16 %v1331, %v1307
        %v1620 = vpack.c.b16 %v1332, %v1308
        %v1621 = vpack.c.b16 %v1333, %v1309
        %v1622 = vpack.c.b16 %v1334, %v1310
        %v1623 = vpack.c.b16 %v1335, %v1311
        %v1624 = vpack.c.b16 %v1336, %v1312
        %v1625 = vpack.c.b16 %v1337, %v1313
        %v1626 = vpack.c.b16 %v1338, %v1314
        %v1627 = vpack.c.b16 %v1339, %v1315
        %v1628 = vpack.c.b16 %v1340, %v1316
        %v1629 = vpack.c.b16 %v1341, %v1317
        %v1630 = vpack.c.b16 %v1342, %v1318
        %v1631 = vpack.c.b16 %v1343, %v1319
        %v1632 = vpack.c.b16 %v1344, %v1320
        %v1633 = vpack.c.b16 %v1345, %v1321
        %v1634 = vpack.c.b16 %v1346, %v1322
        %v1635 = vpack.c.b16 %v1347, %v1323
        %v1636 = vpack.c.b16 %v1372, %v1348
        %v1637 = vpack.c.b16 %v1373, %v1349
        %v1638 = vpack.c.b16 %v1374, %v1350
        %v1639 = vpack.c.b16 %v1375, %v1351
        %v1640 = vpack.c.b16 %v1376, %v1352
        %v1641 = vpack.c.b16 %v1377, %v1353
        %v1642 = vpack.c.b16 %v1378, %v1354
        %v1643 = vpack.c.b16 %v1379, %v1355
        %v1644 = vpack.c.b16 %v1380, %v1356
        %v1645 = vpack.c.b16 %v1381, %v1357
        %v1646 = vpack.c.b16 %v1382, %v1358
        %v1647 = vpack.c.b16 %v1383, %v1359
        %v1648 = vpack.c.b16 %v1384, %v1360
        %v1649 = vpack.c.b16 %v1385, %v1361
        %v1650 = vpack.c.b16 %v1386, %v1362
        %v1651 = vpack.c.b16 %v1387, %v1363
        %v1652 = vpack.c.b16 %v1388, %v1364
        %v1653 = vpack.c.b16 %v1389, %v1365
        %v1654 = vpack.c.b16 %v1390, %v1366
        %v1655 = vpack.c.b16 %v1391, %v1367
        %v1656 = vpack.c.b16 %v1392, %v1368
        %v1657 = vpack.c.b16 %v1393, %v1369
        %v1658 = vpack.c.b16 %v1394, %v1370
        %v1659 = vpack.c.b16 %v1395, %v1371
        %v1660 = vpack.c.b16 %v1420, %v1396
        %v1661 = vpack.c.b16 %v1421, %v1397
        %v1662 = vpack.c.b16 %v1422, %v1398
        %v1663 = vpack.c.b16 %v1423, %v1399
        %v1664 = vpack.c.b16 %v1424, %v1400
        %v1665 = vpack.c.b16 %v1425, %v1401
        %v1666 = vpack.c.b16 %v1426, %v1402
        %v1667 = vpack.c.b16 %v1427, %v1403
        %v1668 = vpack.c.b16 %v1428, %v1404
        %v1669 = vpack.c.b16 %v1429, %v1405
        %v1670 = vpack.c.b16 %v1430, %v1406
        %v1671 = vpack.c.b16 %v1431, %v1407
        %v1672 = vpack.c.b16 %v1432, %v1408
        %v1673 = vpack.c.b16 %v1433, %v1409
        %v1674 = vpack.c.b16 %v1434, %v1410
        %v1675 = vpack.c.b16 %v1435, %v1411
        %v1676 = vpack.c.b16 %v1436, %v1412
        %v1677 = vpack.c.b16 %v1437, %v1413
        %v1678 = vpack.c.b16 %v1438, %v1414
        %v1679 = vpack.c.b16 %v1439, %v1415
        %v1680 = vpack.c.b16 %v1440, %v1416
        %v1681 = vpack.c.b16 %v1441, %v1417
        %v1682 = vpack.c.b16 %v1442, %v1418
        %v1683 = vpack.c.b16 %v1443, %v1419
        %v1684 = vpack.c.b16 %v1468, %v1444
        %v1685 = vpack.c.b16 %v1469, %v1445
        %v1686 = vpack.c.b16 %v1470, %v1446
        %v1687 = vpack.c.b16 %v1471, %v1447
        %v1688 = vpack.c.b16 %v1472, %v1448
        %v1689 = vpack.c.b16 %v1473, %v1449
        %v1690 = vpack.c.b16 %v1474, %v1450
        %v1691 = vpack.c.b16 %v1475, %v1451
        %v1692 = vpack.c.b16 %v1476, %v1452
        %v1693 = vpack.c.b16 %v1477, %v1453
        %v1694 = vpack.c.b16 %v1478, %v1454
        %v1695 = vpack.c.b16 %v1479, %v1455
        %v1696 = vpack.c.b16 %v1480, %v1456
        %v1697 = vpack.c.b16 %v1481, %v1457
        %v1698 = vpack.c.b16 %v1482, %v1458
        %v1699 = vpack.c.b16 %v1483, %v1459
        %v1700 = vpack.c.b16 %v1484, %v1460
        %v1701 = vpack.c.b16 %v1485, %v1461
        %v1702 = vpack.c.b16 %v1486, %v1462
        %v1703 = vpack.c.b16 %v1487, %v1463
        %v1704 = vpack.c.b16 %v1488, %v1464
        %v1705 = vpack.c.b16 %v1489, %v1465
        %v1706 = vpack.c.b16 %v1490, %v1466
        %v1707 = vpack.c.b16 %v1491, %v1467
        %v1708 = vpack.c.b16 %v1516, %v1492
        %v1709 = vpack.c.b16 %v1517, %v1493
        %v1710 = vpack.c.b16 %v1518, %v1494
        %v1711 = vpack.c.b16 %v1519, %v1495
        %v1712 = vpack.c.b16 %v1520, %v1496
        %v1713 = vpack.c.b16 %v1521, %v1497
        %v1714 = vpack.c.b16 %v1522, %v1498
        %v1715 = vpack.c.b16 %v1523, %v1499
        %v1716 = vpack.c.b16 %v1524, %v1500
        %v1717 = vpack.c.b16 %v1525, %v1501
        %v1718 = vpack.c.b16 %v1526, %v1502
        %v1719 = vpack.c.b16 %v1527, %v1503
        %v1720 = vpack.c.b16 %v1528, %v1504
        %v1721 = vpack.c.b16 %v1529, %v1505
        %v1722 = vpack.c.b16 %v1530, %v1506
        %v1723 = vpack.c.b16 %v1531, %v1507
        %v1724 = vpack.c.b16 %v1532, %v1508
        %v1725 = vpack.c.b16 %v1533, %v1509
        %v1726 = vpack.c.b16 %v1534, %v1510
        %v1727 = vpack.c.b16 %v1535, %v1511
        %v1728 = vpack.c.b16 %v1536, %v1512
        %v1729 = vpack.c.b16 %v1537, %v1513
        %v1730 = vpack.c.b16 %v1538, %v1514
        %v1731 = vpack.c.b16 %v1539, %v1515
        %1924 = vmatpush.bf16.msra.mxu0 %v1708
        %1925 = vmatpush.bf16.msra.mxu0 %v1684
        %1926 = vmatpush.bf16.msra.mxu0 %v1660
        %1927 = vmatpush.bf16.msra.mxu0 %v1636
        %1928 = vmatpush.bf16.msra.mxu0 %v1612
        %1929 = vmatpush.bf16.msra.mxu0 %v1588
        %1930 = vmatpush.bf16.msra.mxu0 %v1564
        %1931 = vmatpush.bf16.msra.mxu0 %v1540
        %1932 = vmatmul.bf16.gmra.mxu0 %v771
        %v1933 = vpop.f32.mrf.mxu0
        %v1934 = vadd.f32 0.0, %v1933
        %v1935 = vpop.f32.mrf.mxu0
        %1936 = vdwg.mxu0
        %1937 = vmatpush.bf16.msra.mxu0 %v1709
        %1938 = vmatpush.bf16.msra.mxu0 %v1685
        %1939 = vmatpush.bf16.msra.mxu0 %v1661
        %1940 = vmatpush.bf16.msra.mxu0 %v1637
        %1941 = vmatpush.bf16.msra.mxu0 %v1613
        %1942 = vmatpush.bf16.msra.mxu0 %v1589
        %1943 = vmatpush.bf16.msra.mxu0 %v1565
        %1944 = vmatpush.bf16.msra.mxu0 %v1541
        %1945 = vmatmul.bf16.gmra.mxu0 %v771
        %v1946 = vpop.f32.mrf.mxu0
        %v1947 = vadd.f32 0.0, %v1946
        %v1948 = vpop.f32.mrf.mxu0
        %1949 = vdwg.mxu0
        %1950 = vmatpush.bf16.msra.mxu0 %v1710
        %1951 = vmatpush.bf16.msra.mxu0 %v1686
        %1952 = vmatpush.bf16.msra.mxu0 %v1662
        %1953 = vmatpush.bf16.msra.mxu0 %v1638
        %1954 = vmatpush.bf16.msra.mxu0 %v1614
        %1955 = vmatpush.bf16.msra.mxu0 %v1590
        %1956 = vmatpush.bf16.msra.mxu0 %v1566
        %1957 = vmatpush.bf16.msra.mxu0 %v1542
        %1958 = vmatmul.bf16.gmra.mxu0 %v771
        %v1959 = vpop.f32.mrf.mxu0
        %v1960 = vadd.f32 0.0, %v1959
        %v1961 = vpop.f32.mrf.mxu0
        %1962 = vdwg.mxu0
        %1963 = vmatpush.bf16.msra.mxu0 %v1711
        %1964 = vmatpush.bf16.msra.mxu0 %v1687
        %1965 = vmatpush.bf16.msra.mxu0 %v1663
        %1966 = vmatpush.bf16.msra.mxu0 %v1639
        %1967 = vmatpush.bf16.msra.mxu0 %v1615
        %1968 = vmatpush.bf16.msra.mxu0 %v1591
        %1969 = vmatpush.bf16.msra.mxu0 %v1567
        %1970 = vmatpush.bf16.msra.mxu0 %v1543
        %1971 = vmatmul.bf16.gmra.mxu0 %v771
        %v1972 = vpop.f32.mrf.mxu0
        %v1973 = vadd.f32 0.0, %v1972
        %v1974 = vpop.f32.mrf.mxu0
        %1975 = vdwg.mxu0
        %1976 = vmatpush.bf16.msra.mxu0 %v1712
        %1977 = vmatpush.bf16.msra.mxu0 %v1688
        %1978 = vmatpush.bf16.msra.mxu0 %v1664
        %1979 = vmatpush.bf16.msra.mxu0 %v1640
        %1980 = vmatpush.bf16.msra.mxu0 %v1616
        %1981 = vmatpush.bf16.msra.mxu0 %v1592
        %1982 = vmatpush.bf16.msra.mxu0 %v1568
        %1983 = vmatpush.bf16.msra.mxu0 %v1544
        %1984 = vmatmul.bf16.gmra.mxu0 %v771
        %v1985 = vpop.f32.mrf.mxu0
        %v1986 = vadd.f32 0.0, %v1985
        %v1987 = vpop.f32.mrf.mxu0
        %1988 = vdwg.mxu0
        %1989 = vmatpush.bf16.msra.mxu0 %v1713
        %1990 = vmatpush.bf16.msra.mxu0 %v1689
        %1991 = vmatpush.bf16.msra.mxu0 %v1665
        %1992 = vmatpush.bf16.msra.mxu0 %v1641
        %1993 = vmatpush.bf16.msra.mxu0 %v1617
        %1994 = vmatpush.bf16.msra.mxu0 %v1593
        %1995 = vmatpush.bf16.msra.mxu0 %v1569
        %1996 = vmatpush.bf16.msra.mxu0 %v1545
        %1997 = vmatmul.bf16.gmra.mxu0 %v771
        %v1998 = vpop.f32.mrf.mxu0
        %v1999 = vadd.f32 0.0, %v1998
        %v2000 = vpop.f32.mrf.mxu0
        %2001 = vdwg.mxu0
        %2002 = vmatpush.bf16.msra.mxu0 %v1714
        %2003 = vmatpush.bf16.msra.mxu0 %v1690
        %2004 = vmatpush.bf16.msra.mxu0 %v1666
        %2005 = vmatpush.bf16.msra.mxu0 %v1642
        %2006 = vmatpush.bf16.msra.mxu0 %v1618
        %2007 = vmatpush.bf16.msra.mxu0 %v1594
        %2008 = vmatpush.bf16.msra.mxu0 %v1570
        %2009 = vmatpush.bf16.msra.mxu0 %v1546
        %2010 = vmatmul.bf16.gmra.mxu0 %v771
        %v2011 = vpop.f32.mrf.mxu0
        %v2012 = vadd.f32 0.0, %v2011
        %v2013 = vpop.f32.mrf.mxu0
        %2014 = vdwg.mxu0
        %2015 = vmatpush.bf16.msra.mxu0 %v1715
        %2016 = vmatpush.bf16.msra.mxu0 %v1691
        %2017 = vmatpush.bf16.msra.mxu0 %v1667
        %2018 = vmatpush.bf16.msra.mxu0 %v1643
        %2019 = vmatpush.bf16.msra.mxu0 %v1619
        %2020 = vmatpush.bf16.msra.mxu0 %v1595
        %2021 = vmatpush.bf16.msra.mxu0 %v1571
        %2022 = vmatpush.bf16.msra.mxu0 %v1547
        %2023 = vmatmul.bf16.gmra.mxu0 %v771
        %v2024 = vpop.f32.mrf.mxu0
        %v2025 = vadd.f32 0.0, %v2024
        %v2026 = vpop.f32.mrf.mxu0
        %2027 = vdwg.mxu0
        %2028 = vmatpush.bf16.msra.mxu0 %v1716
        %2029 = vmatpush.bf16.msra.mxu0 %v1692
        %2030 = vmatpush.bf16.msra.mxu0 %v1668
        %2031 = vmatpush.bf16.msra.mxu0 %v1644
        %2032 = vmatpush.bf16.msra.mxu0 %v1620
        %2033 = vmatpush.bf16.msra.mxu0 %v1596
        %2034 = vmatpush.bf16.msra.mxu0 %v1572
        %2035 = vmatpush.bf16.msra.mxu0 %v1548
        %2036 = vmatmul.bf16.gmra.mxu0 %v771
        %v2037 = vpop.f32.mrf.mxu0
        %v2038 = vadd.f32 0.0, %v2037
        %v2039 = vpop.f32.mrf.mxu0
        %2040 = vdwg.mxu0
        %2041 = vmatpush.bf16.msra.mxu0 %v1717
        %2042 = vmatpush.bf16.msra.mxu0 %v1693
        %2043 = vmatpush.bf16.msra.mxu0 %v1669
        %2044 = vmatpush.bf16.msra.mxu0 %v1645
        %2045 = vmatpush.bf16.msra.mxu0 %v1621
        %2046 = vmatpush.bf16.msra.mxu0 %v1597
        %2047 = vmatpush.bf16.msra.mxu0 %v1573
        %2048 = vmatpush.bf16.msra.mxu0 %v1549
        %2049 = vmatmul.bf16.gmra.mxu0 %v771
        %v2050 = vpop.f32.mrf.mxu0
        %v2051 = vadd.f32 0.0, %v2050
        %v2052 = vpop.f32.mrf.mxu0
        %2053 = vdwg.mxu0
        %2054 = vmatpush.bf16.msra.mxu0 %v1718
        %2055 = vmatpush.bf16.msra.mxu0 %v1694
        %2056 = vmatpush.bf16.msra.mxu0 %v1670
        %2057 = vmatpush.bf16.msra.mxu0 %v1646
        %2058 = vmatpush.bf16.msra.mxu0 %v1622
        %2059 = vmatpush.bf16.msra.mxu0 %v1598
        %2060 = vmatpush.bf16.msra.mxu0 %v1574
        %2061 = vmatpush.bf16.msra.mxu0 %v1550
        %2062 = vmatmul.bf16.gmra.mxu0 %v771
        %v2063 = vpop.f32.mrf.mxu0
        %v2064 = vadd.f32 0.0, %v2063
        %v2065 = vpop.f32.mrf.mxu0
        %2066 = vdwg.mxu0
        %2067 = vmatpush.bf16.msra.mxu0 %v1719
        %2068 = vmatpush.bf16.msra.mxu0 %v1695
        %2069 = vmatpush.bf16.msra.mxu0 %v1671
        %2070 = vmatpush.bf16.msra.mxu0 %v1647
        %2071 = vmatpush.bf16.msra.mxu0 %v1623
        %2072 = vmatpush.bf16.msra.mxu0 %v1599
        %2073 = vmatpush.bf16.msra.mxu0 %v1575
        %2074 = vmatpush.bf16.msra.mxu0 %v1551
        %2075 = vmatmul.bf16.gmra.mxu0 %v771
        %v2076 = vpop.f32.mrf.mxu0
        %v2077 = vadd.f32 0.0, %v2076
        %v2078 = vpop.f32.mrf.mxu0
        %2079 = vdwg.mxu0
        %2080 = vmatpush.bf16.msra.mxu0 %v1720
        %2081 = vmatpush.bf16.msra.mxu0 %v1696
        %2082 = vmatpush.bf16.msra.mxu0 %v1672
        %2083 = vmatpush.bf16.msra.mxu0 %v1648
        %2084 = vmatpush.bf16.msra.mxu0 %v1624
        %2085 = vmatpush.bf16.msra.mxu0 %v1600
        %2086 = vmatpush.bf16.msra.mxu0 %v1576
        %2087 = vmatpush.bf16.msra.mxu0 %v1552
        %2088 = vmatmul.bf16.gmra.mxu0 %v771
        %v2089 = vpop.f32.mrf.mxu0
        %v2090 = vadd.f32 0.0, %v2089
        %v2091 = vpop.f32.mrf.mxu0
        %2092 = vdwg.mxu0
        %2093 = vmatpush.bf16.msra.mxu0 %v1721
        %2094 = vmatpush.bf16.msra.mxu0 %v1697
        %2095 = vmatpush.bf16.msra.mxu0 %v1673
        %2096 = vmatpush.bf16.msra.mxu0 %v1649
        %2097 = vmatpush.bf16.msra.mxu0 %v1625
        %2098 = vmatpush.bf16.msra.mxu0 %v1601
        %2099 = vmatpush.bf16.msra.mxu0 %v1577
        %2100 = vmatpush.bf16.msra.mxu0 %v1553
        %2101 = vmatmul.bf16.gmra.mxu0 %v771
        %v2102 = vpop.f32.mrf.mxu0
        %v2103 = vadd.f32 0.0, %v2102
        %v2104 = vpop.f32.mrf.mxu0
        %2105 = vdwg.mxu0
        %2106 = vmatpush.bf16.msra.mxu0 %v1722
        %2107 = vmatpush.bf16.msra.mxu0 %v1698
        %2108 = vmatpush.bf16.msra.mxu0 %v1674
        %2109 = vmatpush.bf16.msra.mxu0 %v1650
        %2110 = vmatpush.bf16.msra.mxu0 %v1626
        %2111 = vmatpush.bf16.msra.mxu0 %v1602
        %2112 = vmatpush.bf16.msra.mxu0 %v1578
        %2113 = vmatpush.bf16.msra.mxu0 %v1554
        %2114 = vmatmul.bf16.gmra.mxu0 %v771
        %v2115 = vpop.f32.mrf.mxu0
        %v2116 = vadd.f32 0.0, %v2115
        %v2117 = vpop.f32.mrf.mxu0
        %2118 = vdwg.mxu0
        %2119 = vmatpush.bf16.msra.mxu0 %v1723
        %2120 = vmatpush.bf16.msra.mxu0 %v1699
        %2121 = vmatpush.bf16.msra.mxu0 %v1675
        %2122 = vmatpush.bf16.msra.mxu0 %v1651
        %2123 = vmatpush.bf16.msra.mxu0 %v1627
        %2124 = vmatpush.bf16.msra.mxu0 %v1603
        %2125 = vmatpush.bf16.msra.mxu0 %v1579
        %2126 = vmatpush.bf16.msra.mxu0 %v1555
        %2127 = vmatmul.bf16.gmra.mxu0 %v771
        %v2128 = vpop.f32.mrf.mxu0
        %v2129 = vadd.f32 0.0, %v2128
        %v2130 = vpop.f32.mrf.mxu0
        %2131 = vdwg.mxu0
        %2132 = vmatpush.bf16.msra.mxu0 %v1724
        %2133 = vmatpush.bf16.msra.mxu0 %v1700
        %2134 = vmatpush.bf16.msra.mxu0 %v1676
        %2135 = vmatpush.bf16.msra.mxu0 %v1652
        %2136 = vmatpush.bf16.msra.mxu0 %v1628
        %2137 = vmatpush.bf16.msra.mxu0 %v1604
        %2138 = vmatpush.bf16.msra.mxu0 %v1580
        %2139 = vmatpush.bf16.msra.mxu0 %v1556
        %2140 = vmatmul.bf16.gmra.mxu0 %v771
        %v2141 = vpop.f32.mrf.mxu0
        %v2142 = vadd.f32 0.0, %v2141
        %v2143 = vpop.f32.mrf.mxu0
        %2144 = vdwg.mxu0
        %2145 = vmatpush.bf16.msra.mxu0 %v1725
        %2146 = vmatpush.bf16.msra.mxu0 %v1701
        %2147 = vmatpush.bf16.msra.mxu0 %v1677
        %2148 = vmatpush.bf16.msra.mxu0 %v1653
        %2149 = vmatpush.bf16.msra.mxu0 %v1629
        %2150 = vmatpush.bf16.msra.mxu0 %v1605
        %2151 = vmatpush.bf16.msra.mxu0 %v1581
        %2152 = vmatpush.bf16.msra.mxu0 %v1557
        %2153 = vmatmul.bf16.gmra.mxu0 %v771
        %v2154 = vpop.f32.mrf.mxu0
        %v2155 = vadd.f32 0.0, %v2154
        %v2156 = vpop.f32.mrf.mxu0
        %2157 = vdwg.mxu0
        %2158 = vmatpush.bf16.msra.mxu0 %v1726
        %2159 = vmatpush.bf16.msra.mxu0 %v1702
        %2160 = vmatpush.bf16.msra.mxu0 %v1678
        %2161 = vmatpush.bf16.msra.mxu0 %v1654
        %2162 = vmatpush.bf16.msra.mxu0 %v1630
        %2163 = vmatpush.bf16.msra.mxu0 %v1606
        %2164 = vmatpush.bf16.msra.mxu0 %v1582
        %2165 = vmatpush.bf16.msra.mxu0 %v1558
        %2166 = vmatmul.bf16.gmra.mxu0 %v771
        %v2167 = vpop.f32.mrf.mxu0
        %v2168 = vadd.f32 0.0, %v2167
        %v2169 = vpop.f32.mrf.mxu0
        %2170 = vdwg.mxu0
        %2171 = vmatpush.bf16.msra.mxu0 %v1727
        %2172 = vmatpush.bf16.msra.mxu0 %v1703
        %2173 = vmatpush.bf16.msra.mxu0 %v1679
        %2174 = vmatpush.bf16.msra.mxu0 %v1655
        %2175 = vmatpush.bf16.msra.mxu0 %v1631
        %2176 = vmatpush.bf16.msra.mxu0 %v1607
        %2177 = vmatpush.bf16.msra.mxu0 %v1583
        %2178 = vmatpush.bf16.msra.mxu0 %v1559
        %2179 = vmatmul.bf16.gmra.mxu0 %v771
        %v2180 = vpop.f32.mrf.mxu0
        %v2181 = vadd.f32 0.0, %v2180
        %v2182 = vpop.f32.mrf.mxu0
        %2183 = vdwg.mxu0
        %2184 = vmatpush.bf16.msra.mxu0 %v1728
        %2185 = vmatpush.bf16.msra.mxu0 %v1704
        %2186 = vmatpush.bf16.msra.mxu0 %v1680
        %2187 = vmatpush.bf16.msra.mxu0 %v1656
        %2188 = vmatpush.bf16.msra.mxu0 %v1632
        %2189 = vmatpush.bf16.msra.mxu0 %v1608
        %2190 = vmatpush.bf16.msra.mxu0 %v1584
        %2191 = vmatpush.bf16.msra.mxu0 %v1560
        %2192 = vmatmul.bf16.gmra.mxu0 %v771
        %v2193 = vpop.f32.mrf.mxu0
        %v2194 = vadd.f32 0.0, %v2193
        %v2195 = vpop.f32.mrf.mxu0
        %2196 = vdwg.mxu0
        %2197 = vmatpush.bf16.msra.mxu0 %v1729
        %2198 = vmatpush.bf16.msra.mxu0 %v1705
        %2199 = vmatpush.bf16.msra.mxu0 %v1681
        %2200 = vmatpush.bf16.msra.mxu0 %v1657
        %2201 = vmatpush.bf16.msra.mxu0 %v1633
        %2202 = vmatpush.bf16.msra.mxu0 %v1609
        %2203 = vmatpush.bf16.msra.mxu0 %v1585
        %2204 = vmatpush.bf16.msra.mxu0 %v1561
        %2205 = vmatmul.bf16.gmra.mxu0 %v771
        %v2206 = vpop.f32.mrf.mxu0
        %v2207 = vadd.f32 0.0, %v2206
        %v2208 = vpop.f32.mrf.mxu0
        %2209 = vdwg.mxu0
        %2210 = vmatpush.bf16.msra.mxu0 %v1730
        %2211 = vmatpush.bf16.msra.mxu0 %v1706
        %2212 = vmatpush.bf16.msra.mxu0 %v1682
        %2213 = vmatpush.bf16.msra.mxu0 %v1658
        %2214 = vmatpush.bf16.msra.mxu0 %v1634
        %2215 = vmatpush.bf16.msra.mxu0 %v1610
        %2216 = vmatpush.bf16.msra.mxu0 %v1586
        %2217 = vmatpush.bf16.msra.mxu0 %v1562
        %2218 = vmatmul.bf16.gmra.mxu0 %v771
        %v2219 = vpop.f32.mrf.mxu0
        %v2220 = vadd.f32 0.0, %v2219
        %v2221 = vpop.f32.mrf.mxu0
        %2222 = vdwg.mxu0
        %2223 = vmatpush.bf16.msra.mxu0 %v1731
        %2224 = vmatpush.bf16.msra.mxu0 %v1707
        %2225 = vmatpush.bf16.msra.mxu0 %v1683
        %2226 = vmatpush.bf16.msra.mxu0 %v1659
        %2227 = vmatpush.bf16.msra.mxu0 %v1635
        %2228 = vmatpush.bf16.msra.mxu0 %v1611
        %2229 = vmatpush.bf16.msra.mxu0 %v1587
        %2230 = vmatpush.bf16.msra.mxu0 %v1563
        %2231 = vmatmul.bf16.gmra.mxu0 %v771
        %v2232 = vpop.f32.mrf.mxu0
        %v2233 = vadd.f32 0.0, %v2232
        %v2234 = vpop.f32.mrf.mxu0
        %2235 = vdwg.mxu0
        %v2236 = vld [vmem:[#allocation9] sm:$0xff]
        %v2237 = vld [vmem:[#allocation9 + $0x8] sm:$0xff]
        %v2238 = vld [vmem:[#allocation9 + $0x10] sm:$0xff]
        %v2239 = vld [vmem:[#allocation9 + $0x18] sm:$0xff]
        %v2240 = vld [vmem:[#allocation9 + $0x20] sm:$0xff]
        %v2241 = vld [vmem:[#allocation9 + $0x28] sm:$0xff]
        %v2242 = vld [vmem:[#allocation9 + $0x30] sm:$0xff]
        %v2243 = vld [vmem:[#allocation9 + $0x38] sm:$0xff]
        %v2244 = vld [vmem:[#allocation11] sm:$0xff]
        %v2245 = vld [vmem:[#allocation11 + $0x8] sm:$0xff]
        %v2246 = vld [vmem:[#allocation11 + $0x10] sm:$0xff]
        %v2247 = vld [vmem:[#allocation11 + $0x18] sm:$0xff]
        %v2248 = vld [vmem:[#allocation11 + $0x20] sm:$0xff]
        %v2249 = vld [vmem:[#allocation11 + $0x28] sm:$0xff]
        %v2250 = vld [vmem:[#allocation11 + $0x30] sm:$0xff]
        %v2251 = vld [vmem:[#allocation11 + $0x38] sm:$0xff]
        %v2252 = vadd.s32 %v693, 128
        %v2253 = vadd.s32 %v693, 256
        %v2254 = vadd.s32 %v693, 384
        %v2255 = vadd.s32 %v693, 512
        %v2256 = vadd.s32 %v693, 640
        %v2257 = vadd.s32 %v693, 768
        %v2258 = vadd.s32 %v693, 896
        %v2259 = vand.u32 %v693, 1
        %v2260 = vand.u32 %v2252, 1
        %v2261 = vand.u32 %v2253, 1
        %v2262 = vand.u32 %v2254, 1
        %v2263 = vand.u32 %v2255, 1
        %v2264 = vand.u32 %v2256, 1
        %v2265 = vand.u32 %v2257, 1
        %v2266 = vand.u32 %v2258, 1
        %vm2267 = vcmp.eq.s32.totalorder %v2259, 0
        %vm2268 = vcmp.eq.s32.totalorder %v2260, 0
        %vm2269 = vcmp.eq.s32.totalorder %v2261, 0
        %vm2270 = vcmp.eq.s32.totalorder %v2262, 0
        %vm2271 = vcmp.eq.s32.totalorder %v2263, 0
        %vm2272 = vcmp.eq.s32.totalorder %v2264, 0
        %vm2273 = vcmp.eq.s32.totalorder %v2265, 0
        %vm2274 = vcmp.eq.s32.totalorder %v2266, 0
        %v2275 = vmul.f32 %v1934, %v2236
        %v2276 = vmul.f32 %v1947, %v2237
        %v2277 = vmul.f32 %v1960, %v2238
        %v2278 = vmul.f32 %v1973, %v2239
        %v2279 = vmul.f32 %v1986, %v2240
        %v2280 = vmul.f32 %v1999, %v2241
        %v2281 = vmul.f32 %v2012, %v2242
        %v2282 = vmul.f32 %v2025, %v2243
        %2283 = vrot.lane.b32.xlu0 %v1934, 127
        %v2284 = vpop.permute.xlu0 %2283
        %2285 = vrot.lane.b32.xlu0 %v1947, 127
        %v2286 = vpop.permute.xlu0 %2285
        %2287 = vrot.lane.b32.xlu0 %v1960, 127
        %v2288 = vpop.permute.xlu0 %2287
        %2289 = vrot.lane.b32.xlu0 %v1973, 127
        %v2290 = vpop.permute.xlu0 %2289
        %2291 = vrot.lane.b32.xlu0 %v1986, 127
        %v2292 = vpop.permute.xlu0 %2291
        %2293 = vrot.lane.b32.xlu0 %v1999, 127
        %v2294 = vpop.permute.xlu0 %2293
        %2295 = vrot.lane.b32.xlu0 %v2012, 127
        %v2296 = vpop.permute.xlu0 %2295
        %2297 = vrot.lane.b32.xlu0 %v2025, 127
        %v2298 = vpop.permute.xlu0 %2297
        %vm2299 = vcmp.lt.s32.totalorder %v693, 127
        %v2300 = vsel %vm2299, %v2296, %v2298
        %v2301 = vsel %vm2299, %v2294, %v2296
        %v2302 = vsel %vm2299, %v2292, %v2294
        %v2303 = vsel %vm2299, %v2290, %v2292
        %v2304 = vsel %vm2299, %v2288, %v2290
        %v2305 = vsel %vm2299, %v2286, %v2288
        %v2306 = vsel %vm2299, %v2284, %v2286
        %v2307 = vsel %vm2299, %v2298, %v2284
        %2308 = vrot.lane.b32.xlu0 %v1934, 1
        %v2309 = vpop.permute.xlu0 %2308
        %2310 = vrot.lane.b32.xlu0 %v1947, 1
        %v2311 = vpop.permute.xlu0 %2310
        %2312 = vrot.lane.b32.xlu0 %v1960, 1
        %v2313 = vpop.permute.xlu0 %2312
        %2314 = vrot.lane.b32.xlu0 %v1973, 1
        %v2315 = vpop.permute.xlu0 %2314
        %2316 = vrot.lane.b32.xlu0 %v1986, 1
        %v2317 = vpop.permute.xlu0 %2316
        %2318 = vrot.lane.b32.xlu0 %v1999, 1
        %v2319 = vpop.permute.xlu0 %2318
        %2320 = vrot.lane.b32.xlu0 %v2012, 1
        %v2321 = vpop.permute.xlu0 %2320
        %2322 = vrot.lane.b32.xlu0 %v2025, 1
        %v2323 = vpop.permute.xlu0 %2322
        %vm2324 = vcmp.lt.s32.totalorder %v693, 1
        %v2325 = vsel %vm2324, %v2321, %v2323
        %v2326 = vsel %vm2324, %v2319, %v2321
        %v2327 = vsel %vm2324, %v2317, %v2319
        %v2328 = vsel %vm2324, %v2315, %v2317
        %v2329 = vsel %vm2324, %v2313, %v2315
        %v2330 = vsel %vm2324, %v2311, %v2313
        %v2331 = vsel %vm2324, %v2309, %v2311
        %v2332 = vsel %vm2324, %v2323, %v2309
        %v2333 = vsel %vm2267, %v2306, %v2332
        %v2334 = vsel %vm2268, %v2305, %v2331
        %v2335 = vsel %vm2269, %v2304, %v2330
        %v2336 = vsel %vm2270, %v2303, %v2329
        %v2337 = vsel %vm2271, %v2302, %v2328
        %v2338 = vsel %vm2272, %v2301, %v2327
        %v2339 = vsel %vm2273, %v2300, %v2326
        %v2340 = vsel %vm2274, %v2307, %v2325
        %v2341 = vmul.f32 %v2333, %v2244
        %v2342 = vmul.f32 %v2334, %v2245
        %v2343 = vmul.f32 %v2335, %v2246
        %v2344 = vmul.f32 %v2336, %v2247
        %v2345 = vmul.f32 %v2337, %v2248
        %v2346 = vmul.f32 %v2338, %v2249
        %v2347 = vmul.f32 %v2339, %v2250
        %v2348 = vmul.f32 %v2340, %v2251
        %v2349 = vadd.f32 %v2275, %v2341
        %v2350 = vadd.f32 %v2276, %v2342
        %v2351 = vadd.f32 %v2277, %v2343
        %v2352 = vadd.f32 %v2278, %v2344
        %v2353 = vadd.f32 %v2279, %v2345
        %v2354 = vadd.f32 %v2280, %v2346
        %v2355 = vadd.f32 %v2281, %v2347
        %v2356 = vadd.f32 %v2282, %v2348
        %v2357 = vmul.f32 %v2038, %v2236
        %v2358 = vmul.f32 %v2051, %v2237
        %v2359 = vmul.f32 %v2064, %v2238
        %v2360 = vmul.f32 %v2077, %v2239
        %v2361 = vmul.f32 %v2090, %v2240
        %v2362 = vmul.f32 %v2103, %v2241
        %v2363 = vmul.f32 %v2116, %v2242
        %v2364 = vmul.f32 %v2129, %v2243
        %2365 = vrot.lane.b32.xlu0 %v2038, 127
        %v2366 = vpop.permute.xlu0 %2365
        %2367 = vrot.lane.b32.xlu0 %v2051, 127
        %v2368 = vpop.permute.xlu0 %2367
        %2369 = vrot.lane.b32.xlu0 %v2064, 127
        %v2370 = vpop.permute.xlu0 %2369
        %2371 = vrot.lane.b32.xlu0 %v2077, 127
        %v2372 = vpop.permute.xlu0 %2371
        %2373 = vrot.lane.b32.xlu0 %v2090, 127
        %v2374 = vpop.permute.xlu0 %2373
        %2375 = vrot.lane.b32.xlu0 %v2103, 127
        %v2376 = vpop.permute.xlu0 %2375
        %2377 = vrot.lane.b32.xlu0 %v2116, 127
        %v2378 = vpop.permute.xlu0 %2377
        %2379 = vrot.lane.b32.xlu0 %v2129, 127
        %v2380 = vpop.permute.xlu0 %2379
        %v2381 = vsel %vm2299, %v2378, %v2380
        %v2382 = vsel %vm2299, %v2376, %v2378
        %v2383 = vsel %vm2299, %v2374, %v2376
        %v2384 = vsel %vm2299, %v2372, %v2374
        %v2385 = vsel %vm2299, %v2370, %v2372
        %v2386 = vsel %vm2299, %v2368, %v2370
        %v2387 = vsel %vm2299, %v2366, %v2368
        %v2388 = vsel %vm2299, %v2380, %v2366
        %2389 = vrot.lane.b32.xlu0 %v2038, 1
        %v2390 = vpop.permute.xlu0 %2389
        %2391 = vrot.lane.b32.xlu0 %v2051, 1
        %v2392 = vpop.permute.xlu0 %2391
        %2393 = vrot.lane.b32.xlu0 %v2064, 1
        %v2394 = vpop.permute.xlu0 %2393
        %2395 = vrot.lane.b32.xlu0 %v2077, 1
        %v2396 = vpop.permute.xlu0 %2395
        %2397 = vrot.lane.b32.xlu0 %v2090, 1
        %v2398 = vpop.permute.xlu0 %2397
        %2399 = vrot.lane.b32.xlu0 %v2103, 1
        %v2400 = vpop.permute.xlu0 %2399
        %2401 = vrot.lane.b32.xlu0 %v2116, 1
        %v2402 = vpop.permute.xlu0 %2401
        %2403 = vrot.lane.b32.xlu0 %v2129, 1
        %v2404 = vpop.permute.xlu0 %2403
        %v2405 = vsel %vm2324, %v2402, %v2404
        %v2406 = vsel %vm2324, %v2400, %v2402
        %v2407 = vsel %vm2324, %v2398, %v2400
        %v2408 = vsel %vm2324, %v2396, %v2398
        %v2409 = vsel %vm2324, %v2394, %v2396
        %v2410 = vsel %vm2324, %v2392, %v2394
        %v2411 = vsel %vm2324, %v2390, %v2392
        %v2412 = vsel %vm2324, %v2404, %v2390
        %v2413 = vsel %vm2267, %v2387, %v2412
        %v2414 = vsel %vm2268, %v2386, %v2411
        %v2415 = vsel %vm2269, %v2385, %v2410
        %v2416 = vsel %vm2270, %v2384, %v2409
        %v2417 = vsel %vm2271, %v2383, %v2408
        %v2418 = vsel %vm2272, %v2382, %v2407
        %v2419 = vsel %vm2273, %v2381, %v2406
        %v2420 = vsel %vm2274, %v2388, %v2405
        %v2421 = vmul.f32 %v2413, %v2244
        %v2422 = vmul.f32 %v2414, %v2245
        %v2423 = vmul.f32 %v2415, %v2246
        %v2424 = vmul.f32 %v2416, %v2247
        %v2425 = vmul.f32 %v2417, %v2248
        %v2426 = vmul.f32 %v2418, %v2249
        %v2427 = vmul.f32 %v2419, %v2250
        %v2428 = vmul.f32 %v2420, %v2251
        %v2429 = vadd.f32 %v2357, %v2421
        %v2430 = vadd.f32 %v2358, %v2422
        %v2431 = vadd.f32 %v2359, %v2423
        %v2432 = vadd.f32 %v2360, %v2424
        %v2433 = vadd.f32 %v2361, %v2425
        %v2434 = vadd.f32 %v2362, %v2426
        %v2435 = vadd.f32 %v2363, %v2427
        %v2436 = vadd.f32 %v2364, %v2428
        %v2437 = vlaneseq
        %v2438 = vshrl.u32 %v2437, 7
        %vm2439 = vcmp.le.s32.totalorder %v693, %v2438
        %2440 = vmatpush.xpose.msra.mxu0 0.0
        %2441 = vmatpush.xpose.msra.mxu0 0.0
        %2442 = vmatpush.xpose.msra.mxu0 0.0
        %2443 = vmatpush.xpose.msra.mxu0 0.0
        %2444 = vmatpush.xpose.msra.mxu0 0.0
        %2445 = vmatpush.xpose.msra.mxu0 0.0
        %2446 = vmatpush.xpose.msra.mxu0 0.0
        %2447 = vmatpush.xpose.msra.mxu0 0.0
        %2448 = vmatpush.xpose.msra.mxu0 0.0
        %2449 = vmatpush.xpose.msra.mxu0 0.0
        %2450 = vmatpush.xpose.msra.mxu0 0.0
        %2451 = vmatpush.xpose.msra.mxu0 0.0
        %2452 = vmatpush.xpose.msra.mxu0 0.0
        %2453 = vmatpush.xpose.msra.mxu0 0.0
        %2454 = vmatpush.xpose.msra.mxu0 0.0
        %2455 = vmatpush.xpose.msra.mxu0 %v2429
        %2456 = vmatmul.f32.gmra.mxu0 %v2349
        %v2457 = vpop.f32.mrf.mxu0
        %v2458 = vadd.f32 0.0, %v2457
        %2459 = vdwg.mxu0
        %v2460 = vmul.f32 %v2458, 0.088388346
        %v2461 = vsel %vm2439, %v2460, -1e+30
        %vm2462 = vcmask 64512
        %v2463 = vsel %vm2462, %v2461, -inf
        %2464 = vmax.xlane.f32.xlu0 %v2463
        %v2465 = vpop.xlane.xlu0 %2464
        %v2466 = vsub.f32 %v2461, %v2465
        %v2467 = vmul.f32 %v2466, 1.442695
        %v2468 = vpow.pop %v2467
        %v2469 = vsel %vm2462, %v2468, 0.0
        %2470 = vadd.xlane.f32.xlu0 %v2469
        %v2471 = vpop.xlane.xlu0 %2470
        %v2472 = vrcp.pop %v2471
        %v2473 = vmul.f32 %v2471, %v2472
        %v2474 = vsub.f32 1.0, %v2473
        %v2475 = vmul.f32 %v2472, %v2474
        %v2476 = vadd.f32 %v2472, %v2475
        %vm2477 = vweird.f32 %v2471
        %vm2478 = vweird.f32 %v2472
        %vm2479 = vmor %vm2477, %vm2478
        %v2480 = vsel %vm2479, %v2472, %v2476
        %v2481 = vand.u32 2147483647, %v2471
        %vm2482 = vcmp.eq.f32.partialorder %v2481, 8.507059e+37
        %v2483 = vand.u32 %v2471, 2147483648
        %v2484 = vor.u32 1.1754944e-38, %v2483
        %v2485 = vsel %vm2482, %v2484, %v2480
        %v2486 = vmul.f32 %v2468, %v2485
        %v2488 = vsel %vm2462, %v2486, 0
        %2490 = vmatpush.msra.mxu0 0.0
        %2491 = vmatpush.msra.mxu0 0.0
        %2492 = vmatpush.msra.mxu0 0.0
        %2493 = vmatpush.msra.mxu0 0.0
        %2494 = vmatpush.msra.mxu0 0.0
        %2495 = vmatpush.msra.mxu0 0.0
        %2496 = vmatpush.msra.mxu0 0.0
        %2497 = vmatpush.msra.mxu0 0.0
        %2498 = vmatpush.msra.mxu0 0.0
        %2499 = vmatpush.msra.mxu0 0.0
        %2500 = vmatpush.msra.mxu0 0.0
        %2501 = vmatpush.msra.mxu0 0.0
        %2502 = vmatpush.msra.mxu0 0.0
        %2503 = vmatpush.msra.mxu0 0.0
        %2504 = vmatpush.msra.mxu0 0.0
        %2505 = vmatpush.msra.mxu0 %v2142
        %2506 = vmatmul.f32.gmra.mxu0 %v2488
        %v2507 = vpop.f32.mrf.mxu0
        %v2508 = vadd.f32 0.0, %v2507
        %2509 = vdwg.mxu0
        %2510 = vmatpush.xpose.msra.mxu0 0.0
        %2511 = vmatpush.xpose.msra.mxu0 0.0
        %2512 = vmatpush.xpose.msra.mxu0 0.0
        %2513 = vmatpush.xpose.msra.mxu0 0.0
        %2514 = vmatpush.xpose.msra.mxu0 0.0
        %2515 = vmatpush.xpose.msra.mxu0 0.0
        %2516 = vmatpush.xpose.msra.mxu0 0.0
        %2517 = vmatpush.xpose.msra.mxu0 0.0
        %2518 = vmatpush.xpose.msra.mxu0 0.0
        %2519 = vmatpush.xpose.msra.mxu0 0.0
        %2520 = vmatpush.xpose.msra.mxu0 0.0
        %2521 = vmatpush.xpose.msra.mxu0 0.0
        %2522 = vmatpush.xpose.msra.mxu0 0.0
        %2523 = vmatpush.xpose.msra.mxu0 0.0
        %2524 = vmatpush.xpose.msra.mxu0 0.0
        %2525 = vmatpush.xpose.msra.mxu0 %v2430
        %2526 = vmatmul.f32.gmra.mxu0 %v2350
        %v2527 = vpop.f32.mrf.mxu0
        %v2528 = vadd.f32 0.0, %v2527
        %2529 = vdwg.mxu0
        %v2530 = vmul.f32 %v2528, 0.088388346
        %v2531 = vsel %vm2439, %v2530, -1e+30
        %v2532 = vsel %vm2462, %v2531, -inf
        %2533 = vmax.xlane.f32.xlu0 %v2532
        %v2534 = vpop.xlane.xlu0 %2533
        %v2535 = vsub.f32 %v2531, %v2534
        %v2536 = vmul.f32 %v2535, 1.442695
        %v2537 = vpow.pop %v2536
        %v2538 = vsel %vm2462, %v2537, 0.0
        %2539 = vadd.xlane.f32.xlu0 %v2538
        %v2540 = vpop.xlane.xlu0 %2539
        %v2541 = vrcp.pop %v2540
        %v2542 = vmul.f32 %v2540, %v2541
        %v2543 = vsub.f32 1.0, %v2542
        %v2544 = vmul.f32 %v2541, %v2543
        %v2545 = vadd.f32 %v2541, %v2544
        %vm2546 = vweird.f32 %v2540
        %vm2547 = vweird.f32 %v2541
        %vm2548 = vmor %vm2546, %vm2547
        %v2549 = vsel %vm2548, %v2541, %v2545
        %v2550 = vand.u32 2147483647, %v2540
        %vm2551 = vcmp.eq.f32.partialorder %v2550, 8.507059e+37
        %v2552 = vand.u32 %v2540, 2147483648
        %v2553 = vor.u32 1.1754944e-38, %v2552
        %v2554 = vsel %vm2551, %v2553, %v2549
        %v2555 = vmul.f32 %v2537, %v2554
        %v2557 = vsel %vm2462, %v2555, 0
        %2559 = vmatpush.msra.mxu0 0.0
        %2560 = vmatpush.msra.mxu0 0.0
        %2561 = vmatpush.msra.mxu0 0.0
        %2562 = vmatpush.msra.mxu0 0.0
        %2563 = vmatpush.msra.mxu0 0.0
        %2564 = vmatpush.msra.mxu0 0.0
        %2565 = vmatpush.msra.mxu0 0.0
        %2566 = vmatpush.msra.mxu0 0.0
        %2567 = vmatpush.msra.mxu0 0.0
        %2568 = vmatpush.msra.mxu0 0.0
        %2569 = vmatpush.msra.mxu0 0.0
        %2570 = vmatpush.msra.mxu0 0.0
        %2571 = vmatpush.msra.mxu0 0.0
        %2572 = vmatpush.msra.mxu0 0.0
        %2573 = vmatpush.msra.mxu0 0.0
        %2574 = vmatpush.msra.mxu0 %v2155
        %2575 = vmatmul.f32.gmra.mxu0 %v2557
        %v2576 = vpop.f32.mrf.mxu0
        %v2577 = vadd.f32 0.0, %v2576
        %2578 = vdwg.mxu0
        %2579 = vmatpush.xpose.msra.mxu0 0.0
        %2580 = vmatpush.xpose.msra.mxu0 0.0
        %2581 = vmatpush.xpose.msra.mxu0 0.0
        %2582 = vmatpush.xpose.msra.mxu0 0.0
        %2583 = vmatpush.xpose.msra.mxu0 0.0
        %2584 = vmatpush.xpose.msra.mxu0 0.0
        %2585 = vmatpush.xpose.msra.mxu0 0.0
        %2586 = vmatpush.xpose.msra.mxu0 0.0
        %2587 = vmatpush.xpose.msra.mxu0 0.0
        %2588 = vmatpush.xpose.msra.mxu0 0.0
        %2589 = vmatpush.xpose.msra.mxu0 0.0
        %2590 = vmatpush.xpose.msra.mxu0 0.0
        %2591 = vmatpush.xpose.msra.mxu0 0.0
        %2592 = vmatpush.xpose.msra.mxu0 0.0
        %2593 = vmatpush.xpose.msra.mxu0 0.0
        %2594 = vmatpush.xpose.msra.mxu0 %v2431
        %2595 = vmatmul.f32.gmra.mxu0 %v2351
        %v2596 = vpop.f32.mrf.mxu0
        %v2597 = vadd.f32 0.0, %v2596
        %2598 = vdwg.mxu0
        %v2599 = vmul.f32 %v2597, 0.088388346
        %v2600 = vsel %vm2439, %v2599, -1e+30
        %v2601 = vsel %vm2462, %v2600, -inf
        %2602 = vmax.xlane.f32.xlu0 %v2601
        %v2603 = vpop.xlane.xlu0 %2602
        %v2604 = vsub.f32 %v2600, %v2603
        %v2605 = vmul.f32 %v2604, 1.442695
        %v2606 = vpow.pop %v2605
        %v2607 = vsel %vm2462, %v2606, 0.0
        %2608 = vadd.xlane.f32.xlu0 %v2607
        %v2609 = vpop.xlane.xlu0 %2608
        %v2610 = vrcp.pop %v2609
        %v2611 = vmul.f32 %v2609, %v2610
        %v2612 = vsub.f32 1.0, %v2611
        %v2613 = vmul.f32 %v2610, %v2612
        %v2614 = vadd.f32 %v2610, %v2613
        %vm2615 = vweird.f32 %v2609
        %vm2616 = vweird.f32 %v2610
        %vm2617 = vmor %vm2615, %vm2616
        %v2618 = vsel %vm2617, %v2610, %v2614
        %v2619 = vand.u32 2147483647, %v2609
        %vm2620 = vcmp.eq.f32.partialorder %v2619, 8.507059e+37
        %v2621 = vand.u32 %v2609, 2147483648
        %v2622 = vor.u32 1.1754944e-38, %v2621
        %v2623 = vsel %vm2620, %v2622, %v2618
        %v2624 = vmul.f32 %v2606, %v2623
        %v2626 = vsel %vm2462, %v2624, 0
        %2628 = vmatpush.msra.mxu0 0.0
        %2629 = vmatpush.msra.mxu0 0.0
        %2630 = vmatpush.msra.mxu0 0.0
        %2631 = vmatpush.msra.mxu0 0.0
        %2632 = vmatpush.msra.mxu0 0.0
        %2633 = vmatpush.msra.mxu0 0.0
        %2634 = vmatpush.msra.mxu0 0.0
        %2635 = vmatpush.msra.mxu0 0.0
        %2636 = vmatpush.msra.mxu0 0.0
        %2637 = vmatpush.msra.mxu0 0.0
        %2638 = vmatpush.msra.mxu0 0.0
        %2639 = vmatpush.msra.mxu0 0.0
        %2640 = vmatpush.msra.mxu0 0.0
        %2641 = vmatpush.msra.mxu0 0.0
        %2642 = vmatpush.msra.mxu0 0.0
        %2643 = vmatpush.msra.mxu0 %v2168
        %2644 = vmatmul.f32.gmra.mxu0 %v2626
        %v2645 = vpop.f32.mrf.mxu0
        %v2646 = vadd.f32 0.0, %v2645
        %2647 = vdwg.mxu0
        %2648 = vmatpush.xpose.msra.mxu0 0.0
        %2649 = vmatpush.xpose.msra.mxu0 0.0
        %2650 = vmatpush.xpose.msra.mxu0 0.0
        %2651 = vmatpush.xpose.msra.mxu0 0.0
        %2652 = vmatpush.xpose.msra.mxu0 0.0
        %2653 = vmatpush.xpose.msra.mxu0 0.0
        %2654 = vmatpush.xpose.msra.mxu0 0.0
        %2655 = vmatpush.xpose.msra.mxu0 0.0
        %2656 = vmatpush.xpose.msra.mxu0 0.0
        %2657 = vmatpush.xpose.msra.mxu0 0.0
        %2658 = vmatpush.xpose.msra.mxu0 0.0
        %2659 = vmatpush.xpose.msra.mxu0 0.0
        %2660 = vmatpush.xpose.msra.mxu0 0.0
        %2661 = vmatpush.xpose.msra.mxu0 0.0
        %2662 = vmatpush.xpose.msra.mxu0 0.0
        %2663 = vmatpush.xpose.msra.mxu0 %v2432
        %2664 = vmatmul.f32.gmra.mxu0 %v2352
        %v2665 = vpop.f32.mrf.mxu0
        %v2666 = vadd.f32 0.0, %v2665
        %2667 = vdwg.mxu0
        %v2668 = vmul.f32 %v2666, 0.088388346
        %v2669 = vsel %vm2439, %v2668, -1e+30
        %v2670 = vsel %vm2462, %v2669, -inf
        %2671 = vmax.xlane.f32.xlu0 %v2670
        %v2672 = vpop.xlane.xlu0 %2671
        %v2673 = vsub.f32 %v2669, %v2672
        %v2674 = vmul.f32 %v2673, 1.442695
        %v2675 = vpow.pop %v2674
        %v2676 = vsel %vm2462, %v2675, 0.0
        %2677 = vadd.xlane.f32.xlu0 %v2676
        %v2678 = vpop.xlane.xlu0 %2677
        %v2679 = vrcp.pop %v2678
        %v2680 = vmul.f32 %v2678, %v2679
        %v2681 = vsub.f32 1.0, %v2680
        %v2682 = vmul.f32 %v2679, %v2681
        %v2683 = vadd.f32 %v2679, %v2682
        %vm2684 = vweird.f32 %v2678
        %vm2685 = vweird.f32 %v2679
        %vm2686 = vmor %vm2684, %vm2685
        %v2687 = vsel %vm2686, %v2679, %v2683
        %v2688 = vand.u32 2147483647, %v2678
        %vm2689 = vcmp.eq.f32.partialorder %v2688, 8.507059e+37
        %v2690 = vand.u32 %v2678, 2147483648
        %v2691 = vor.u32 1.1754944e-38, %v2690
        %v2692 = vsel %vm2689, %v2691, %v2687
        %v2693 = vmul.f32 %v2675, %v2692
        %v2695 = vsel %vm2462, %v2693, 0
        %2697 = vmatpush.msra.mxu0 0.0
        %2698 = vmatpush.msra.mxu0 0.0
        %2699 = vmatpush.msra.mxu0 0.0
        %2700 = vmatpush.msra.mxu0 0.0
        %2701 = vmatpush.msra.mxu0 0.0
        %2702 = vmatpush.msra.mxu0 0.0
        %2703 = vmatpush.msra.mxu0 0.0
        %2704 = vmatpush.msra.mxu0 0.0
        %2705 = vmatpush.msra.mxu0 0.0
        %2706 = vmatpush.msra.mxu0 0.0
        %2707 = vmatpush.msra.mxu0 0.0
        %2708 = vmatpush.msra.mxu0 0.0
        %2709 = vmatpush.msra.mxu0 0.0
        %2710 = vmatpush.msra.mxu0 0.0
        %2711 = vmatpush.msra.mxu0 0.0
        %2712 = vmatpush.msra.mxu0 %v2181
        %2713 = vmatmul.f32.gmra.mxu0 %v2695
        %v2714 = vpop.f32.mrf.mxu0
        %v2715 = vadd.f32 0.0, %v2714
        %2716 = vdwg.mxu0
        %2717 = vmatpush.xpose.msra.mxu0 0.0
        %2718 = vmatpush.xpose.msra.mxu0 0.0
        %2719 = vmatpush.xpose.msra.mxu0 0.0
        %2720 = vmatpush.xpose.msra.mxu0 0.0
        %2721 = vmatpush.xpose.msra.mxu0 0.0
        %2722 = vmatpush.xpose.msra.mxu0 0.0
        %2723 = vmatpush.xpose.msra.mxu0 0.0
        %2724 = vmatpush.xpose.msra.mxu0 0.0
        %2725 = vmatpush.xpose.msra.mxu0 0.0
        %2726 = vmatpush.xpose.msra.mxu0 0.0
        %2727 = vmatpush.xpose.msra.mxu0 0.0
        %2728 = vmatpush.xpose.msra.mxu0 0.0
        %2729 = vmatpush.xpose.msra.mxu0 0.0
        %2730 = vmatpush.xpose.msra.mxu0 0.0
        %2731 = vmatpush.xpose.msra.mxu0 0.0
        %2732 = vmatpush.xpose.msra.mxu0 %v2433
        %2733 = vmatmul.f32.gmra.mxu0 %v2353
        %v2734 = vpop.f32.mrf.mxu0
        %v2735 = vadd.f32 0.0, %v2734
        %2736 = vdwg.mxu0
        %v2737 = vmul.f32 %v2735, 0.088388346
        %v2738 = vsel %vm2439, %v2737, -1e+30
        %v2739 = vsel %vm2462, %v2738, -inf
        %2740 = vmax.xlane.f32.xlu0 %v2739
        %v2741 = vpop.xlane.xlu0 %2740
        %v2742 = vsub.f32 %v2738, %v2741
        %v2743 = vmul.f32 %v2742, 1.442695
        %v2744 = vpow.pop %v2743
        %v2745 = vsel %vm2462, %v2744, 0.0
        %2746 = vadd.xlane.f32.xlu0 %v2745
        %v2747 = vpop.xlane.xlu0 %2746
        %v2748 = vrcp.pop %v2747
        %v2749 = vmul.f32 %v2747, %v2748
        %v2750 = vsub.f32 1.0, %v2749
        %v2751 = vmul.f32 %v2748, %v2750
        %v2752 = vadd.f32 %v2748, %v2751
        %vm2753 = vweird.f32 %v2747
        %vm2754 = vweird.f32 %v2748
        %vm2755 = vmor %vm2753, %vm2754
        %v2756 = vsel %vm2755, %v2748, %v2752
        %v2757 = vand.u32 2147483647, %v2747
        %vm2758 = vcmp.eq.f32.partialorder %v2757, 8.507059e+37
        %v2759 = vand.u32 %v2747, 2147483648
        %v2760 = vor.u32 1.1754944e-38, %v2759
        %v2761 = vsel %vm2758, %v2760, %v2756
        %v2762 = vmul.f32 %v2744, %v2761
        %v2764 = vsel %vm2462, %v2762, 0
        %2766 = vmatpush.msra.mxu0 0.0
        %2767 = vmatpush.msra.mxu0 0.0
        %2768 = vmatpush.msra.mxu0 0.0
        %2769 = vmatpush.msra.mxu0 0.0
        %2770 = vmatpush.msra.mxu0 0.0
        %2771 = vmatpush.msra.mxu0 0.0
        %2772 = vmatpush.msra.mxu0 0.0
        %2773 = vmatpush.msra.mxu0 0.0
        %2774 = vmatpush.msra.mxu0 0.0
        %2775 = vmatpush.msra.mxu0 0.0
        %2776 = vmatpush.msra.mxu0 0.0
        %2777 = vmatpush.msra.mxu0 0.0
        %2778 = vmatpush.msra.mxu0 0.0
        %2779 = vmatpush.msra.mxu0 0.0
        %2780 = vmatpush.msra.mxu0 0.0
        %2781 = vmatpush.msra.mxu0 %v2194
        %2782 = vmatmul.f32.gmra.mxu0 %v2764
        %v2783 = vpop.f32.mrf.mxu0
        %v2784 = vadd.f32 0.0, %v2783
        %2785 = vdwg.mxu0
        %2786 = vmatpush.xpose.msra.mxu0 0.0
        %2787 = vmatpush.xpose.msra.mxu0 0.0
        %2788 = vmatpush.xpose.msra.mxu0 0.0
        %2789 = vmatpush.xpose.msra.mxu0 0.0
        %2790 = vmatpush.xpose.msra.mxu0 0.0
        %2791 = vmatpush.xpose.msra.mxu0 0.0
        %2792 = vmatpush.xpose.msra.mxu0 0.0
        %2793 = vmatpush.xpose.msra.mxu0 0.0
        %2794 = vmatpush.xpose.msra.mxu0 0.0
        %2795 = vmatpush.xpose.msra.mxu0 0.0
        %2796 = vmatpush.xpose.msra.mxu0 0.0
        %2797 = vmatpush.xpose.msra.mxu0 0.0
        %2798 = vmatpush.xpose.msra.mxu0 0.0
        %2799 = vmatpush.xpose.msra.mxu0 0.0
        %2800 = vmatpush.xpose.msra.mxu0 0.0
        %2801 = vmatpush.xpose.msra.mxu0 %v2434
        %2802 = vmatmul.f32.gmra.mxu0 %v2354
        %v2803 = vpop.f32.mrf.mxu0
        %v2804 = vadd.f32 0.0, %v2803
        %2805 = vdwg.mxu0
        %v2806 = vmul.f32 %v2804, 0.088388346
        %v2807 = vsel %vm2439, %v2806, -1e+30
        %v2808 = vsel %vm2462, %v2807, -inf
        %2809 = vmax.xlane.f32.xlu0 %v2808
        %v2810 = vpop.xlane.xlu0 %2809
        %v2811 = vsub.f32 %v2807, %v2810
        %v2812 = vmul.f32 %v2811, 1.442695
        %v2813 = vpow.pop %v2812
        %v2814 = vsel %vm2462, %v2813, 0.0
        %2815 = vadd.xlane.f32.xlu0 %v2814
        %v2816 = vpop.xlane.xlu0 %2815
        %v2817 = vrcp.pop %v2816
        %v2818 = vmul.f32 %v2816, %v2817
        %v2819 = vsub.f32 1.0, %v2818
        %v2820 = vmul.f32 %v2817, %v2819
        %v2821 = vadd.f32 %v2817, %v2820
        %vm2822 = vweird.f32 %v2816
        %vm2823 = vweird.f32 %v2817
        %vm2824 = vmor %vm2822, %vm2823
        %v2825 = vsel %vm2824, %v2817, %v2821
        %v2826 = vand.u32 2147483647, %v2816
        %vm2827 = vcmp.eq.f32.partialorder %v2826, 8.507059e+37
        %v2828 = vand.u32 %v2816, 2147483648
        %v2829 = vor.u32 1.1754944e-38, %v2828
        %v2830 = vsel %vm2827, %v2829, %v2825
        %v2831 = vmul.f32 %v2813, %v2830
        %v2833 = vsel %vm2462, %v2831, 0
        %2835 = vmatpush.msra.mxu0 0.0
        %2836 = vmatpush.msra.mxu0 0.0
        %2837 = vmatpush.msra.mxu0 0.0
        %2838 = vmatpush.msra.mxu0 0.0
        %2839 = vmatpush.msra.mxu0 0.0
        %2840 = vmatpush.msra.mxu0 0.0
        %2841 = vmatpush.msra.mxu0 0.0
        %2842 = vmatpush.msra.mxu0 0.0
        %2843 = vmatpush.msra.mxu0 0.0
        %2844 = vmatpush.msra.mxu0 0.0
        %2845 = vmatpush.msra.mxu0 0.0
        %2846 = vmatpush.msra.mxu0 0.0
        %2847 = vmatpush.msra.mxu0 0.0
        %2848 = vmatpush.msra.mxu0 0.0
        %2849 = vmatpush.msra.mxu0 0.0
        %2850 = vmatpush.msra.mxu0 %v2207
        %2851 = vmatmul.f32.gmra.mxu0 %v2833
        %v2852 = vpop.f32.mrf.mxu0
        %v2853 = vadd.f32 0.0, %v2852
        %2854 = vdwg.mxu0
        %2855 = vmatpush.xpose.msra.mxu0 0.0
        %2856 = vmatpush.xpose.msra.mxu0 0.0
        %2857 = vmatpush.xpose.msra.mxu0 0.0
        %2858 = vmatpush.xpose.msra.mxu0 0.0
        %2859 = vmatpush.xpose.msra.mxu0 0.0
        %2860 = vmatpush.xpose.msra.mxu0 0.0
        %2861 = vmatpush.xpose.msra.mxu0 0.0
        %2862 = vmatpush.xpose.msra.mxu0 0.0
        %2863 = vmatpush.xpose.msra.mxu0 0.0
        %2864 = vmatpush.xpose.msra.mxu0 0.0
        %2865 = vmatpush.xpose.msra.mxu0 0.0
        %2866 = vmatpush.xpose.msra.mxu0 0.0
        %2867 = vmatpush.xpose.msra.mxu0 0.0
        %2868 = vmatpush.xpose.msra.mxu0 0.0
        %2869 = vmatpush.xpose.msra.mxu0 0.0
        %2870 = vmatpush.xpose.msra.mxu0 %v2435
        %2871 = vmatmul.f32.gmra.mxu0 %v2355
        %v2872 = vpop.f32.mrf.mxu0
        %v2873 = vadd.f32 0.0, %v2872
        %2874 = vdwg.mxu0
        %v2875 = vmul.f32 %v2873, 0.088388346
        %v2876 = vsel %vm2439, %v2875, -1e+30
        %v2877 = vsel %vm2462, %v2876, -inf
        %2878 = vmax.xlane.f32.xlu0 %v2877
        %v2879 = vpop.xlane.xlu0 %2878
        %v2880 = vsub.f32 %v2876, %v2879
        %v2881 = vmul.f32 %v2880, 1.442695
        %v2882 = vpow.pop %v2881
        %v2883 = vsel %vm2462, %v2882, 0.0
        %2884 = vadd.xlane.f32.xlu0 %v2883
        %v2885 = vpop.xlane.xlu0 %2884
        %v2886 = vrcp.pop %v2885
        %v2887 = vmul.f32 %v2885, %v2886
        %v2888 = vsub.f32 1.0, %v2887
        %v2889 = vmul.f32 %v2886, %v2888
        %v2890 = vadd.f32 %v2886, %v2889
        %vm2891 = vweird.f32 %v2885
        %vm2892 = vweird.f32 %v2886
        %vm2893 = vmor %vm2891, %vm2892
        %v2894 = vsel %vm2893, %v2886, %v2890
        %v2895 = vand.u32 2147483647, %v2885
        %vm2896 = vcmp.eq.f32.partialorder %v2895, 8.507059e+37
        %v2897 = vand.u32 %v2885, 2147483648
        %v2898 = vor.u32 1.1754944e-38, %v2897
        %v2899 = vsel %vm2896, %v2898, %v2894
        %v2900 = vmul.f32 %v2882, %v2899
        %v2902 = vsel %vm2462, %v2900, 0
        %2904 = vmatpush.msra.mxu0 0.0
        %2905 = vmatpush.msra.mxu0 0.0
        %2906 = vmatpush.msra.mxu0 0.0
        %2907 = vmatpush.msra.mxu0 0.0
        %2908 = vmatpush.msra.mxu0 0.0
        %2909 = vmatpush.msra.mxu0 0.0
        %2910 = vmatpush.msra.mxu0 0.0
        %2911 = vmatpush.msra.mxu0 0.0
        %2912 = vmatpush.msra.mxu0 0.0
        %2913 = vmatpush.msra.mxu0 0.0
        %2914 = vmatpush.msra.mxu0 0.0
        %2915 = vmatpush.msra.mxu0 0.0
        %2916 = vmatpush.msra.mxu0 0.0
        %2917 = vmatpush.msra.mxu0 0.0
        %2918 = vmatpush.msra.mxu0 0.0
        %2919 = vmatpush.msra.mxu0 %v2220
        %2920 = vmatmul.f32.gmra.mxu0 %v2902
        %v2921 = vpop.f32.mrf.mxu0
        %v2922 = vadd.f32 0.0, %v2921
        %2923 = vdwg.mxu0
        %2924 = vmatpush.xpose.msra.mxu0 0.0
        %2925 = vmatpush.xpose.msra.mxu0 0.0
        %2926 = vmatpush.xpose.msra.mxu0 0.0
        %2927 = vmatpush.xpose.msra.mxu0 0.0
        %2928 = vmatpush.xpose.msra.mxu0 0.0
        %2929 = vmatpush.xpose.msra.mxu0 0.0
        %2930 = vmatpush.xpose.msra.mxu0 0.0
        %2931 = vmatpush.xpose.msra.mxu0 0.0
        %2932 = vmatpush.xpose.msra.mxu0 0.0
        %2933 = vmatpush.xpose.msra.mxu0 0.0
        %2934 = vmatpush.xpose.msra.mxu0 0.0
        %2935 = vmatpush.xpose.msra.mxu0 0.0
        %2936 = vmatpush.xpose.msra.mxu0 0.0
        %2937 = vmatpush.xpose.msra.mxu0 0.0
        %2938 = vmatpush.xpose.msra.mxu0 0.0
        %2939 = vmatpush.xpose.msra.mxu0 %v2436
        %2940 = vmatmul.f32.gmra.mxu0 %v2356
        %v2941 = vpop.f32.mrf.mxu0
        %v2942 = vadd.f32 0.0, %v2941
        %2943 = vdwg.mxu0
        %v2944 = vmul.f32 %v2942, 0.088388346
        %v2945 = vsel %vm2439, %v2944, -1e+30
        %v2946 = vsel %vm2462, %v2945, -inf
        %2947 = vmax.xlane.f32.xlu0 %v2946
        %v2948 = vpop.xlane.xlu0 %2947
        %v2949 = vsub.f32 %v2945, %v2948
        %v2950 = vmul.f32 %v2949, 1.442695
        %v2951 = vpow.pop %v2950
        %v2952 = vsel %vm2462, %v2951, 0.0
        %2953 = vadd.xlane.f32.xlu0 %v2952
        %v2954 = vpop.xlane.xlu0 %2953
        %v2955 = vrcp.pop %v2954
        %v2956 = vmul.f32 %v2954, %v2955
        %v2957 = vsub.f32 1.0, %v2956
        %v2958 = vmul.f32 %v2955, %v2957
        %v2959 = vadd.f32 %v2955, %v2958
        %vm2960 = vweird.f32 %v2954
        %vm2961 = vweird.f32 %v2955
        %vm2962 = vmor %vm2960, %vm2961
        %v2963 = vsel %vm2962, %v2955, %v2959
        %v2964 = vand.u32 2147483647, %v2954
        %vm2965 = vcmp.eq.f32.partialorder %v2964, 8.507059e+37
        %v2966 = vand.u32 %v2954, 2147483648
        %v2967 = vor.u32 1.1754944e-38, %v2966
        %v2968 = vsel %vm2965, %v2967, %v2963
        %v2969 = vmul.f32 %v2951, %v2968
        %v2971 = vsel %vm2462, %v2969, 0
        %2973 = vmatpush.msra.mxu0 0.0
        %2974 = vmatpush.msra.mxu0 0.0
        %2975 = vmatpush.msra.mxu0 0.0
        %2976 = vmatpush.msra.mxu0 0.0
        %2977 = vmatpush.msra.mxu0 0.0
        %2978 = vmatpush.msra.mxu0 0.0
        %2979 = vmatpush.msra.mxu0 0.0
        %2980 = vmatpush.msra.mxu0 0.0
        %2981 = vmatpush.msra.mxu0 0.0
        %2982 = vmatpush.msra.mxu0 0.0
        %2983 = vmatpush.msra.mxu0 0.0
        %2984 = vmatpush.msra.mxu0 0.0
        %2985 = vmatpush.msra.mxu0 0.0
        %2986 = vmatpush.msra.mxu0 0.0
        %2987 = vmatpush.msra.mxu0 0.0
        %2988 = vmatpush.msra.mxu0 %v2233
        %2989 = vmatmul.f32.gmra.mxu0 %v2971
        %v2990 = vpop.f32.mrf.mxu0
        %v2991 = vadd.f32 0.0, %v2990
        %2992 = vdwg.mxu0
        %v2993 = vpack.c.bf16 %v2508, %v2508
        %v2994 = vpack.c.bf16 %v2577, %v2577
        %v2995 = vpack.c.bf16 %v2646, %v2646
        %v2996 = vpack.c.bf16 %v2715, %v2715
        %v2997 = vpack.c.bf16 %v2784, %v2784
        %v2998 = vpack.c.bf16 %v2853, %v2853
        %v2999 = vpack.c.bf16 %v2922, %v2922
        %v3000 = vpack.c.bf16 %v2991, %v2991
        %v3001 = vld [vmem:[#allocation8] sm:$0xf]
        %v3002 = vld [vmem:[#allocation8 + $0x4] sm:$0xf]
        %v3003 = vld [vmem:[#allocation8 + $0x8] sm:$0xf]
        %v3004 = vld [vmem:[#allocation8 + $0xc] sm:$0xf]
        %v3005 = vld [vmem:[#allocation8 + $0x10] sm:$0xf]
        %v3006 = vld [vmem:[#allocation8 + $0x14] sm:$0xf]
        %v3007 = vld [vmem:[#allocation8 + $0x18] sm:$0xf]
        %v3008 = vld [vmem:[#allocation8 + $0x1c] sm:$0xf]
        %v3009 = vld [vmem:[#allocation8 + $0x20] sm:$0xf]
        %v3010 = vld [vmem:[#allocation8 + $0x24] sm:$0xf]
        %v3011 = vld [vmem:[#allocation8 + $0x28] sm:$0xf]
        %v3012 = vld [vmem:[#allocation8 + $0x2c] sm:$0xf]
        %v3013 = vld [vmem:[#allocation8 + $0x30] sm:$0xf]
        %v3014 = vld [vmem:[#allocation8 + $0x34] sm:$0xf]
        %v3015 = vld [vmem:[#allocation8 + $0x38] sm:$0xf]
        %v3016 = vld [vmem:[#allocation8 + $0x3c] sm:$0xf]
        %v3017 = vld [vmem:[#allocation8 + $0x40] sm:$0xf]
        %v3018 = vld [vmem:[#allocation8 + $0x44] sm:$0xf]
        %v3019 = vld [vmem:[#allocation8 + $0x48] sm:$0xf]
        %v3020 = vld [vmem:[#allocation8 + $0x4c] sm:$0xf]
        %v3021 = vld [vmem:[#allocation8 + $0x50] sm:$0xf]
        %v3022 = vld [vmem:[#allocation8 + $0x54] sm:$0xf]
        %v3023 = vld [vmem:[#allocation8 + $0x58] sm:$0xf]
        %v3024 = vld [vmem:[#allocation8 + $0x5c] sm:$0xf]
        %v3025 = vld [vmem:[#allocation8 + $0x60] sm:$0xf]
        %v3026 = vld [vmem:[#allocation8 + $0x64] sm:$0xf]
        %v3027 = vld [vmem:[#allocation8 + $0x68] sm:$0xf]
        %v3028 = vld [vmem:[#allocation8 + $0x6c] sm:$0xf]
        %v3029 = vld [vmem:[#allocation8 + $0x70] sm:$0xf]
        %v3030 = vld [vmem:[#allocation8 + $0x74] sm:$0xf]
        %v3031 = vld [vmem:[#allocation8 + $0x78] sm:$0xf]
        %v3032 = vld [vmem:[#allocation8 + $0x7c] sm:$0xf]
        %v3033 = vld [vmem:[#allocation8 + $0x80] sm:$0xf]
        %v3034 = vld [vmem:[#allocation8 + $0x84] sm:$0xf]
        %v3035 = vld [vmem:[#allocation8 + $0x88] sm:$0xf]
        %v3036 = vld [vmem:[#allocation8 + $0x8c] sm:$0xf]
        %v3037 = vld [vmem:[#allocation8 + $0x90] sm:$0xf]
        %v3038 = vld [vmem:[#allocation8 + $0x94] sm:$0xf]
        %v3039 = vld [vmem:[#allocation8 + $0x98] sm:$0xf]
        %v3040 = vld [vmem:[#allocation8 + $0x9c] sm:$0xf]
        %v3041 = vld [vmem:[#allocation8 + $0xa0] sm:$0xf]
        %v3042 = vld [vmem:[#allocation8 + $0xa4] sm:$0xf]
        %v3043 = vld [vmem:[#allocation8 + $0xa8] sm:$0xf]
        %v3044 = vld [vmem:[#allocation8 + $0xac] sm:$0xf]
        %v3045 = vld [vmem:[#allocation8 + $0xb0] sm:$0xf]
        %v3046 = vld [vmem:[#allocation8 + $0xb4] sm:$0xf]
        %v3047 = vld [vmem:[#allocation8 + $0xb8] sm:$0xf]
        %v3048 = vld [vmem:[#allocation8 + $0xbc] sm:$0xf]
        %v3049 = vld [vmem:[#allocation8 + $0xc0] sm:$0xf]
        %v3050 = vld [vmem:[#allocation8 + $0xc4] sm:$0xf]
        %v3051 = vld [vmem:[#allocation8 + $0xc8] sm:$0xf]
        %v3052 = vld [vmem:[#allocation8 + $0xcc] sm:$0xf]
        %v3053 = vld [vmem:[#allocation8 + $0xd0] sm:$0xf]
        %v3054 = vld [vmem:[#allocation8 + $0xd4] sm:$0xf]
        %v3055 = vld [vmem:[#allocation8 + $0xd8] sm:$0xf]
        %v3056 = vld [vmem:[#allocation8 + $0xdc] sm:$0xf]
        %v3057 = vld [vmem:[#allocation8 + $0xe0] sm:$0xf]
        %v3058 = vld [vmem:[#allocation8 + $0xe4] sm:$0xf]
        %v3059 = vld [vmem:[#allocation8 + $0xe8] sm:$0xf]
        %v3060 = vld [vmem:[#allocation8 + $0xec] sm:$0xf]
        %v3061 = vld [vmem:[#allocation8 + $0xf0] sm:$0xf]
        %v3062 = vld [vmem:[#allocation8 + $0xf4] sm:$0xf]
        %v3063 = vld [vmem:[#allocation8 + $0xf8] sm:$0xf]
        %v3064 = vld [vmem:[#allocation8 + $0xfc] sm:$0xf]
        %v3065 = vld [vmem:[#allocation8 + $0x100] sm:$0xf]
        %v3066 = vld [vmem:[#allocation8 + $0x104] sm:$0xf]
        %v3067 = vld [vmem:[#allocation8 + $0x108] sm:$0xf]
        %v3068 = vld [vmem:[#allocation8 + $0x10c] sm:$0xf]
        %v3069 = vld [vmem:[#allocation8 + $0x110] sm:$0xf]
        %v3070 = vld [vmem:[#allocation8 + $0x114] sm:$0xf]
        %v3071 = vld [vmem:[#allocation8 + $0x118] sm:$0xf]
        %v3072 = vld [vmem:[#allocation8 + $0x11c] sm:$0xf]
        %v3073 = vld [vmem:[#allocation8 + $0x120] sm:$0xf]
        %v3074 = vld [vmem:[#allocation8 + $0x124] sm:$0xf]
        %v3075 = vld [vmem:[#allocation8 + $0x128] sm:$0xf]
        %v3076 = vld [vmem:[#allocation8 + $0x12c] sm:$0xf]
        %v3077 = vld [vmem:[#allocation8 + $0x130] sm:$0xf]
        %v3078 = vld [vmem:[#allocation8 + $0x134] sm:$0xf]
        %v3079 = vld [vmem:[#allocation8 + $0x138] sm:$0xf]
        %v3080 = vld [vmem:[#allocation8 + $0x13c] sm:$0xf]
        %v3081 = vld [vmem:[#allocation8 + $0x140] sm:$0xf]
        %v3082 = vld [vmem:[#allocation8 + $0x144] sm:$0xf]
        %v3083 = vld [vmem:[#allocation8 + $0x148] sm:$0xf]
        %v3084 = vld [vmem:[#allocation8 + $0x14c] sm:$0xf]
        %v3085 = vld [vmem:[#allocation8 + $0x150] sm:$0xf]
        %v3086 = vld [vmem:[#allocation8 + $0x154] sm:$0xf]
        %v3087 = vld [vmem:[#allocation8 + $0x158] sm:$0xf]
        %v3088 = vld [vmem:[#allocation8 + $0x15c] sm:$0xf]
        %v3089 = vld [vmem:[#allocation8 + $0x160] sm:$0xf]
        %v3090 = vld [vmem:[#allocation8 + $0x164] sm:$0xf]
        %v3091 = vld [vmem:[#allocation8 + $0x168] sm:$0xf]
        %v3092 = vld [vmem:[#allocation8 + $0x16c] sm:$0xf]
        %v3093 = vld [vmem:[#allocation8 + $0x170] sm:$0xf]
        %v3094 = vld [vmem:[#allocation8 + $0x174] sm:$0xf]
        %v3095 = vld [vmem:[#allocation8 + $0x178] sm:$0xf]
        %v3096 = vld [vmem:[#allocation8 + $0x17c] sm:$0xf]
        %v3097 = vld [vmem:[#allocation8 + $0x180] sm:$0xf]
        %v3098 = vld [vmem:[#allocation8 + $0x184] sm:$0xf]
        %v3099 = vld [vmem:[#allocation8 + $0x188] sm:$0xf]
        %v3100 = vld [vmem:[#allocation8 + $0x18c] sm:$0xf]
        %v3101 = vld [vmem:[#allocation8 + $0x190] sm:$0xf]
        %v3102 = vld [vmem:[#allocation8 + $0x194] sm:$0xf]
        %v3103 = vld [vmem:[#allocation8 + $0x198] sm:$0xf]
        %v3104 = vld [vmem:[#allocation8 + $0x19c] sm:$0xf]
        %v3105 = vld [vmem:[#allocation8 + $0x1a0] sm:$0xf]
        %v3106 = vld [vmem:[#allocation8 + $0x1a4] sm:$0xf]
        %v3107 = vld [vmem:[#allocation8 + $0x1a8] sm:$0xf]
        %v3108 = vld [vmem:[#allocation8 + $0x1ac] sm:$0xf]
        %v3109 = vld [vmem:[#allocation8 + $0x1b0] sm:$0xf]
        %v3110 = vld [vmem:[#allocation8 + $0x1b4] sm:$0xf]
        %v3111 = vld [vmem:[#allocation8 + $0x1b8] sm:$0xf]
        %v3112 = vld [vmem:[#allocation8 + $0x1bc] sm:$0xf]
        %v3113 = vld [vmem:[#allocation8 + $0x1c0] sm:$0xf]
        %v3114 = vld [vmem:[#allocation8 + $0x1c4] sm:$0xf]
        %v3115 = vld [vmem:[#allocation8 + $0x1c8] sm:$0xf]
        %v3116 = vld [vmem:[#allocation8 + $0x1cc] sm:$0xf]
        %v3117 = vld [vmem:[#allocation8 + $0x1d0] sm:$0xf]
        %v3118 = vld [vmem:[#allocation8 + $0x1d4] sm:$0xf]
        %v3119 = vld [vmem:[#allocation8 + $0x1d8] sm:$0xf]
        %v3120 = vld [vmem:[#allocation8 + $0x1dc] sm:$0xf]
        %v3121 = vld [vmem:[#allocation8 + $0x1e0] sm:$0xf]
        %v3122 = vld [vmem:[#allocation8 + $0x1e4] sm:$0xf]
        %v3123 = vld [vmem:[#allocation8 + $0x1e8] sm:$0xf]
        %v3124 = vld [vmem:[#allocation8 + $0x1ec] sm:$0xf]
        %v3125 = vld [vmem:[#allocation8 + $0x1f0] sm:$0xf]
        %v3126 = vld [vmem:[#allocation8 + $0x1f4] sm:$0xf]
        %v3127 = vld [vmem:[#allocation8 + $0x1f8] sm:$0xf]
        %v3128 = vld [vmem:[#allocation8 + $0x1fc] sm:$0xf]
        %v3129 = vld [vmem:[%s5] sm:$0x1]
        %v3131 = vperm.slane %v3129, 0
        %v3261 = vunpack.c.l.b16 %v3001
        %v3262 = vunpack.c.l.b16 %v3002
        %v3263 = vunpack.c.l.b16 %v3003
        %v3264 = vunpack.c.l.b16 %v3004
        %v3265 = vunpack.c.l.b16 %v3005
        %v3266 = vunpack.c.l.b16 %v3006
        %v3267 = vunpack.c.l.b16 %v3007
        %v3268 = vunpack.c.l.b16 %v3008
        %v3269 = vunpack.c.l.b16 %v3009
        %v3270 = vunpack.c.l.b16 %v3010
        %v3271 = vunpack.c.l.b16 %v3011
        %v3272 = vunpack.c.l.b16 %v3012
        %v3273 = vunpack.c.l.b16 %v3013
        %v3274 = vunpack.c.l.b16 %v3014
        %v3275 = vunpack.c.l.b16 %v3015
        %v3276 = vunpack.c.l.b16 %v3016
        %v3277 = vunpack.c.l.b16 %v3017
        %v3278 = vunpack.c.l.b16 %v3018
        %v3279 = vunpack.c.l.b16 %v3019
        %v3280 = vunpack.c.l.b16 %v3020
        %v3281 = vunpack.c.l.b16 %v3021
        %v3282 = vunpack.c.l.b16 %v3022
        %v3283 = vunpack.c.l.b16 %v3023
        %v3284 = vunpack.c.l.b16 %v3024
        %v3285 = vunpack.c.l.b16 %v3025
        %v3286 = vunpack.c.l.b16 %v3026
        %v3287 = vunpack.c.l.b16 %v3027
        %v3288 = vunpack.c.l.b16 %v3028
        %v3289 = vunpack.c.l.b16 %v3029
        %v3290 = vunpack.c.l.b16 %v3030
        %v3291 = vunpack.c.l.b16 %v3031
        %v3292 = vunpack.c.l.b16 %v3032
        %v3293 = vunpack.c.l.b16 %v3033
        %v3294 = vunpack.c.l.b16 %v3034
        %v3295 = vunpack.c.l.b16 %v3035
        %v3296 = vunpack.c.l.b16 %v3036
        %v3297 = vunpack.c.l.b16 %v3037
        %v3298 = vunpack.c.l.b16 %v3038
        %v3299 = vunpack.c.l.b16 %v3039
        %v3300 = vunpack.c.l.b16 %v3040
        %v3301 = vunpack.c.l.b16 %v3041
        %v3302 = vunpack.c.l.b16 %v3042
        %v3303 = vunpack.c.l.b16 %v3043
        %v3304 = vunpack.c.l.b16 %v3044
        %v3305 = vunpack.c.l.b16 %v3045
        %v3306 = vunpack.c.l.b16 %v3046
        %v3307 = vunpack.c.l.b16 %v3047
        %v3308 = vunpack.c.l.b16 %v3048
        %v3309 = vunpack.c.l.b16 %v3049
        %v3310 = vunpack.c.l.b16 %v3050
        %v3311 = vunpack.c.l.b16 %v3051
        %v3312 = vunpack.c.l.b16 %v3052
        %v3313 = vunpack.c.l.b16 %v3053
        %v3314 = vunpack.c.l.b16 %v3054
        %v3315 = vunpack.c.l.b16 %v3055
        %v3316 = vunpack.c.l.b16 %v3056
        %v3317 = vunpack.c.l.b16 %v3057
        %v3318 = vunpack.c.l.b16 %v3058
        %v3319 = vunpack.c.l.b16 %v3059
        %v3320 = vunpack.c.l.b16 %v3060
        %v3321 = vunpack.c.l.b16 %v3061
        %v3322 = vunpack.c.l.b16 %v3062
        %v3323 = vunpack.c.l.b16 %v3063
        %v3324 = vunpack.c.l.b16 %v3064
        %v3325 = vunpack.c.l.b16 %v3065
        %v3326 = vunpack.c.l.b16 %v3066
        %v3327 = vunpack.c.l.b16 %v3067
        %v3328 = vunpack.c.l.b16 %v3068
        %v3329 = vunpack.c.l.b16 %v3069
        %v3330 = vunpack.c.l.b16 %v3070
        %v3331 = vunpack.c.l.b16 %v3071
        %v3332 = vunpack.c.l.b16 %v3072
        %v3333 = vunpack.c.l.b16 %v3073
        %v3334 = vunpack.c.l.b16 %v3074
        %v3335 = vunpack.c.l.b16 %v3075
        %v3336 = vunpack.c.l.b16 %v3076
        %v3337 = vunpack.c.l.b16 %v3077
        %v3338 = vunpack.c.l.b16 %v3078
        %v3339 = vunpack.c.l.b16 %v3079
        %v3340 = vunpack.c.l.b16 %v3080
        %v3341 = vunpack.c.l.b16 %v3081
        %v3342 = vunpack.c.l.b16 %v3082
        %v3343 = vunpack.c.l.b16 %v3083
        %v3344 = vunpack.c.l.b16 %v3084
        %v3345 = vunpack.c.l.b16 %v3085
        %v3346 = vunpack.c.l.b16 %v3086
        %v3347 = vunpack.c.l.b16 %v3087
        %v3348 = vunpack.c.l.b16 %v3088
        %v3349 = vunpack.c.l.b16 %v3089
        %v3350 = vunpack.c.l.b16 %v3090
        %v3351 = vunpack.c.l.b16 %v3091
        %v3352 = vunpack.c.l.b16 %v3092
        %v3353 = vunpack.c.l.b16 %v3093
        %v3354 = vunpack.c.l.b16 %v3094
        %v3355 = vunpack.c.l.b16 %v3095
        %v3356 = vunpack.c.l.b16 %v3096
        %v3357 = vunpack.c.l.b16 %v3097
        %v3358 = vunpack.c.l.b16 %v3098
        %v3359 = vunpack.c.l.b16 %v3099
        %v3360 = vunpack.c.l.b16 %v3100
        %v3361 = vunpack.c.l.b16 %v3101
        %v3362 = vunpack.c.l.b16 %v3102
        %v3363 = vunpack.c.l.b16 %v3103
        %v3364 = vunpack.c.l.b16 %v3104
        %v3365 = vunpack.c.l.b16 %v3105
        %v3366 = vunpack.c.l.b16 %v3106
        %v3367 = vunpack.c.l.b16 %v3107
        %v3368 = vunpack.c.l.b16 %v3108
        %v3369 = vunpack.c.l.b16 %v3109
        %v3370 = vunpack.c.l.b16 %v3110
        %v3371 = vunpack.c.l.b16 %v3111
        %v3372 = vunpack.c.l.b16 %v3112
        %v3373 = vunpack.c.l.b16 %v3113
        %v3374 = vunpack.c.l.b16 %v3114
        %v3375 = vunpack.c.l.b16 %v3115
        %v3376 = vunpack.c.l.b16 %v3116
        %v3377 = vunpack.c.l.b16 %v3117
        %v3378 = vunpack.c.l.b16 %v3118
        %v3379 = vunpack.c.l.b16 %v3119
        %v3380 = vunpack.c.l.b16 %v3120
        %v3381 = vunpack.c.l.b16 %v3121
        %v3382 = vunpack.c.l.b16 %v3122
        %v3383 = vunpack.c.l.b16 %v3123
        %v3384 = vunpack.c.l.b16 %v3124
        %v3385 = vunpack.c.l.b16 %v3125
        %v3386 = vunpack.c.l.b16 %v3126
        %v3387 = vunpack.c.l.b16 %v3127
        %v3388 = vunpack.c.l.b16 %v3128
        %v3389 = vpack.c.b16 %v3262, %v3261
        %v3390 = vpack.c.b16 %v3264, %v3263
        %v3391 = vpack.c.b16 %v3266, %v3265
        %v3392 = vpack.c.b16 %v3268, %v3267
        %v3393 = vpack.c.b16 %v3270, %v3269
        %v3394 = vpack.c.b16 %v3272, %v3271
        %v3395 = vpack.c.b16 %v3274, %v3273
        %v3396 = vpack.c.b16 %v3276, %v3275
        %v3397 = vpack.c.b16 %v3278, %v3277
        %v3398 = vpack.c.b16 %v3280, %v3279
        %v3399 = vpack.c.b16 %v3282, %v3281
        %v3400 = vpack.c.b16 %v3284, %v3283
        %v3401 = vpack.c.b16 %v3286, %v3285
        %v3402 = vpack.c.b16 %v3288, %v3287
        %v3403 = vpack.c.b16 %v3290, %v3289
        %v3404 = vpack.c.b16 %v3292, %v3291
        %v3405 = vpack.c.b16 %v3294, %v3293
        %v3406 = vpack.c.b16 %v3296, %v3295
        %v3407 = vpack.c.b16 %v3298, %v3297
        %v3408 = vpack.c.b16 %v3300, %v3299
        %v3409 = vpack.c.b16 %v3302, %v3301
        %v3410 = vpack.c.b16 %v3304, %v3303
        %v3411 = vpack.c.b16 %v3306, %v3305
        %v3412 = vpack.c.b16 %v3308, %v3307
        %v3413 = vpack.c.b16 %v3310, %v3309
        %v3414 = vpack.c.b16 %v3312, %v3311
        %v3415 = vpack.c.b16 %v3314, %v3313
        %v3416 = vpack.c.b16 %v3316, %v3315
        %v3417 = vpack.c.b16 %v3318, %v3317
        %v3418 = vpack.c.b16 %v3320, %v3319
        %v3419 = vpack.c.b16 %v3322, %v3321
        %v3420 = vpack.c.b16 %v3324, %v3323
        %v3421 = vpack.c.b16 %v3326, %v3325
        %v3422 = vpack.c.b16 %v3328, %v3327
        %v3423 = vpack.c.b16 %v3330, %v3329
        %v3424 = vpack.c.b16 %v3332, %v3331
        %v3425 = vpack.c.b16 %v3334, %v3333
        %v3426 = vpack.c.b16 %v3336, %v3335
        %v3427 = vpack.c.b16 %v3338, %v3337
        %v3428 = vpack.c.b16 %v3340, %v3339
        %v3429 = vpack.c.b16 %v3342, %v3341
        %v3430 = vpack.c.b16 %v3344, %v3343
        %v3431 = vpack.c.b16 %v3346, %v3345
        %v3432 = vpack.c.b16 %v3348, %v3347
        %v3433 = vpack.c.b16 %v3350, %v3349
        %v3434 = vpack.c.b16 %v3352, %v3351
        %v3435 = vpack.c.b16 %v3354, %v3353
        %v3436 = vpack.c.b16 %v3356, %v3355
        %v3437 = vpack.c.b16 %v3358, %v3357
        %v3438 = vpack.c.b16 %v3360, %v3359
        %v3439 = vpack.c.b16 %v3362, %v3361
        %v3440 = vpack.c.b16 %v3364, %v3363
        %v3441 = vpack.c.b16 %v3366, %v3365
        %v3442 = vpack.c.b16 %v3368, %v3367
        %v3443 = vpack.c.b16 %v3370, %v3369
        %v3444 = vpack.c.b16 %v3372, %v3371
        %v3445 = vpack.c.b16 %v3374, %v3373
        %v3446 = vpack.c.b16 %v3376, %v3375
        %v3447 = vpack.c.b16 %v3378, %v3377
        %v3448 = vpack.c.b16 %v3380, %v3379
        %v3449 = vpack.c.b16 %v3382, %v3381
        %v3450 = vpack.c.b16 %v3384, %v3383
        %v3451 = vpack.c.b16 %v3386, %v3385
        %v3452 = vpack.c.b16 %v3388, %v3387
        %3517 = vmatpush.bf16.msra.mxu0 %v3396
        %3518 = vmatpush.bf16.msra.mxu0 %v3395
        %3519 = vmatpush.bf16.msra.mxu0 %v3394
        %3520 = vmatpush.bf16.msra.mxu0 %v3393
        %3521 = vmatpush.bf16.msra.mxu0 %v3392
        %3522 = vmatpush.bf16.msra.mxu0 %v3391
        %3523 = vmatpush.bf16.msra.mxu0 %v3390
        %3524 = vmatpush.bf16.msra.mxu0 %v3389
        %3525 = vmatmul.bf16.gmra.mxu0 %v2993
        %v3526 = vpop.f32.mrf.mxu0
        %v3527 = vadd.f32 %v3131, %v3526
        %v3528 = vpop.f32.mrf.mxu0
        %3529 = vdwg.mxu0
        %3530 = vmatpush.bf16.msra.mxu0 %v3404
        %3531 = vmatpush.bf16.msra.mxu0 %v3403
        %3532 = vmatpush.bf16.msra.mxu0 %v3402
        %3533 = vmatpush.bf16.msra.mxu0 %v3401
        %3534 = vmatpush.bf16.msra.mxu0 %v3400
        %3535 = vmatpush.bf16.msra.mxu0 %v3399
        %3536 = vmatpush.bf16.msra.mxu0 %v3398
        %3537 = vmatpush.bf16.msra.mxu0 %v3397
        %3538 = vmatmul.bf16.gmra.mxu0 %v2994
        %v3539 = vpop.f32.mrf.mxu0
        %v3540 = vadd.f32 %v3527, %v3539
        %v3541 = vpop.f32.mrf.mxu0
        %3542 = vdwg.mxu0
        %3543 = vmatpush.bf16.msra.mxu0 %v3412
        %3544 = vmatpush.bf16.msra.mxu0 %v3411
        %3545 = vmatpush.bf16.msra.mxu0 %v3410
        %3546 = vmatpush.bf16.msra.mxu0 %v3409
        %3547 = vmatpush.bf16.msra.mxu0 %v3408
        %3548 = vmatpush.bf16.msra.mxu0 %v3407
        %3549 = vmatpush.bf16.msra.mxu0 %v3406
        %3550 = vmatpush.bf16.msra.mxu0 %v3405
        %3551 = vmatmul.bf16.gmra.mxu0 %v2995
        %v3552 = vpop.f32.mrf.mxu0
        %v3553 = vadd.f32 %v3540, %v3552
        %v3554 = vpop.f32.mrf.mxu0
        %3555 = vdwg.mxu0
        %3556 = vmatpush.bf16.msra.mxu0 %v3420
        %3557 = vmatpush.bf16.msra.mxu0 %v3419
        %3558 = vmatpush.bf16.msra.mxu0 %v3418
        %3559 = vmatpush.bf16.msra.mxu0 %v3417
        %3560 = vmatpush.bf16.msra.mxu0 %v3416
        %3561 = vmatpush.bf16.msra.mxu0 %v3415
        %3562 = vmatpush.bf16.msra.mxu0 %v3414
        %3563 = vmatpush.bf16.msra.mxu0 %v3413
        %3564 = vmatmul.bf16.gmra.mxu0 %v2996
        %v3565 = vpop.f32.mrf.mxu0
        %v3566 = vadd.f32 %v3553, %v3565
        %v3567 = vpop.f32.mrf.mxu0
        %3568 = vdwg.mxu0
        %3569 = vmatpush.bf16.msra.mxu0 %v3428
        %3570 = vmatpush.bf16.msra.mxu0 %v3427
        %3571 = vmatpush.bf16.msra.mxu0 %v3426
        %3572 = vmatpush.bf16.msra.mxu0 %v3425
        %3573 = vmatpush.bf16.msra.mxu0 %v3424
        %3574 = vmatpush.bf16.msra.mxu0 %v3423
        %3575 = vmatpush.bf16.msra.mxu0 %v3422
        %3576 = vmatpush.bf16.msra.mxu0 %v3421
        %3577 = vmatmul.bf16.gmra.mxu0 %v2997
        %v3578 = vpop.f32.mrf.mxu0
        %v3579 = vadd.f32 %v3566, %v3578
        %v3580 = vpop.f32.mrf.mxu0
        %3581 = vdwg.mxu0
        %3582 = vmatpush.bf16.msra.mxu0 %v3436
        %3583 = vmatpush.bf16.msra.mxu0 %v3435
        %3584 = vmatpush.bf16.msra.mxu0 %v3434
        %3585 = vmatpush.bf16.msra.mxu0 %v3433
        %3586 = vmatpush.bf16.msra.mxu0 %v3432
        %3587 = vmatpush.bf16.msra.mxu0 %v3431
        %3588 = vmatpush.bf16.msra.mxu0 %v3430
        %3589 = vmatpush.bf16.msra.mxu0 %v3429
        %3590 = vmatmul.bf16.gmra.mxu0 %v2998
        %v3591 = vpop.f32.mrf.mxu0
        %v3592 = vadd.f32 %v3579, %v3591
        %v3593 = vpop.f32.mrf.mxu0
        %3594 = vdwg.mxu0
        %3595 = vmatpush.bf16.msra.mxu0 %v3444
        %3596 = vmatpush.bf16.msra.mxu0 %v3443
        %3597 = vmatpush.bf16.msra.mxu0 %v3442
        %3598 = vmatpush.bf16.msra.mxu0 %v3441
        %3599 = vmatpush.bf16.msra.mxu0 %v3440
        %3600 = vmatpush.bf16.msra.mxu0 %v3439
        %3601 = vmatpush.bf16.msra.mxu0 %v3438
        %3602 = vmatpush.bf16.msra.mxu0 %v3437
        %3603 = vmatmul.bf16.gmra.mxu0 %v2999
        %v3604 = vpop.f32.mrf.mxu0
        %v3605 = vadd.f32 %v3592, %v3604
        %v3606 = vpop.f32.mrf.mxu0
        %3607 = vdwg.mxu0
        %3608 = vmatpush.bf16.msra.mxu0 %v3452
        %3609 = vmatpush.bf16.msra.mxu0 %v3451
        %3610 = vmatpush.bf16.msra.mxu0 %v3450
        %3611 = vmatpush.bf16.msra.mxu0 %v3449
        %3612 = vmatpush.bf16.msra.mxu0 %v3448
        %3613 = vmatpush.bf16.msra.mxu0 %v3447
        %3614 = vmatpush.bf16.msra.mxu0 %v3446
        %3615 = vmatpush.bf16.msra.mxu0 %v3445
        %3616 = vmatmul.bf16.gmra.mxu0 %v3000
        %v3617 = vpop.f32.mrf.mxu0
        %v3618 = vadd.f32 %v3605, %v3617
        %v3619 = vpop.f32.mrf.mxu0
        %3620 = vdwg.mxu0
        %v3621 = vadd.f32 %v770, %v3618
        %v3622 = vmul.f32 %v736, %v3621
        %v3623 = vmul.f32 %v3621, %v3621
        %3624 = vadd.xlane.f32.xlu0 %v3623
        %v3625 = vpop.xlane.xlu0 %3624
        %v3626 = vrot.slane %v3625, 4
        %v3627 = vadd.f32 %v3625, %v3626
        %v3628 = vrot.slane %v3627, 2
        %v3629 = vadd.f32 %v3627, %v3628
        %v3630 = vrot.slane %v3629, 1
        %v3631 = vadd.f32 %v3629, %v3630
        %s3632 = vtos %v3631
        %v3633 = vrcp.pop 1024.0
        %v3634 = vmul.f32 1024.0, %v3633
        %v3635 = vsub.f32 1.0, %v3634
        %v3636 = vmul.f32 %v3633, %v3635
        %v3637 = vadd.f32 %v3633, %v3636
        %vm3638 = vweird.f32 %v3633
        %v3639 = vsel %vm3638, %v3633, %v3637
        %s3640 = vtos %v3639
        %s3641 = smul.f32 %s3632, %s3640
        %v3642 = vstv %s3641
        %v3643 = vrsqrt.pop %v3642
        %v3644 = vmul.f32 %v3643, %v3642
        %v3645 = vmul.f32 %v3644, %v3643
        %v3646 = vmul.f32 0.5, %v3645
        %v3647 = vsub.f32 1.5, %v3646
        %v3648 = vmul.f32 %v3643, %v3647
        %vm3649 = vweird.f32 %v3642
        %vm3650 = vweird.f32 %v3643
        %vm3651 = vmor %vm3649, %vm3650
        %v3652 = vsel %vm3651, %v3643, %v3648
        %s3653 = vtos %v3652
        %v3654 = vstv %s3653
        %v3655 = vmul.f32 %v3622, %v3654
        %v3656 = vpack.c.bf16 %v3655, %v3655
        %v3657 = vld [vmem:[#allocation12] sm:$0xf]
        %v3658 = vld [vmem:[#allocation12 + $0x4] sm:$0xf]
        %v3659 = vld [vmem:[#allocation12 + $0x8] sm:$0xf]
        %v3660 = vld [vmem:[#allocation12 + $0xc] sm:$0xf]
        %v3661 = vld [vmem:[#allocation12 + $0x10] sm:$0xf]
        %v3662 = vld [vmem:[#allocation12 + $0x14] sm:$0xf]
        %v3663 = vld [vmem:[#allocation12 + $0x18] sm:$0xf]
        %v3664 = vld [vmem:[#allocation12 + $0x1c] sm:$0xf]
        %v3665 = vld [vmem:[#allocation12 + $0x20] sm:$0xf]
        %v3666 = vld [vmem:[#allocation12 + $0x24] sm:$0xf]
        %v3667 = vld [vmem:[#allocation12 + $0x28] sm:$0xf]
        %v3668 = vld [vmem:[#allocation12 + $0x2c] sm:$0xf]
        %v3669 = vld [vmem:[#allocation12 + $0x30] sm:$0xf]
        %v3670 = vld [vmem:[#allocation12 + $0x34] sm:$0xf]
        %v3671 = vld [vmem:[#allocation12 + $0x38] sm:$0xf]
        %v3672 = vld [vmem:[#allocation12 + $0x3c] sm:$0xf]
        %v3673 = vld [vmem:[%s9] sm:$0x1]
        %v3675 = vperm.slane %v3673, 0
        %v3693 = vunpack.c.l.b16 %v3657
        %v3694 = vunpack.c.l.b16 %v3658
        %v3695 = vunpack.c.l.b16 %v3659
        %v3696 = vunpack.c.l.b16 %v3660
        %v3697 = vunpack.c.l.b16 %v3661
        %v3698 = vunpack.c.l.b16 %v3662
        %v3699 = vunpack.c.l.b16 %v3663
        %v3700 = vunpack.c.l.b16 %v3664
        %v3701 = vunpack.c.l.b16 %v3665
        %v3702 = vunpack.c.l.b16 %v3666
        %v3703 = vunpack.c.l.b16 %v3667
        %v3704 = vunpack.c.l.b16 %v3668
        %v3705 = vunpack.c.l.b16 %v3669
        %v3706 = vunpack.c.l.b16 %v3670
        %v3707 = vunpack.c.l.b16 %v3671
        %v3708 = vunpack.c.l.b16 %v3672
        %v3709 = vpack.c.b16 %v3694, %v3693
        %v3710 = vpack.c.b16 %v3696, %v3695
        %v3711 = vpack.c.b16 %v3698, %v3697
        %v3712 = vpack.c.b16 %v3700, %v3699
        %v3713 = vpack.c.b16 %v3702, %v3701
        %v3714 = vpack.c.b16 %v3704, %v3703
        %v3715 = vpack.c.b16 %v3706, %v3705
        %v3716 = vpack.c.b16 %v3708, %v3707
        %3725 = vmatpush.bf16.msra.mxu0 %v3716
        %3726 = vmatpush.bf16.msra.mxu0 %v3715
        %3727 = vmatpush.bf16.msra.mxu0 %v3714
        %3728 = vmatpush.bf16.msra.mxu0 %v3713
        %3729 = vmatpush.bf16.msra.mxu0 %v3712
        %3730 = vmatpush.bf16.msra.mxu0 %v3711
        %3731 = vmatpush.bf16.msra.mxu0 %v3710
        %3732 = vmatpush.bf16.msra.mxu0 %v3709
        %3733 = vmatmul.bf16.gmra.mxu0 %v3656
        %v3734 = vpop.f32.mrf.mxu0
        %v3735 = vadd.f32 %v3675, %v3734
        %v3736 = vpop.f32.mrf.mxu0
        %3737 = vdwg.mxu0
        %v3738 = vpack.c.bf16 %v3735, %v3735
        %v3739 = vld [vmem:[#allocation14] sm:$0xf]
        %v3740 = vld [vmem:[#allocation14 + $0x4] sm:$0xf]
        %v3741 = vld [vmem:[#allocation14 + $0x8] sm:$0xf]
        %v3742 = vld [vmem:[#allocation14 + $0xc] sm:$0xf]
        %v3743 = vld [vmem:[#allocation14 + $0x10] sm:$0xf]
        %v3744 = vld [vmem:[#allocation14 + $0x14] sm:$0xf]
        %v3745 = vld [vmem:[#allocation14 + $0x18] sm:$0xf]
        %v3746 = vld [vmem:[#allocation14 + $0x1c] sm:$0xf]
        %v3747 = vld [vmem:[#allocation14 + $0x20] sm:$0xf]
        %v3748 = vld [vmem:[#allocation14 + $0x24] sm:$0xf]
        %v3749 = vld [vmem:[#allocation14 + $0x28] sm:$0xf]
        %v3750 = vld [vmem:[#allocation14 + $0x2c] sm:$0xf]
        %v3751 = vld [vmem:[#allocation14 + $0x30] sm:$0xf]
        %v3752 = vld [vmem:[#allocation14 + $0x34] sm:$0xf]
        %v3753 = vld [vmem:[#allocation14 + $0x38] sm:$0xf]
        %v3754 = vld [vmem:[#allocation14 + $0x3c] sm:$0xf]
        %v3755 = vld [vmem:[%s11] sm:$0x1]
        %v3757 = vperm.slane %v3755, 0
        %v3775 = vunpack.c.l.b16 %v3739
        %v3776 = vunpack.c.l.b16 %v3740
        %v3777 = vunpack.c.l.b16 %v3741
        %v3778 = vunpack.c.l.b16 %v3742
        %v3779 = vunpack.c.l.b16 %v3743
        %v3780 = vunpack.c.l.b16 %v3744
        %v3781 = vunpack.c.l.b16 %v3745
        %v3782 = vunpack.c.l.b16 %v3746
        %v3783 = vunpack.c.l.b16 %v3747
        %v3784 = vunpack.c.l.b16 %v3748
        %v3785 = vunpack.c.l.b16 %v3749
        %v3786 = vunpack.c.l.b16 %v3750
        %v3787 = vunpack.c.l.b16 %v3751
        %v3788 = vunpack.c.l.b16 %v3752
        %v3789 = vunpack.c.l.b16 %v3753
        %v3790 = vunpack.c.l.b16 %v3754
        %v3791 = vpack.c.b16 %v3776, %v3775
        %v3792 = vpack.c.b16 %v3778, %v3777
        %v3793 = vpack.c.b16 %v3780, %v3779
        %v3794 = vpack.c.b16 %v3782, %v3781
        %v3795 = vpack.c.b16 %v3784, %v3783
        %v3796 = vpack.c.b16 %v3786, %v3785
        %v3797 = vpack.c.b16 %v3788, %v3787
        %v3798 = vpack.c.b16 %v3790, %v3789
        %3807 = vmatpush.bf16.msra.mxu0 %v3798
        %3808 = vmatpush.bf16.msra.mxu0 %v3797
        %3809 = vmatpush.bf16.msra.mxu0 %v3796
        %3810 = vmatpush.bf16.msra.mxu0 %v3795
        %3811 = vmatpush.bf16.msra.mxu0 %v3794
        %3812 = vmatpush.bf16.msra.mxu0 %v3793
        %3813 = vmatpush.bf16.msra.mxu0 %v3792
        %3814 = vmatpush.bf16.msra.mxu0 %v3791
        %3815 = vmatmul.bf16.gmra.mxu0 %v3738
        %v3816 = vpop.f32.mrf.mxu0
        %v3817 = vadd.f32 %v3757, %v3816
        %v3818 = vpop.f32.mrf.mxu0
        %3819 = vdwg.mxu0
        %v3820 = vld [vmem:[#allocation15] sm:$0xf]
        %v3821 = vld [vmem:[#allocation15 + $0x4] sm:$0xf]
        %v3822 = vld [vmem:[#allocation15 + $0x8] sm:$0xf]
        %v3823 = vld [vmem:[#allocation15 + $0xc] sm:$0xf]
        %v3824 = vld [vmem:[#allocation15 + $0x10] sm:$0xf]
        %v3825 = vld [vmem:[#allocation15 + $0x14] sm:$0xf]
        %v3826 = vld [vmem:[#allocation15 + $0x18] sm:$0xf]
        %v3827 = vld [vmem:[#allocation15 + $0x1c] sm:$0xf]
        %v3828 = vld [vmem:[#allocation15 + $0x20] sm:$0xf]
        %v3829 = vld [vmem:[#allocation15 + $0x24] sm:$0xf]
        %v3830 = vld [vmem:[#allocation15 + $0x28] sm:$0xf]
        %v3831 = vld [vmem:[#allocation15 + $0x2c] sm:$0xf]
        %v3832 = vld [vmem:[#allocation15 + $0x30] sm:$0xf]
        %v3833 = vld [vmem:[#allocation15 + $0x34] sm:$0xf]
        %v3834 = vld [vmem:[#allocation15 + $0x38] sm:$0xf]
        %v3835 = vld [vmem:[#allocation15 + $0x3c] sm:$0xf]
        %v3836 = vld [vmem:[%s13] sm:$0x1]
        %v3838 = vperm.slane %v3836, 0
        %v3856 = vunpack.c.l.b16 %v3820
        %v3857 = vunpack.c.l.b16 %v3821
        %v3858 = vunpack.c.l.b16 %v3822
        %v3859 = vunpack.c.l.b16 %v3823
        %v3860 = vunpack.c.l.b16 %v3824
        %v3861 = vunpack.c.l.b16 %v3825
        %v3862 = vunpack.c.l.b16 %v3826
        %v3863 = vunpack.c.l.b16 %v3827
        %v3864 = vunpack.c.l.b16 %v3828
        %v3865 = vunpack.c.l.b16 %v3829
        %v3866 = vunpack.c.l.b16 %v3830
        %v3867 = vunpack.c.l.b16 %v3831
        %v3868 = vunpack.c.l.b16 %v3832
        %v3869 = vunpack.c.l.b16 %v3833
        %v3870 = vunpack.c.l.b16 %v3834
        %v3871 = vunpack.c.l.b16 %v3835
        %v3872 = vpack.c.b16 %v3857, %v3856
        %v3873 = vpack.c.b16 %v3859, %v3858
        %v3874 = vpack.c.b16 %v3861, %v3860
        %v3875 = vpack.c.b16 %v3863, %v3862
        %v3876 = vpack.c.b16 %v3865, %v3864
        %v3877 = vpack.c.b16 %v3867, %v3866
        %v3878 = vpack.c.b16 %v3869, %v3868
        %v3879 = vpack.c.b16 %v3871, %v3870
        %3888 = vmatpush.bf16.msra.mxu0 %v3879
        %3889 = vmatpush.bf16.msra.mxu0 %v3878
        %3890 = vmatpush.bf16.msra.mxu0 %v3877
        %3891 = vmatpush.bf16.msra.mxu0 %v3876
        %3892 = vmatpush.bf16.msra.mxu0 %v3875
        %3893 = vmatpush.bf16.msra.mxu0 %v3874
        %3894 = vmatpush.bf16.msra.mxu0 %v3873
        %3895 = vmatpush.bf16.msra.mxu0 %v3872
        %3896 = vmatmul.bf16.gmra.mxu0 %v3738
        %v3897 = vpop.f32.mrf.mxu0
        %v3898 = vadd.f32 %v3838, %v3897
        %v3899 = vpop.f32.mrf.mxu0
        %3900 = vdwg.mxu0
        %v3901 = vld [vmem:[#allocation2] sm:$0x1]
        %v3903 = vperm.slane %v3901, 0
        %3904 = vset.pattern.permute.xlu0 0
        %3905 = vperm.xlu0 %3904, %v3903
        %v3906 = vpop.permute.xlu0 %3905
        %v3908 = vmul.f32 %v3906, %v3817
        %v3909 = vxor.u32 %v3908, 2147483648
        %v3910 = vmul.f32 %v3909, 1.442695
        %v3911 = vpow.pop %v3910
        %v3912 = vadd.f32 %v3911, 1.0
        %v3913 = vrcp.pop %v3912
        %v3914 = vmul.f32 %v3912, %v3913
        %v3915 = vsub.f32 1.0, %v3914
        %v3916 = vmul.f32 %v3913, %v3915
        %v3917 = vadd.f32 %v3913, %v3916
        %vm3918 = vweird.f32 %v3912
        %vm3919 = vweird.f32 %v3913
        %vm3920 = vmor %vm3918, %vm3919
        %v3921 = vsel %vm3920, %v3913, %v3917
        %v3922 = vand.u32 2147483647, %v3912
        %vm3923 = vcmp.eq.f32.partialorder %v3922, 8.507059e+37
        %v3924 = vand.u32 %v3912, 2147483648
        %v3925 = vor.u32 1.1754944e-38, %v3924
        %v3926 = vsel %vm3923, %v3925, %v3921
        %v3927 = vmul.f32 1.0, %v3926
        %v3928 = vmul.f32 %v3817, %v3927
        %v3929 = vmul.f32 %v3928, %v3898
        %v3930 = vadd.f32 %v3655, %v3929
        %v3931 = vpack.c.bf16 %v3930, %v3930
        %v3932 = vld [vmem:[#allocation17] sm:$0xf]
        %v3933 = vld [vmem:[#allocation17 + $0x4] sm:$0xf]
        %v3934 = vld [vmem:[#allocation17 + $0x8] sm:$0xf]
        %v3935 = vld [vmem:[#allocation17 + $0xc] sm:$0xf]
        %v3936 = vld [vmem:[#allocation17 + $0x10] sm:$0xf]
        %v3937 = vld [vmem:[#allocation17 + $0x14] sm:$0xf]
        %v3938 = vld [vmem:[#allocation17 + $0x18] sm:$0xf]
        %v3939 = vld [vmem:[#allocation17 + $0x1c] sm:$0xf]
        %v3940 = vld [vmem:[#allocation17 + $0x20] sm:$0xf]
        %v3941 = vld [vmem:[#allocation17 + $0x24] sm:$0xf]
        %v3942 = vld [vmem:[#allocation17 + $0x28] sm:$0xf]
        %v3943 = vld [vmem:[#allocation17 + $0x2c] sm:$0xf]
        %v3944 = vld [vmem:[#allocation17 + $0x30] sm:$0xf]
        %v3945 = vld [vmem:[#allocation17 + $0x34] sm:$0xf]
        %v3946 = vld [vmem:[#allocation17 + $0x38] sm:$0xf]
        %v3947 = vld [vmem:[#allocation17 + $0x3c] sm:$0xf]
        %v3948 = vld [vmem:[%s16] sm:$0x1]
        %v3950 = vperm.slane %v3948, 0
        %v3968 = vunpack.c.l.b16 %v3932
        %v3969 = vunpack.c.l.b16 %v3933
        %v3970 = vunpack.c.l.b16 %v3934
        %v3971 = vunpack.c.l.b16 %v3935
        %v3972 = vunpack.c.l.b16 %v3936
        %v3973 = vunpack.c.l.b16 %v3937
        %v3974 = vunpack.c.l.b16 %v3938
        %v3975 = vunpack.c.l.b16 %v3939
        %v3976 = vunpack.c.l.b16 %v3940
        %v3977 = vunpack.c.l.b16 %v3941
        %v3978 = vunpack.c.l.b16 %v3942
        %v3979 = vunpack.c.l.b16 %v3943
        %v3980 = vunpack.c.l.b16 %v3944
        %v3981 = vunpack.c.l.b16 %v3945
        %v3982 = vunpack.c.l.b16 %v3946
        %v3983 = vunpack.c.l.b16 %v3947
        %v3984 = vpack.c.b16 %v3969, %v3968
        %v3985 = vpack.c.b16 %v3971, %v3970
        %v3986 = vpack.c.b16 %v3973, %v3972
        %v3987 = vpack.c.b16 %v3975, %v3974
        %v3988 = vpack.c.b16 %v3977, %v3976
        %v3989 = vpack.c.b16 %v3979, %v3978
        %v3990 = vpack.c.b16 %v3981, %v3980
        %v3991 = vpack.c.b16 %v3983, %v3982
        %4000 = vmatpush.bf16.msra.mxu0 %v3991
        %4001 = vmatpush.bf16.msra.mxu0 %v3990
        %4002 = vmatpush.bf16.msra.mxu0 %v3989
        %4003 = vmatpush.bf16.msra.mxu0 %v3988
        %4004 = vmatpush.bf16.msra.mxu0 %v3987
        %4005 = vmatpush.bf16.msra.mxu0 %v3986
        %4006 = vmatpush.bf16.msra.mxu0 %v3985
        %4007 = vmatpush.bf16.msra.mxu0 %v3984
        %4008 = vmatmul.bf16.gmra.mxu0 %v3931
        %v4009 = vpop.f32.mrf.mxu0
        %v4010 = vadd.f32 %v3950, %v4009
        %v4011 = vpop.f32.mrf.mxu0
        %4012 = vdwg.mxu0
        %4013 = vst [vmem:[%s686] sm:$0xff] %v4010
        %s4014 = sand.u32 %s408, 1
        %s4015 = scalar_lea.sflag [#allocation5], %s4014
        %s4016 = sand.u32 %s408, 1
        %s4017 = smul.addr %s4016, 8
        %s4018 = scalar_lea.vmem [#allocation18], %s4017
        // Predicated region
        $region125: #{tpu_custom_call.1} parent=87 // pred_check
          %p4019 = pneg %p418
        $region126: #{tpu_custom_call.1} parent=87 // pred_check_branch
          %4021 = sbr.rel (%p4019) target = $region128
        $region127: #{tpu_custom_call.1} parent=87 // pred_region
          %4023 = vsyncadd %s4015, 0
          %s4024 = smul.addr %s38, 8
          %s4025 = scalar_lea.hbm %s17, %s4024
          %s4027 = sshll.u32 %s4018, 4
          %s4028 = int_to_ptr.vmem [resolvable:$true] %s4027
          %s4029 = sshll.u32 %s4025, 4
          %s4030 = int_to_ptr.hbm [resolvable:$true] %s4029
          %4032 = dma.vmem_to_hbm [thread:$0]  %s4028, 128, %s4030, %s4015
        $region128: #{tpu_custom_call.1} parent=87 // pred_fallthru
          _
      $region88: #{tpu_custom_call.1} parent=5 // pred_fallthru
        _
      %p4033 = scmp.le.s32.totalorder 2, %s33
      // Predicated region
      $region129: #{tpu_custom_call.1} parent=5 // pred_check
        %p4034 = pneg %p4033
      $region130: #{tpu_custom_call.1} parent=5 // pred_check_branch
        %4036 = sbr.rel (%p4034) target = $region132
      $region131: #{tpu_custom_call.1} parent=5 // pred_region
        %s4037 = ssub.s32 %s33, 2
        // Predicated region
        $region133: #{tpu_custom_call.1} parent=131 // pred_check
          %p4038 = pneg %p424
        $region134: #{tpu_custom_call.1} parent=131 // pred_check_branch
          %4040 = sbr.rel (%p4038) target = $region136
        $region135: #{tpu_custom_call.1} parent=131 // pred_region
          %s4041 = sand.u32 %s409, 1
          %s4042 = scalar_lea.sflag [#allocation5], %s4041
          %s4043 = sand.u32 %s409, 1
          %s4044 = smul.addr %s4043, 8
          %s4045 = scalar_lea.vmem [#allocation18], %s4044
          %4047 = dma.done %s4042, 128
        $region136: #{tpu_custom_call.1} parent=131 // pred_fallthru
          _
      $region132: #{tpu_custom_call.1} parent=5 // pred_fallthru
        _
    $region6: #{tpu_custom_call.1} parent=1 // loop_footer
      %s37 = sadd.s32 1, %s33
    $region7: #{tpu_custom_call.1} parent=1 // loop_footer_branch
      %32 = sbr.rel target = $region3
    $region8: #{tpu_custom_call.1} parent=1 // loop_exit
      _
    %4048 = vsyncpa [#allocation4], 1
    %s4049 = scalar_lea.sflag [#allocation4], 1
    %4050 = vsyncpa %s4049, 1
    %4051 = vsyncpa [#allocation7], 1
    %4052 = vsyncpa [#allocation10], 1
    %4053 = vsyncpa [#allocation13], 1
    %4054 = vsyncpa [#allocation16], 1
    %4055 = vsyncpa [#allocation5], 1
    %s4056 = scalar_lea.sflag [#allocation5], 1
    %4057 = vsyncpa %s4056, 1

</llo_original>
